<compile_context>
chip_gen: v6e
topology: v6e:2x2x1
jax: 0.10.0
libtpu: 0.0.40
codegen_flags: <defaults>
</compile_context>

<pallas_src>
import functools
import math

import jax
import jax.numpy as jnp
import numpy as np
from jax.experimental import pallas as pl
from jax.experimental.pallas import tpu as pltpu


def _cdiv(a, b):
    return -(-a // b)


def _vmem_estimate_bytes(tl, stride, Cin, Cout, K, V):
    tp = tl * stride
    return 4 * (
        2 * Cout * tp          # double-buffered output blocks
        + 2 * Cout * tp        # accumulator / result temporaries
        + tl * tp              # lane-placement (scatter) matrix
        + 2 * V * Cin * tl     # double-buffered input view blocks
        + 2 * K * Cout * Cin   # resident weight
    )


def _make_kernel(*, V, stride, padl, tl, TP, Cout, padding, padding_left, L_full,
                 phase_plan):
    """Fused conv-transpose + overlap-add + bias + trim kernel body."""

    def kernel(*refs):
        x_refs = refs[:V]          # V x (1, 1, Cin, tl)
        w_ref = refs[V]            # (K, Cout, Cin)
        b_ref = refs[V + 1]        # (Cout, 1)
        o_ref = refs[V + 2]        # (1, Cout, TP)

        # Input frames for this tile (channel-major, frames on lanes).
        xcat = x_refs[0][0, 0]                                      # (Cin, tl)
        if V > 1:
            xcat = jnp.concatenate(
                [xcat] + [r[0, 0] for r in x_refs[1:]], axis=-1)    # (Cin, V*tl)

        # dmat[m, tau] == tau - m*stride ; (dmat == phi) is the 0/1 matrix that
        # places column m of a (Cout, tl) phase result at output lane m*stride+phi.
        col = jax.lax.broadcasted_iota(jnp.int32, (tl, TP), 1)
        row = jax.lax.broadcasted_iota(jnp.int32, (tl, TP), 0)
        dmat = col - row * stride

        slices = {}

        def frame_slice(d):
            # original frames [i*tl + d, i*tl + d + tl) -> static slice of xcat.
            if d not in slices:
                s = d + padl
                slices[d] = xcat[:, s:s + tl]
            return slices[d]

        acc = jnp.zeros((Cout, TP), jnp.float32)
        for phi, taps in phase_plan:             # static unroll over phases
            r = None
            for k, d in taps:                    # static unroll over taps (<= ceil(K/stride))
                contrib = jnp.dot(w_ref[k], frame_slice(d),
                                  preferred_element_type=jnp.float32)  # (Cout, tl)
                r = contrib if r is None else r + contrib
            place = (dmat == phi).astype(jnp.float32)                  # (tl, TP)
            acc = acc + jnp.dot(r, place, preferred_element_type=jnp.float32)

        res = acc + b_ref[...]                   # bias broadcast over lanes

        if padding < 0:
            # K < stride: F.pad(..., positive) zero-fills positions that fall
            # outside the untrimmed conv-transpose output (bias must NOT appear).
            i = pl.program_id(1)
            tau = jax.lax.broadcasted_iota(jnp.int32, (Cout, TP), 1)
            t = tau + i * TP + padding_left
            res = jnp.where((t >= 0) & (t < L_full), res, 0.0)

        o_ref[0] = res

    return kernel


@functools.partial(jax.jit, static_argnames=("stride", "tile_frames"))
def upsample_forward(x, weight, bias, *, stride, tile_frames=None):
    """Forward pass equivalent to audyn Upsample.forward (groups=1)."""
    B, Cin, L = x.shape
    Cin_w, Cout, K = weight.shape
    assert Cin_w == Cin, (Cin_w, Cin)

    stride = int(stride)
    padding = K - stride
    padding_left = padding // 2              # Python floor div == torch behavior
    L_full = (L - 1) * stride + K
    P = L * stride

    # ---- static plan: for each output phase, the contributing taps k and the
    #      relative input-frame shift d they read. -----------------------------
    phase_plan = []
    shifts = set()
    for phi in range(stride):
        s0 = phi + padding_left
        rho = s0 % stride
        c = s0 // stride
        taps = []
        j, k = 0, rho
        while k < K:
            taps.append((k, c - j))
            shifts.add(c - j)
            j += 1
            k += stride
        if taps:
            phase_plan.append((phi, tuple(taps)))
    d_min = min(shifts)
    d_max = max(shifts)
    padl = max(0, -d_min)                    # zero frames prepended to x

    # ---- tile choice: tl input frames -> TP = tl*stride output samples/step.
    #      Conservative VMEM budget (also fits v7x's smaller VMEM); output blocks
    #      stay lane-dense (TP multiple of 128 whenever the output is tiled). ---
    if tile_frames is None:
        tl = max(1, min(L, 1024 // max(1, stride)))
    else:
        tl = max(1, min(L, int(tile_frames)))
    while tl > 1 and _vmem_estimate_bytes(tl, stride, Cin, Cout, K, 2) > 6 * 2**20:
        tl = max(1, tl // 2)
    NI = _cdiv(L, tl)
    TP = tl * stride
    if NI > 1 and TP % 128 != 0:
        mult = 128 // math.gcd(128, stride)
        tl = min(L, _cdiv(tl, mult) * mult)
        NI = _cdiv(L, tl)
        TP = tl * stride
    if NI > 1 and TP % 128 != 0:             # safety fallback: single output tile
        tl, NI, TP = L, 1, L * stride

    halo = padl + d_max
    V = (1 + _cdiv(halo, tl)) if halo > 0 else 1   # consecutive frame-blocks / step
    NF = NI + V - 1

    # ---- input prep (cheap: frame-rate tensor, ~1/stride of the output bytes):
    #      zero-pad frames and expose a (B, NF, Cin, tl) blocked view so every
    #      kernel block has full-extent trailing (Cin, tl) dims. ----------------
    xf = x.astype(jnp.float32)
    pad_r = NF * tl - padl - L
    xp = jnp.pad(xf, ((0, 0), (0, 0), (padl, pad_r)))
    xq = jnp.transpose(xp.reshape(B, Cin, NF, tl), (0, 2, 1, 3))

    wT = jnp.transpose(weight.astype(jnp.float32), (2, 1, 0))     # (K, Cout, Cin)
    b2 = bias.astype(jnp.float32).reshape(Cout, 1)

    kernel = _make_kernel(V=V, stride=stride, padl=padl, tl=tl, TP=TP, Cout=Cout,
                          padding=padding, padding_left=padding_left,
                          L_full=L_full, phase_plan=tuple(phase_plan))

    in_specs = [
        pl.BlockSpec((1, 1, Cin, tl), (lambda b, i, v=v: (b, i + v, 0, 0)))
        for v in range(V)
    ]
    in_specs.append(pl.BlockSpec((K, Cout, Cin), lambda b, i: (0, 0, 0)))
    in_specs.append(pl.BlockSpec((Cout, 1), lambda b, i: (0, 0)))
    out_spec = pl.BlockSpec((1, Cout, TP), lambda b, i: (b, 0, i))

    flops = (2 * B * L * Cin * Cout * K
             + 2 * B * NI * len(phase_plan) * Cout * tl * TP)
    bytes_accessed = 4 * (V * B * Cin * NF * tl + Cin * Cout * K + Cout + B * Cout * P)
    cost = pl.CostEstimate(flops=flops, transcendentals=0,
                           bytes_accessed=bytes_accessed)

    out = pl.pallas_call(
        kernel,
        out_shape=jax.ShapeDtypeStruct((B, Cout, P), jnp.float32),
        grid=(B, NI),
        in_specs=in_specs,
        out_specs=out_spec,
        compiler_params=pltpu.CompilerParams(
            dimension_semantics=("parallel", "parallel"),
            vmem_limit_bytes=32 * 1024 * 1024,
        ),
        cost_estimate=cost,
    )(*([xq] * V), wT, b2)
    return out


def _reference(x, weight, bias, stride):
    """Pure-JAX reference matching torch ConvTranspose1d + F.pad(-p) semantics."""
    B, Cin, L = x.shape
    _, Cout, K = weight.shape
    y = jnp.einsum("bcl,cok->blok", x, weight,
                   precision=jax.lax.Precision.HIGHEST)
    L_full = (L - 1) * stride + K
    full = jnp.zeros((B, Cout, L_full), jnp.float32)
    for k in range(K):
        contrib = jnp.transpose(y[:, :, :, k], (0, 2, 1))
        full = full.at[:, :, k:k + (L - 1) * stride + 1:stride].add(contrib)
    full = full + bias[None, :, None]
    padding = L_full - L * stride
    pleft = padding // 2
    pright = padding - pleft
    if padding >= 0:
        return full[:, :, pleft:L_full - pright]
    return jnp.pad(full, ((0, 0), (0, 0), (-pleft, -pright)))


if __name__ == "__main__":
    def run_case(key, *, B, Cin, Cout, L, K, stride, tile_frames):
        kx, kw, kb = jax.random.split(key, 3)
        x = jax.random.normal(kx, (B, Cin, L), dtype=jnp.float32)
        w = 0.1 * jax.random.normal(kw, (Cin, Cout, K), dtype=jnp.float32)
        b = 0.1 * jax.random.normal(kb, (Cout,), dtype=jnp.float32)
        out = upsample_forward(x, w, b, stride=stride, tile_frames=tile_frames)
        out = jax.block_until_ready(out)
        assert out.shape == (B, Cout, L * stride), out.shape
        assert out.dtype == jnp.float32
        ref = np.asarray(_reference(x, w, b, stride))
        np.testing.assert_allclose(np.asarray(out), ref, atol=5e-3, rtol=5e-3)

    key = jax.random.PRNGKey(0)
    k1, k2 = jax.random.split(key)
    # Overlapping taps (K > stride): two lane-dense (Cout, 128) output tiles per row.
    run_case(k1, B=2, Cin=4, Cout=6, L=16, K=20, stride=16, tile_frames=8)
    # K < stride (negative ConvTranspose padding -> zero-padded output edges).
    run_case(k2, B=2, Cin=3, Cout=5, L=16, K=3, stride=4, tile_frames=None)
    print("KERNEL_OK")
</pallas_src>

<mosaic_0001>
module attributes {stable_mosaic.version = 11 : i64} {
  func.func @kernel(%arg0: i32, %arg1: i32, %arg2: memref<1x1x4x8xf32, #tpu.memory_space<vmem>>, %arg3: memref<1x1x4x8xf32, #tpu.memory_space<vmem>>, %arg4: memref<20x6x4xf32, #tpu.memory_space<vmem>>, %arg5: memref<6x1xf32, #tpu.memory_space<vmem>>, %arg6: memref<1x6x128xf32, #tpu.memory_space<vmem>>) attributes {dimension_semantics = [#tpu.dimension_semantics<parallel>, #tpu.dimension_semantics<parallel>], iteration_bounds = array<i64: 2, 2>, scalar_prefetch = 0 : i64, scratch_operands = 0 : i64, tpu.core_type = #tpu.core_type<tc>, window_params = [{transform_indices = @transform_0, window_bounds = array<i64: 1, 1, 4, 8>}, {transform_indices = @transform_1, window_bounds = array<i64: 1, 1, 4, 8>}, {pipeline_mode = #tpu.pipeline_mode<synchronous>, transform_indices = @transform_2, window_bounds = array<i64: 20, 6, 4>}, {pipeline_mode = #tpu.pipeline_mode<synchronous>, transform_indices = @transform_3, window_bounds = array<i64: 6, 1>}, {transform_indices = @transform_4, window_bounds = array<i64: 1, 6, 128>}]} {
    %c0 = arith.constant 0 : index
    %c0_0 = arith.constant 0 : index
    %c0_1 = arith.constant 0 : index
    %c0_2 = arith.constant 0 : index
    %0 = vector.load %arg2[%c0, %c0_0, %c0_1, %c0_2] : memref<1x1x4x8xf32, #tpu.memory_space<vmem>>, vector<1x1x4x8xf32>
    %1 = vector.shape_cast %0 : vector<1x1x4x8xf32> to vector<4x8xf32>
    %c0_3 = arith.constant 0 : index
    %c0_4 = arith.constant 0 : index
    %c0_5 = arith.constant 0 : index
    %c0_6 = arith.constant 0 : index
    %2 = vector.load %arg3[%c0_3, %c0_4, %c0_5, %c0_6] : memref<1x1x4x8xf32, #tpu.memory_space<vmem>>, vector<1x1x4x8xf32>
    %3 = vector.shape_cast %2 : vector<1x1x4x8xf32> to vector<4x8xf32>
    %4 = tpu.concatenate %1, %3 in 1 : vector<4x8xf32>, vector<4x8xf32> -> vector<4x16xf32>
    %5 = tpu.iota {dimensions = array<i32: 1>} : vector<8x128xi32>
    %6 = tpu.iota {dimensions = array<i32: 0>} : vector<8x128xi32>
    %c16_i32 = arith.constant 16 : i32
    %7 = vector.broadcast %c16_i32 : i32 to vector<8x128xi32>
    %8 = arith.muli %6, %7 : vector<8x128xi32>
    %9 = arith.subi %5, %8 : vector<8x128xi32>
    %cst = arith.constant 0.000000e+00 : f32
    %10 = vector.broadcast %cst : f32 to vector<6x128xf32>
    %c2 = arith.constant 2 : index
    %c0_7 = arith.constant 0 : index
    %c0_8 = arith.constant 0 : index
    %11 = vector.load %arg4[%c2, %c0_7, %c0_8] : memref<20x6x4xf32, #tpu.memory_space<vmem>>, vector<1x6x4xf32>
    %12 = vector.shape_cast %11 : vector<1x6x4xf32> to vector<6x4xf32>
    %13 = vector.extract_strided_slice %4 {offsets = [0, 1], sizes = [4, 8], strides = [1, 1]} : vector<4x16xf32> to vector<4x8xf32>
    %cst_9 = arith.constant dense<0.000000e+00> : vector<6x8xf32>
    %14 = tpu.matmul %12, %13, %cst_9 {dimension_numbers = #tpu.dot_dimension_numbers<[1], [0], [0], [1], [0, 0, 1, 1], [], []>} : vector<6x4xf32>, vector<4x8xf32>, vector<6x8xf32> -> vector<6x8xf32>
    %c18 = arith.constant 18 : index
    %c0_10 = arith.constant 0 : index
    %c0_11 = arith.constant 0 : index
    %15 = vector.load %arg4[%c18, %c0_10, %c0_11] : memref<20x6x4xf32, #tpu.memory_space<vmem>>, vector<1x6x4xf32>
    %16 = vector.shape_cast %15 : vector<1x6x4xf32> to vector<6x4xf32>
    %17 = vector.extract_strided_slice %4 {offsets = [0, 0], sizes = [4, 8], strides = [1, 1]} : vector<4x16xf32> to vector<4x8xf32>
    %cst_12 = arith.constant dense<0.000000e+00> : vector<6x8xf32>
    %18 = tpu.matmul %16, %17, %cst_12 {dimension_numbers = #tpu.dot_dimension_numbers<[1], [0], [0], [1], [0, 0, 1, 1], [], []>} : vector<6x4xf32>, vector<4x8xf32>, vector<6x8xf32> -> vector<6x8xf32>
    %19 = arith.addf %14, %18 : vector<6x8xf32>
    %c0_i32 = arith.constant 0 : i32
    %20 = vector.broadcast %c0_i32 : i32 to vector<8x128xi32>
    %21 = arith.cmpi eq, %9, %20 : vector<8x128xi32>
    %22 = arith.extui %21 : vector<8x128xi1> to vector<8x128xi32>
    %23 = arith.sitofp %22 : vector<8x128xi32> to vector<8x128xf32>
    %cst_13 = arith.constant dense<0.000000e+00> : vector<6x128xf32>
    %24 = tpu.matmul %19, %23, %cst_13 {dimension_numbers = #tpu.dot_dimension_numbers<[1], [0], [0], [1], [0, 0, 1, 1], [], []>} : vector<6x8xf32>, vector<8x128xf32>, vector<6x128xf32> -> vector<6x128xf32>
    %25 = arith.addf %10, %24 : vector<6x128xf32>
    %c3 = arith.constant 3 : index
    %c0_14 = arith.constant 0 : index
    %c0_15 = arith.constant 0 : index
    %26 = vector.load %arg4[%c3, %c0_14, %c0_15] : memref<20x6x4xf32, #tpu.memory_space<vmem>>, vector<1x6x4xf32>
    %27 = vector.shape_cast %26 : vector<1x6x4xf32> to vector<6x4xf32>
    %cst_16 = arith.constant dense<0.000000e+00> : vector<6x8xf32>
    %28 = tpu.matmul %27, %13, %cst_16 {dimension_numbers = #tpu.dot_dimension_numbers<[1], [0], [0], [1], [0, 0, 1, 1], [], []>} : vector<6x4xf32>, vector<4x8xf32>, vector<6x8xf32> -> vector<6x8xf32>
    %c19 = arith.constant 19 : index
    %c0_17 = arith.constant 0 : index
    %c0_18 = arith.constant 0 : index
    %29 = vector.load %arg4[%c19, %c0_17, %c0_18] : memref<20x6x4xf32, #tpu.memory_space<vmem>>, vector<1x6x4xf32>
    %30 = vector.shape_cast %29 : vector<1x6x4xf32> to vector<6x4xf32>
    %cst_19 = arith.constant dense<0.000000e+00> : vector<6x8xf32>
    %31 = tpu.matmul %30, %17, %cst_19 {dimension_numbers = #tpu.dot_dimension_numbers<[1], [0], [0], [1], [0, 0, 1, 1], [], []>} : vector<6x4xf32>, vector<4x8xf32>, vector<6x8xf32> -> vector<6x8xf32>
    %32 = arith.addf %28, %31 : vector<6x8xf32>
    %c1_i32 = arith.constant 1 : i32
    %33 = vector.broadcast %c1_i32 : i32 to vector<8x128xi32>
    %34 = arith.cmpi eq, %9, %33 : vector<8x128xi32>
    %35 = arith.extui %34 : vector<8x128xi1> to vector<8x128xi32>
    %36 = arith.sitofp %35 : vector<8x128xi32> to vector<8x128xf32>
    %cst_20 = arith.constant dense<0.000000e+00> : vector<6x128xf32>
    %37 = tpu.matmul %32, %36, %cst_20 {dimension_numbers = #tpu.dot_dimension_numbers<[1], [0], [0], [1], [0, 0, 1, 1], [], []>} : vector<6x8xf32>, vector<8x128xf32>, vector<6x128xf32> -> vector<6x128xf32>
    %38 = arith.addf %25, %37 : vector<6x128xf32>
    %c4 = arith.constant 4 : index
    %c0_21 = arith.constant 0 : index
    %c0_22 = arith.constant 0 : index
    %39 = vector.load %arg4[%c4, %c0_21, %c0_22] : memref<20x6x4xf32, #tpu.memory_space<vmem>>, vector<1x6x4xf32>
    %40 = vector.shape_cast %39 : vector<1x6x4xf32> to vector<6x4xf32>
    %cst_23 = arith.constant dense<0.000000e+00> : vector<6x8xf32>
    %41 = tpu.matmul %40, %13, %cst_23 {dimension_numbers = #tpu.dot_dimension_numbers<[1], [0], [0], [1], [0, 0, 1, 1], [], []>} : vector<6x4xf32>, vector<4x8xf32>, vector<6x8xf32> -> vector<6x8xf32>
    %c2_i32 = arith.constant 2 : i32
    %42 = vector.broadcast %c2_i32 : i32 to vector<8x128xi32>
    %43 = arith.cmpi eq, %9, %42 : vector<8x128xi32>
    %44 = arith.extui %43 : vector<8x128xi1> to vector<8x128xi32>
    %45 = arith.sitofp %44 : vector<8x128xi32> to vector<8x128xf32>
    %cst_24 = arith.constant dense<0.000000e+00> : vector<6x128xf32>
    %46 = tpu.matmul %41, %45, %cst_24 {dimension_numbers = #tpu.dot_dimension_numbers<[1], [0], [0], [1], [0, 0, 1, 1], [], []>} : vector<6x8xf32>, vector<8x128xf32>, vector<6x128xf32> -> vector<6x128xf32>
    %47 = arith.addf %38, %46 : vector<6x128xf32>
    %c5 = arith.constant 5 : index
    %c0_25 = arith.constant 0 : index
    %c0_26 = arith.constant 0 : index
    %48 = vector.load %arg4[%c5, %c0_25, %c0_26] : memref<20x6x4xf32, #tpu.memory_space<vmem>>, vector<1x6x4xf32>
    %49 = vector.shape_cast %48 : vector<1x6x4xf32> to vector<6x4xf32>
    %cst_27 = arith.constant dense<0.000000e+00> : vector<6x8xf32>
    %50 = tpu.matmul %49, %13, %cst_27 {dimension_numbers = #tpu.dot_dimension_numbers<[1], [0], [0], [1], [0, 0, 1, 1], [], []>} : vector<6x4xf32>, vector<4x8xf32>, vector<6x8xf32> -> vector<6x8xf32>
    %c3_i32 = arith.constant 3 : i32
    %51 = vector.broadcast %c3_i32 : i32 to vector<8x128xi32>
    %52 = arith.cmpi eq, %9, %51 : vector<8x128xi32>
    %53 = arith.extui %52 : vector<8x128xi1> to vector<8x128xi32>
    %54 = arith.sitofp %53 : vector<8x128xi32> to vector<8x128xf32>
    %cst_28 = arith.constant dense<0.000000e+00> : vector<6x128xf32>
    %55 = tpu.matmul %50, %54, %cst_28 {dimension_numbers = #tpu.dot_dimension_numbers<[1], [0], [0], [1], [0, 0, 1, 1], [], []>} : vector<6x8xf32>, vector<8x128xf32>, vector<6x128xf32> -> vector<6x128xf32>
    %56 = arith.addf %47, %55 : vector<6x128xf32>
    %c6 = arith.constant 6 : index
    %c0_29 = arith.constant 0 : index
    %c0_30 = arith.constant 0 : index
    %57 = vector.load %arg4[%c6, %c0_29, %c0_30] : memref<20x6x4xf32, #tpu.memory_space<vmem>>, vector<1x6x4xf32>
    %58 = vector.shape_cast %57 : vector<1x6x4xf32> to vector<6x4xf32>
    %cst_31 = arith.constant dense<0.000000e+00> : vector<6x8xf32>
    %59 = tpu.matmul %58, %13, %cst_31 {dimension_numbers = #tpu.dot_dimension_numbers<[1], [0], [0], [1], [0, 0, 1, 1], [], []>} : vector<6x4xf32>, vector<4x8xf32>, vector<6x8xf32> -> vector<6x8xf32>
    %c4_i32 = arith.constant 4 : i32
    %60 = vector.broadcast %c4_i32 : i32 to vector<8x128xi32>
    %61 = arith.cmpi eq, %9, %60 : vector<8x128xi32>
    %62 = arith.extui %61 : vector<8x128xi1> to vector<8x128xi32>
    %63 = arith.sitofp %62 : vector<8x128xi32> to vector<8x128xf32>
    %cst_32 = arith.constant dense<0.000000e+00> : vector<6x128xf32>
    %64 = tpu.matmul %59, %63, %cst_32 {dimension_numbers = #tpu.dot_dimension_numbers<[1], [0], [0], [1], [0, 0, 1, 1], [], []>} : vector<6x8xf32>, vector<8x128xf32>, vector<6x128xf32> -> vector<6x128xf32>
    %65 = arith.addf %56, %64 : vector<6x128xf32>
    %c7 = arith.constant 7 : index
    %c0_33 = arith.constant 0 : index
    %c0_34 = arith.constant 0 : index
    %66 = vector.load %arg4[%c7, %c0_33, %c0_34] : memref<20x6x4xf32, #tpu.memory_space<vmem>>, vector<1x6x4xf32>
    %67 = vector.shape_cast %66 : vector<1x6x4xf32> to vector<6x4xf32>
    %cst_35 = arith.constant dense<0.000000e+00> : vector<6x8xf32>
    %68 = tpu.matmul %67, %13, %cst_35 {dimension_numbers = #tpu.dot_dimension_numbers<[1], [0], [0], [1], [0, 0, 1, 1], [], []>} : vector<6x4xf32>, vector<4x8xf32>, vector<6x8xf32> -> vector<6x8xf32>
    %c5_i32 = arith.constant 5 : i32
    %69 = vector.broadcast %c5_i32 : i32 to vector<8x128xi32>
    %70 = arith.cmpi eq, %9, %69 : vector<8x128xi32>
    %71 = arith.extui %70 : vector<8x128xi1> to vector<8x128xi32>
    %72 = arith.sitofp %71 : vector<8x128xi32> to vector<8x128xf32>
    %cst_36 = arith.constant dense<0.000000e+00> : vector<6x128xf32>
    %73 = tpu.matmul %68, %72, %cst_36 {dimension_numbers = #tpu.dot_dimension_numbers<[1], [0], [0], [1], [0, 0, 1, 1], [], []>} : vector<6x8xf32>, vector<8x128xf32>, vector<6x128xf32> -> vector<6x128xf32>
    %74 = arith.addf %65, %73 : vector<6x128xf32>
    %c8 = arith.constant 8 : index
    %c0_37 = arith.constant 0 : index
    %c0_38 = arith.constant 0 : index
    %75 = vector.load %arg4[%c8, %c0_37, %c0_38] : memref<20x6x4xf32, #tpu.memory_space<vmem>>, vector<1x6x4xf32>
    %76 = vector.shape_cast %75 : vector<1x6x4xf32> to vector<6x4xf32>
    %cst_39 = arith.constant dense<0.000000e+00> : vector<6x8xf32>
    %77 = tpu.matmul %76, %13, %cst_39 {dimension_numbers = #tpu.dot_dimension_numbers<[1], [0], [0], [1], [0, 0, 1, 1], [], []>} : vector<6x4xf32>, vector<4x8xf32>, vector<6x8xf32> -> vector<6x8xf32>
    %c6_i32 = arith.constant 6 : i32
    %78 = vector.broadcast %c6_i32 : i32 to vector<8x128xi32>
    %79 = arith.cmpi eq, %9, %78 : vector<8x128xi32>
    %80 = arith.extui %79 : vector<8x128xi1> to vector<8x128xi32>
    %81 = arith.sitofp %80 : vector<8x128xi32> to vector<8x128xf32>
    %cst_40 = arith.constant dense<0.000000e+00> : vector<6x128xf32>
    %82 = tpu.matmul %77, %81, %cst_40 {dimension_numbers = #tpu.dot_dimension_numbers<[1], [0], [0], [1], [0, 0, 1, 1], [], []>} : vector<6x8xf32>, vector<8x128xf32>, vector<6x128xf32> -> vector<6x128xf32>
    %83 = arith.addf %74, %82 : vector<6x128xf32>
    %c9 = arith.constant 9 : index
    %c0_41 = arith.constant 0 : index
    %c0_42 = arith.constant 0 : index
    %84 = vector.load %arg4[%c9, %c0_41, %c0_42] : memref<20x6x4xf32, #tpu.memory_space<vmem>>, vector<1x6x4xf32>
    %85 = vector.shape_cast %84 : vector<1x6x4xf32> to vector<6x4xf32>
    %cst_43 = arith.constant dense<0.000000e+00> : vector<6x8xf32>
    %86 = tpu.matmul %85, %13, %cst_43 {dimension_numbers = #tpu.dot_dimension_numbers<[1], [0], [0], [1], [0, 0, 1, 1], [], []>} : vector<6x4xf32>, vector<4x8xf32>, vector<6x8xf32> -> vector<6x8xf32>
    %c7_i32 = arith.constant 7 : i32
    %87 = vector.broadcast %c7_i32 : i32 to vector<8x128xi32>
    %88 = arith.cmpi eq, %9, %87 : vector<8x128xi32>
    %89 = arith.extui %88 : vector<8x128xi1> to vector<8x128xi32>
    %90 = arith.sitofp %89 : vector<8x128xi32> to vector<8x128xf32>
    %cst_44 = arith.constant dense<0.000000e+00> : vector<6x128xf32>
    %91 = tpu.matmul %86, %90, %cst_44 {dimension_numbers = #tpu.dot_dimension_numbers<[1], [0], [0], [1], [0, 0, 1, 1], [], []>} : vector<6x8xf32>, vector<8x128xf32>, vector<6x128xf32> -> vector<6x128xf32>
    %92 = arith.addf %83, %91 : vector<6x128xf32>
    %c10 = arith.constant 10 : index
    %c0_45 = arith.constant 0 : index
    %c0_46 = arith.constant 0 : index
    %93 = vector.load %arg4[%c10, %c0_45, %c0_46] : memref<20x6x4xf32, #tpu.memory_space<vmem>>, vector<1x6x4xf32>
    %94 = vector.shape_cast %93 : vector<1x6x4xf32> to vector<6x4xf32>
    %cst_47 = arith.constant dense<0.000000e+00> : vector<6x8xf32>
    %95 = tpu.matmul %94, %13, %cst_47 {dimension_numbers = #tpu.dot_dimension_numbers<[1], [0], [0], [1], [0, 0, 1, 1], [], []>} : vector<6x4xf32>, vector<4x8xf32>, vector<6x8xf32> -> vector<6x8xf32>
    %c8_i32 = arith.constant 8 : i32
    %96 = vector.broadcast %c8_i32 : i32 to vector<8x128xi32>
    %97 = arith.cmpi eq, %9, %96 : vector<8x128xi32>
    %98 = arith.extui %97 : vector<8x128xi1> to vector<8x128xi32>
    %99 = arith.sitofp %98 : vector<8x128xi32> to vector<8x128xf32>
    %cst_48 = arith.constant dense<0.000000e+00> : vector<6x128xf32>
    %100 = tpu.matmul %95, %99, %cst_48 {dimension_numbers = #tpu.dot_dimension_numbers<[1], [0], [0], [1], [0, 0, 1, 1], [], []>} : vector<6x8xf32>, vector<8x128xf32>, vector<6x128xf32> -> vector<6x128xf32>
    %101 = arith.addf %92, %100 : vector<6x128xf32>
    %c11 = arith.constant 11 : index
    %c0_49 = arith.constant 0 : index
    %c0_50 = arith.constant 0 : index
    %102 = vector.load %arg4[%c11, %c0_49, %c0_50] : memref<20x6x4xf32, #tpu.memory_space<vmem>>, vector<1x6x4xf32>
    %103 = vector.shape_cast %102 : vector<1x6x4xf32> to vector<6x4xf32>
    %cst_51 = arith.constant dense<0.000000e+00> : vector<6x8xf32>
    %104 = tpu.matmul %103, %13, %cst_51 {dimension_numbers = #tpu.dot_dimension_numbers<[1], [0], [0], [1], [0, 0, 1, 1], [], []>} : vector<6x4xf32>, vector<4x8xf32>, vector<6x8xf32> -> vector<6x8xf32>
    %c9_i32 = arith.constant 9 : i32
    %105 = vector.broadcast %c9_i32 : i32 to vector<8x128xi32>
    %106 = arith.cmpi eq, %9, %105 : vector<8x128xi32>
    %107 = arith.extui %106 : vector<8x128xi1> to vector<8x128xi32>
    %108 = arith.sitofp %107 : vector<8x128xi32> to vector<8x128xf32>
    %cst_52 = arith.constant dense<0.000000e+00> : vector<6x128xf32>
    %109 = tpu.matmul %104, %108, %cst_52 {dimension_numbers = #tpu.dot_dimension_numbers<[1], [0], [0], [1], [0, 0, 1, 1], [], []>} : vector<6x8xf32>, vector<8x128xf32>, vector<6x128xf32> -> vector<6x128xf32>
    %110 = arith.addf %101, %109 : vector<6x128xf32>
    %c12 = arith.constant 12 : index
    %c0_53 = arith.constant 0 : index
    %c0_54 = arith.constant 0 : index
    %111 = vector.load %arg4[%c12, %c0_53, %c0_54] : memref<20x6x4xf32, #tpu.memory_space<vmem>>, vector<1x6x4xf32>
    %112 = vector.shape_cast %111 : vector<1x6x4xf32> to vector<6x4xf32>
    %cst_55 = arith.constant dense<0.000000e+00> : vector<6x8xf32>
    %113 = tpu.matmul %112, %13, %cst_55 {dimension_numbers = #tpu.dot_dimension_numbers<[1], [0], [0], [1], [0, 0, 1, 1], [], []>} : vector<6x4xf32>, vector<4x8xf32>, vector<6x8xf32> -> vector<6x8xf32>
    %c10_i32 = arith.constant 10 : i32
    %114 = vector.broadcast %c10_i32 : i32 to vector<8x128xi32>
    %115 = arith.cmpi eq, %9, %114 : vector<8x128xi32>
    %116 = arith.extui %115 : vector<8x128xi1> to vector<8x128xi32>
    %117 = arith.sitofp %116 : vector<8x128xi32> to vector<8x128xf32>
    %cst_56 = arith.constant dense<0.000000e+00> : vector<6x128xf32>
    %118 = tpu.matmul %113, %117, %cst_56 {dimension_numbers = #tpu.dot_dimension_numbers<[1], [0], [0], [1], [0, 0, 1, 1], [], []>} : vector<6x8xf32>, vector<8x128xf32>, vector<6x128xf32> -> vector<6x128xf32>
    %119 = arith.addf %110, %118 : vector<6x128xf32>
    %c13 = arith.constant 13 : index
    %c0_57 = arith.constant 0 : index
    %c0_58 = arith.constant 0 : index
    %120 = vector.load %arg4[%c13, %c0_57, %c0_58] : memref<20x6x4xf32, #tpu.memory_space<vmem>>, vector<1x6x4xf32>
    %121 = vector.shape_cast %120 : vector<1x6x4xf32> to vector<6x4xf32>
    %cst_59 = arith.constant dense<0.000000e+00> : vector<6x8xf32>
    %122 = tpu.matmul %121, %13, %cst_59 {dimension_numbers = #tpu.dot_dimension_numbers<[1], [0], [0], [1], [0, 0, 1, 1], [], []>} : vector<6x4xf32>, vector<4x8xf32>, vector<6x8xf32> -> vector<6x8xf32>
    %c11_i32 = arith.constant 11 : i32
    %123 = vector.broadcast %c11_i32 : i32 to vector<8x128xi32>
    %124 = arith.cmpi eq, %9, %123 : vector<8x128xi32>
    %125 = arith.extui %124 : vector<8x128xi1> to vector<8x128xi32>
    %126 = arith.sitofp %125 : vector<8x128xi32> to vector<8x128xf32>
    %cst_60 = arith.constant dense<0.000000e+00> : vector<6x128xf32>
    %127 = tpu.matmul %122, %126, %cst_60 {dimension_numbers = #tpu.dot_dimension_numbers<[1], [0], [0], [1], [0, 0, 1, 1], [], []>} : vector<6x8xf32>, vector<8x128xf32>, vector<6x128xf32> -> vector<6x128xf32>
    %128 = arith.addf %119, %127 : vector<6x128xf32>
    %c14 = arith.constant 14 : index
    %c0_61 = arith.constant 0 : index
    %c0_62 = arith.constant 0 : index
    %129 = vector.load %arg4[%c14, %c0_61, %c0_62] : memref<20x6x4xf32, #tpu.memory_space<vmem>>, vector<1x6x4xf32>
    %130 = vector.shape_cast %129 : vector<1x6x4xf32> to vector<6x4xf32>
    %cst_63 = arith.constant dense<0.000000e+00> : vector<6x8xf32>
    %131 = tpu.matmul %130, %13, %cst_63 {dimension_numbers = #tpu.dot_dimension_numbers<[1], [0], [0], [1], [0, 0, 1, 1], [], []>} : vector<6x4xf32>, vector<4x8xf32>, vector<6x8xf32> -> vector<6x8xf32>
    %c12_i32 = arith.constant 12 : i32
    %132 = vector.broadcast %c12_i32 : i32 to vector<8x128xi32>
    %133 = arith.cmpi eq, %9, %132 : vector<8x128xi32>
    %134 = arith.extui %133 : vector<8x128xi1> to vector<8x128xi32>
    %135 = arith.sitofp %134 : vector<8x128xi32> to vector<8x128xf32>
    %cst_64 = arith.constant dense<0.000000e+00> : vector<6x128xf32>
    %136 = tpu.matmul %131, %135, %cst_64 {dimension_numbers = #tpu.dot_dimension_numbers<[1], [0], [0], [1], [0, 0, 1, 1], [], []>} : vector<6x8xf32>, vector<8x128xf32>, vector<6x128xf32> -> vector<6x128xf32>
    %137 = arith.addf %128, %136 : vector<6x128xf32>
    %c15 = arith.constant 15 : index
    %c0_65 = arith.constant 0 : index
    %c0_66 = arith.constant 0 : index
    %138 = vector.load %arg4[%c15, %c0_65, %c0_66] : memref<20x6x4xf32, #tpu.memory_space<vmem>>, vector<1x6x4xf32>
    %139 = vector.shape_cast %138 : vector<1x6x4xf32> to vector<6x4xf32>
    %cst_67 = arith.constant dense<0.000000e+00> : vector<6x8xf32>
    %140 = tpu.matmul %139, %13, %cst_67 {dimension_numbers = #tpu.dot_dimension_numbers<[1], [0], [0], [1], [0, 0, 1, 1], [], []>} : vector<6x4xf32>, vector<4x8xf32>, vector<6x8xf32> -> vector<6x8xf32>
    %c13_i32 = arith.constant 13 : i32
    %141 = vector.broadcast %c13_i32 : i32 to vector<8x128xi32>
    %142 = arith.cmpi eq, %9, %141 : vector<8x128xi32>
    %143 = arith.extui %142 : vector<8x128xi1> to vector<8x128xi32>
    %144 = arith.sitofp %143 : vector<8x128xi32> to vector<8x128xf32>
    %cst_68 = arith.constant dense<0.000000e+00> : vector<6x128xf32>
    %145 = tpu.matmul %140, %144, %cst_68 {dimension_numbers = #tpu.dot_dimension_numbers<[1], [0], [0], [1], [0, 0, 1, 1], [], []>} : vector<6x8xf32>, vector<8x128xf32>, vector<6x128xf32> -> vector<6x128xf32>
    %146 = arith.addf %137, %145 : vector<6x128xf32>
    %c0_69 = arith.constant 0 : index
    %c0_70 = arith.constant 0 : index
    %c0_71 = arith.constant 0 : index
    %147 = vector.load %arg4[%c0_69, %c0_70, %c0_71] : memref<20x6x4xf32, #tpu.memory_space<vmem>>, vector<1x6x4xf32>
    %148 = vector.shape_cast %147 : vector<1x6x4xf32> to vector<6x4xf32>
    %149 = vector.extract_strided_slice %4 {offsets = [0, 2], sizes = [4, 8], strides = [1, 1]} : vector<4x16xf32> to vector<4x8xf32>
    %cst_72 = arith.constant dense<0.000000e+00> : vector<6x8xf32>
    %150 = tpu.matmul %148, %149, %cst_72 {dimension_numbers = #tpu.dot_dimension_numbers<[1], [0], [0], [1], [0, 0, 1, 1], [], []>} : vector<6x4xf32>, vector<4x8xf32>, vector<6x8xf32> -> vector<6x8xf32>
    %c16 = arith.constant 16 : index
    %c0_73 = arith.constant 0 : index
    %c0_74 = arith.constant 0 : index
    %151 = vector.load %arg4[%c16, %c0_73, %c0_74] : memref<20x6x4xf32, #tpu.memory_space<vmem>>, vector<1x6x4xf32>
    %152 = vector.shape_cast %151 : vector<1x6x4xf32> to vector<6x4xf32>
    %cst_75 = arith.constant dense<0.000000e+00> : vector<6x8xf32>
    %153 = tpu.matmul %152, %13, %cst_75 {dimension_numbers = #tpu.dot_dimension_numbers<[1], [0], [0], [1], [0, 0, 1, 1], [], []>} : vector<6x4xf32>, vector<4x8xf32>, vector<6x8xf32> -> vector<6x8xf32>
    %154 = arith.addf %150, %153 : vector<6x8xf32>
    %c14_i32 = arith.constant 14 : i32
    %155 = vector.broadcast %c14_i32 : i32 to vector<8x128xi32>
    %156 = arith.cmpi eq, %9, %155 : vector<8x128xi32>
    %157 = arith.extui %156 : vector<8x128xi1> to vector<8x128xi32>
    %158 = arith.sitofp %157 : vector<8x128xi32> to vector<8x128xf32>
    %cst_76 = arith.constant dense<0.000000e+00> : vector<6x128xf32>
    %159 = tpu.matmul %154, %158, %cst_76 {dimension_numbers = #tpu.dot_dimension_numbers<[1], [0], [0], [1], [0, 0, 1, 1], [], []>} : vector<6x8xf32>, vector<8x128xf32>, vector<6x128xf32> -> vector<6x128xf32>
    %160 = arith.addf %146, %159 : vector<6x128xf32>
    %c1 = arith.constant 1 : index
    %c0_77 = arith.constant 0 : index
    %c0_78 = arith.constant 0 : index
    %161 = vector.load %arg4[%c1, %c0_77, %c0_78] : memref<20x6x4xf32, #tpu.memory_space<vmem>>, vector<1x6x4xf32>
    %162 = vector.shape_cast %161 : vector<1x6x4xf32> to vector<6x4xf32>
    %cst_79 = arith.constant dense<0.000000e+00> : vector<6x8xf32>
    %163 = tpu.matmul %162, %149, %cst_79 {dimension_numbers = #tpu.dot_dimension_numbers<[1], [0], [0], [1], [0, 0, 1, 1], [], []>} : vector<6x4xf32>, vector<4x8xf32>, vector<6x8xf32> -> vector<6x8xf32>
    %c17 = arith.constant 17 : index
    %c0_80 = arith.constant 0 : index
    %c0_81 = arith.constant 0 : index
    %164 = vector.load %arg4[%c17, %c0_80, %c0_81] : memref<20x6x4xf32, #tpu.memory_space<vmem>>, vector<1x6x4xf32>
    %165 = vector.shape_cast %164 : vector<1x6x4xf32> to vector<6x4xf32>
    %cst_82 = arith.constant dense<0.000000e+00> : vector<6x8xf32>
    %166 = tpu.matmul %165, %13, %cst_82 {dimension_numbers = #tpu.dot_dimension_numbers<[1], [0], [0], [1], [0, 0, 1, 1], [], []>} : vector<6x4xf32>, vector<4x8xf32>, vector<6x8xf32> -> vector<6x8xf32>
    %167 = arith.addf %163, %166 : vector<6x8xf32>
    %c15_i32 = arith.constant 15 : i32
    %168 = vector.broadcast %c15_i32 : i32 to vector<8x128xi32>
    %169 = arith.cmpi eq, %9, %168 : vector<8x128xi32>
    %170 = arith.extui %169 : vector<8x128xi1> to vector<8x128xi32>
    %171 = arith.sitofp %170 : vector<8x128xi32> to vector<8x128xf32>
    %cst_83 = arith.constant dense<0.000000e+00> : vector<6x128xf32>
    %172 = tpu.matmul %167, %171, %cst_83 {dimension_numbers = #tpu.dot_dimension_numbers<[1], [0], [0], [1], [0, 0, 1, 1], [], []>} : vector<6x8xf32>, vector<8x128xf32>, vector<6x128xf32> -> vector<6x128xf32>
    %173 = arith.addf %160, %172 : vector<6x128xf32>
    %c0_84 = arith.constant 0 : index
    %c0_85 = arith.constant 0 : index
    %174 = vector.load %arg5[%c0_84, %c0_85] : memref<6x1xf32, #tpu.memory_space<vmem>>, vector<6x1xf32>
    %175 = vector.broadcast %174 : vector<6x1xf32> to vector<6x128xf32>
    %176 = arith.addf %173, %175 : vector<6x128xf32>
    %c0_86 = arith.constant 0 : index
    %c0_87 = arith.constant 0 : index
    %c0_88 = arith.constant 0 : index
    %177 = vector.load %arg6[%c0_86, %c0_87, %c0_88] : memref<1x6x128xf32, #tpu.memory_space<vmem>>, vector<1x6x128xf32>
    %178 = vector.shape_cast %177 : vector<1x6x128xf32> to vector<6x128xf32>
    %179 = vector.shape_cast %176 : vector<6x128xf32> to vector<1x6x128xf32>
    tpu.vector_store %arg6[%c0_86, %c0_87, %c0_88], %179 {strides = array<i32>} : memref<1x6x128xf32, #tpu.memory_space<vmem>>, vector<1x6x128xf32>,
    return
  }
  func.func @transform_0(%arg0: i32, %arg1: i32) -> (i32, i32, i32, i32) {
    %c0_i32 = arith.constant 0 : i32
    %0 = arith.addi %arg1, %c0_i32 : i32
    %c0_i32_0 = arith.constant 0 : i32
    %c0_i32_1 = arith.constant 0 : i32
    %c0_i32_2 = arith.constant 0 : i32
    return %arg0, %0, %c0_i32_0, %c0_i32_1 : i32, i32, i32, i32
  }
  func.func @transform_1(%arg0: i32, %arg1: i32) -> (i32, i32, i32, i32) {
    %c1_i32 = arith.constant 1 : i32
    %0 = arith.addi %arg1, %c1_i32 : i32
    %c0_i32 = arith.constant 0 : i32
    %c0_i32_0 = arith.constant 0 : i32
    %c0_i32_1 = arith.constant 0 : i32
    return %arg0, %0, %c0_i32, %c0_i32_0 : i32, i32, i32, i32
  }
  func.func @transform_2(%arg0: i32, %arg1: i32) -> (i32, i32, i32) {
    %c0_i32 = arith.constant 0 : i32
    %c0_i32_0 = arith.constant 0 : i32
    %c0_i32_1 = arith.constant 0 : i32
    %c0_i32_2 = arith.constant 0 : i32
    return %c0_i32, %c0_i32_0, %c0_i32_1 : i32, i32, i32
  }
  func.func @transform_3(%arg0: i32, %arg1: i32) -> (i32, i32) {
    %c0_i32 = arith.constant 0 : i32
    %c0_i32_0 = arith.constant 0 : i32
    %c0_i32_1 = arith.constant 0 : i32
    return %c0_i32, %c0_i32_0 : i32, i32
  }
  func.func @transform_4(%arg0: i32, %arg1: i32) -> (i32, i32, i32) {
    %c0_i32 = arith.constant 0 : i32
    %c0_i32_0 = arith.constant 0 : i32
    return %arg0, %c0_i32, %arg1 : i32, i32, i32
  }
}

</mosaic_0001>

<llo_original>
// kernel: upsample_forward.1
$region0: #{upsample_forward.1}
  #allocation0 [shape = 'u32[]', space=smem, size = 0x4, offset = 0x4, fixed_abs, tag = 'smem constant byte address 0x4 - core index']
  #allocation1 [shape = 'u32[144,128]{1,0:T(1,128)}', space=vmem, size = 0x12000, scoped, tag = 'internal scratch']
  %s0 = inlined_call_operand.vmem [shape: f32[2,3,4,8], index: 0, kind: input, shape index: {}, may-alias: {0,1}]
  %s1 = inlined_call_operand.vmem [shape: f32[2,3,4,8], index: 1, kind: input, shape index: {}, may-alias: {0,1}]
  %s2 = inlined_call_operand.vmem [shape: f32[20,6,4], index: 2, kind: input, shape index: {}]
  %s3 = inlined_call_operand.vmem [shape: f32[6,1], index: 3, kind: input, shape index: {}]
  %s4 = inlined_call_operand.vmem [shape: f32[2,6,256], index: 4, kind: output, shape index: {}]
  %s5 = sld [smem:[#allocation0]]
  $region49: #{upsample_forward.1} parent=0
    _
  %s7 = ssub.s32 1, %s5
  %s8 = scalar_select 0, %s7, %s5
  loop: start=0, step=1, limit=6
  $region2: #{upsample_forward.1} parent=0 // loop_pre_header
    _
  $region3: #{upsample_forward.1} parent=0 // loop_header
    %s10 = sphi 0, %s14
    %p11 = scmp.ge.s32.totalorder %s10, 6
    %s17 = sphi 0, %s29
    %s18 = sphi 0, %s25
    %s19 = sphi 0, %s17
    %s20 = sphi 0, %s18
    %s21 = sphi 0, %s19
    %s22 = sphi 0, %s20
    %s34 = sphi 0, %s36
    %s37 = sphi 0, %s34
    %s38 = sphi 0, %s37
    %s54 = sphi 0, %s38
    %s64 = sphi 0, %s66
    %s67 = sphi 0, %s64
    %s68 = sphi 0, %s67
    %s84 = sphi 0, %s68
    %s88 = sphi 0, %s88
    %s90 = sphi 0, %s88
    %s91 = sphi 0, %s90
    %s105 = sphi 0, %s91
    %s109 = sphi 0, %s109
    %s111 = sphi 0, %s109
    %s112 = sphi 0, %s111
    %s126 = sphi 0, %s112
    %s134 = sphi 0, %s136
    %s137 = sphi 0, %s134
    %s138 = sphi 0, %s137
    %s154 = sphi 0, %s138
  $region4: #{upsample_forward.1} parent=0 // loop_header_branch
    %13 = sbr.rel (%p11) target = $region8
  $region5: #{upsample_forward.1} parent=0 // loop_body
    %s15 = ssub.s32 %s10, 1
    %s16 = ssub.s32 %s10, 2
    %s23 = sadd.s32 1, %s18
    %p24 = scmp.ge.s32.totalorder %s23, 2
    %s25 = scalar_select %p24, 0, %s23
    %s26 = sadd.s32 1, %s17
    %s27 = scalar_select %p24, %s26, %s17
    %p28 = scmp.ge.s32.totalorder %s27, 2
    %s29 = scalar_select %p28, 0, %s27
    %s30 = ssub.s32 %s17, %s29
    %s31 = ssub.s32 %s18, %s25
    %s32 = sor.u32 %s30, %s31
    %p33 = scmp.eq.s32.totalorder %s32, 0
    %s35 = sadd.s32 %s34, 1
    %s36 = scalar_select %p33, %s34, %s35
    %p39 = pneg %p33
    %p40 = scmp.eq.s32.totalorder %s10, 3
    %p41 = por %p39, %p40
    %p42 = scmp.ne.s32.totalorder %s34, %s37
    %p43 = scmp.eq.s32.totalorder %s10, 0
    %p44 = por %p42, %p43
    %p45 = scmp.ne.s32.totalorder %s34, %s37
    %p46 = scmp.eq.s32.totalorder %s15, 3
    %p47 = por %p45, %p46
    %p48 = scmp.ne.s32.totalorder %s37, %s38
    %p49 = scmp.eq.s32.totalorder %s15, 0
    %p50 = por %p48, %p49
    %p51 = scmp.ne.s32.totalorder %s37, %s38
    %p52 = scmp.eq.s32.totalorder %s16, 3
    %p53 = por %p51, %p52
    %p55 = scmp.ne.s32.totalorder %s38, %s54
    %p56 = scmp.eq.s32.totalorder %s16, 0
    %p57 = por %p55, %p56
    %s58 = sadd.s32 %s18, 1
    %s59 = sadd.s32 %s25, 1
    %s60 = ssub.s32 %s17, %s29
    %s61 = ssub.s32 %s58, %s59
    %s62 = sor.u32 %s60, %s61
    %p63 = scmp.eq.s32.totalorder %s62, 0
    %s65 = sadd.s32 %s64, 1
    %s66 = scalar_select %p63, %s64, %s65
    %p69 = pneg %p63
    %p70 = scmp.eq.s32.totalorder %s10, 3
    %p71 = por %p69, %p70
    %p72 = scmp.ne.s32.totalorder %s64, %s67
    %p73 = scmp.eq.s32.totalorder %s10, 0
    %p74 = por %p72, %p73
    %p75 = scmp.ne.s32.totalorder %s64, %s67
    %p76 = scmp.eq.s32.totalorder %s15, 3
    %p77 = por %p75, %p76
    %p78 = scmp.ne.s32.totalorder %s67, %s68
    %p79 = scmp.eq.s32.totalorder %s15, 0
    %p80 = por %p78, %p79
    %p81 = scmp.ne.s32.totalorder %s67, %s68
    %p82 = scmp.eq.s32.totalorder %s16, 3
    %p83 = por %p81, %p82
    %p85 = scmp.ne.s32.totalorder %s68, %s84
    %p86 = scmp.eq.s32.totalorder %s16, 0
    %p87 = por %p85, %p86
    %s89 = sadd.s32 %s88, 1
    %p92 = scmp.eq.s32.totalorder %s10, 3
    %p93 = scmp.ne.s32.totalorder %s88, %s90
    %p94 = scmp.eq.s32.totalorder %s10, 0
    %p95 = por %p93, %p94
    %p96 = scmp.ne.s32.totalorder %s88, %s90
    %p97 = scmp.eq.s32.totalorder %s15, 3
    %p98 = por %p96, %p97
    %p99 = scmp.ne.s32.totalorder %s90, %s91
    %p100 = scmp.eq.s32.totalorder %s15, 0
    %p101 = por %p99, %p100
    %p102 = scmp.ne.s32.totalorder %s90, %s91
    %p103 = scmp.eq.s32.totalorder %s16, 3
    %p104 = por %p102, %p103
    %p106 = scmp.ne.s32.totalorder %s91, %s105
    %p107 = scmp.eq.s32.totalorder %s16, 0
    %p108 = por %p106, %p107
    %s110 = sadd.s32 %s109, 1
    %p113 = scmp.eq.s32.totalorder %s10, 3
    %p114 = scmp.ne.s32.totalorder %s109, %s111
    %p115 = scmp.eq.s32.totalorder %s10, 0
    %p116 = por %p114, %p115
    %p117 = scmp.ne.s32.totalorder %s109, %s111
    %p118 = scmp.eq.s32.totalorder %s15, 3
    %p119 = por %p117, %p118
    %p120 = scmp.ne.s32.totalorder %s111, %s112
    %p121 = scmp.eq.s32.totalorder %s15, 0
    %p122 = por %p120, %p121
    %p123 = scmp.ne.s32.totalorder %s111, %s112
    %p124 = scmp.eq.s32.totalorder %s16, 3
    %p125 = por %p123, %p124
    %p127 = scmp.ne.s32.totalorder %s112, %s126
    %p128 = scmp.eq.s32.totalorder %s16, 0
    %p129 = por %p127, %p128
    %s130 = ssub.s32 %s17, %s29
    %s131 = ssub.s32 %s18, %s25
    %s132 = sor.u32 %s130, %s131
    %p133 = scmp.eq.s32.totalorder %s132, 0
    %s135 = sadd.s32 %s134, 1
    %s136 = scalar_select %p133, %s134, %s135
    %p139 = pneg %p133
    %p140 = scmp.eq.s32.totalorder %s10, 3
    %p141 = por %p139, %p140
    %p142 = scmp.ne.s32.totalorder %s134, %s137
    %p143 = scmp.eq.s32.totalorder %s10, 0
    %p144 = por %p142, %p143
    %p145 = scmp.ne.s32.totalorder %s134, %s137
    %p146 = scmp.eq.s32.totalorder %s15, 3
    %p147 = por %p145, %p146
    %p148 = scmp.ne.s32.totalorder %s137, %s138
    %p149 = scmp.eq.s32.totalorder %s15, 0
    %p150 = por %p148, %p149
    %p151 = scmp.ne.s32.totalorder %s137, %s138
    %p152 = scmp.eq.s32.totalorder %s16, 3
    %p153 = por %p151, %p152
    %p155 = scmp.ne.s32.totalorder %s138, %s154
    %p156 = scmp.eq.s32.totalorder %s16, 0
    %p157 = por %p155, %p156
    %p158 = scmp.le.s32.totalorder 1, %s10
    %p159 = scmp.lt.s32.totalorder %s10, 5
    %p160 = pnand %p158, %p159
    %p161 = pneg %p160
    // Predicated region
    $region9: #{upsample_forward.1} parent=5 // pred_check
      _
    $region10: #{upsample_forward.1} parent=5 // pred_check_branch
      %163 = sbr.rel (%p160) target = $region12
    $region11: #{upsample_forward.1} parent=5 // pred_region
      %s164 = ssub.s32 %s10, 1
      // Predicated region
      $region13: #{upsample_forward.1} parent=11 // pred_check
        %p165 = pneg %p101
      $region14: #{upsample_forward.1} parent=11 // pred_check_branch
        %167 = sbr.rel (%p165) target = $region16
      $region15: #{upsample_forward.1} parent=11 // pred_region
        _
      $region16: #{upsample_forward.1} parent=11 // pred_fallthru
        _
      // Predicated region
      $region17: #{upsample_forward.1} parent=11 // pred_check
        %p168 = pneg %p122
      $region18: #{upsample_forward.1} parent=11 // pred_check_branch
        %170 = sbr.rel (%p168) target = $region20
      $region19: #{upsample_forward.1} parent=11 // pred_region
        _
      $region20: #{upsample_forward.1} parent=11 // pred_fallthru
        _
    $region12: #{upsample_forward.1} parent=5 // pred_fallthru
      _
    %p171 = scmp.lt.s32.totalorder %s10, 4
    // Predicated region
    $region21: #{upsample_forward.1} parent=5 // pred_check
      %p172 = pneg %p171
    $region22: #{upsample_forward.1} parent=5 // pred_check_branch
      %174 = sbr.rel (%p172) target = $region24
    $region23: #{upsample_forward.1} parent=5 // pred_region
      // Predicated region
      $region25: #{upsample_forward.1} parent=23 // pred_check
        %p175 = pneg %p44
      $region26: #{upsample_forward.1} parent=23 // pred_check_branch
        %177 = sbr.rel (%p175) target = $region28
      $region27: #{upsample_forward.1} parent=23 // pred_region
        %p178 = scmp.lt.s32.totalorder %s17, 1
        %s179 = scalar_select %p178, %s17, 1
        %p180 = scmp.lt.s32.totalorder %s18, 2
        %s181 = scalar_select %p180, %s18, 2
        %s182 = smul.addr %s179, 3
        %s183 = sadd.s32 %s181, %s182
        %s184 = smul.addr %s183, 4
        %s185 = scalar_lea.vmem %s0, %s184
      $region28: #{upsample_forward.1} parent=23 // pred_fallthru
        _
      // Predicated region
      $region29: #{upsample_forward.1} parent=23 // pred_check
        %p186 = pneg %p74
      $region30: #{upsample_forward.1} parent=23 // pred_check_branch
        %188 = sbr.rel (%p186) target = $region32
      $region31: #{upsample_forward.1} parent=23 // pred_region
        %s189 = sadd.s32 %s18, 1
        %p190 = scmp.lt.s32.totalorder %s17, 1
        %s191 = scalar_select %p190, %s17, 1
        %p192 = scmp.lt.s32.totalorder %s189, 2
        %s193 = scalar_select %p192, %s189, 2
        %s194 = smul.addr %s191, 3
        %s195 = sadd.s32 %s193, %s194
        %s196 = smul.addr %s195, 4
        %s197 = scalar_lea.vmem %s1, %s196
        %s198 = sadd.s32 %s18, 1
      $region32: #{upsample_forward.1} parent=23 // pred_fallthru
        _
    $region24: #{upsample_forward.1} parent=5 // pred_fallthru
      _
    %p199 = scmp.le.s32.totalorder 1, %s10
    %p200 = scmp.lt.s32.totalorder %s10, 5
    %p201 = pnand %p199, %p200
    %p202 = pneg %p201
    // Predicated region
    $region33: #{upsample_forward.1} parent=5 // pred_check
      _
    $region34: #{upsample_forward.1} parent=5 // pred_check_branch
      %204 = sbr.rel (%p201) target = $region36
    $region35: #{upsample_forward.1} parent=5 // pred_region
      %s205 = ssub.s32 %s10, 1
      %p206 = scmp.lt.s32.totalorder %s19, 1
      %s207 = scalar_select %p206, %s19, 1
      %p208 = scmp.lt.s32.totalorder %s20, 2
      %s209 = scalar_select %p208, %s20, 2
      %s210 = smul.addr %s207, 3
      %s211 = sadd.s32 %s209, %s210
      %s212 = smul.addr %s211, 4
      %s213 = scalar_lea.vmem %s0, %s212
      %p214 = pneg %p50
      %p215 = pneg %p47
      %s216 = sadd.s32 %s20, 1
      %p217 = scmp.lt.s32.totalorder %s19, 1
      %s218 = scalar_select %p217, %s19, 1
      %p219 = scmp.lt.s32.totalorder %s216, 2
      %s220 = scalar_select %p219, %s216, 2
      %s221 = smul.addr %s218, 3
      %s222 = sadd.s32 %s220, %s221
      %s223 = smul.addr %s222, 4
      %s224 = scalar_lea.vmem %s1, %s223
      %p225 = pneg %p80
      %p226 = pneg %p77
      %p227 = pneg %p101
      %p228 = pneg %p98
      %p229 = pneg %p122
      %p230 = pneg %p119
      %p231 = pneg %p150
      %p232 = pneg %p147
      %p233 = scmp.lt.s32.totalorder %s19, 1
      %s234 = scalar_select %p233, %s19, 1
      %p235 = scmp.lt.s32.totalorder %s20, 1
      %s236 = scalar_select %p235, %s20, 1
      %s237 = smul.addr %s234, 2
      %s238 = sadd.s32 %s236, %s237
      %s239 = smul.addr %s238, 8
      %s240 = scalar_lea.vmem %s4, %s239
      %p241 = scmp.lt.s32.totalorder %s19, 1
      %s242 = scalar_select %p241, %s19, 1
      %p243 = scmp.lt.s32.totalorder %s20, 2
      %s244 = scalar_select %p243, %s20, 2
      %s245 = smul.addr %s242, 3
      %s246 = sadd.s32 %s244, %s245
      %s247 = smul.addr %s246, 4
      %s248 = scalar_lea.vmem %s0, %s247
      %s249 = sadd.s32 %s20, 1
      %p250 = scmp.lt.s32.totalorder %s19, 1
      %s251 = scalar_select %p250, %s19, 1
      %p252 = scmp.lt.s32.totalorder %s249, 2
      %s253 = scalar_select %p252, %s249, 2
      %s254 = smul.addr %s251, 3
      %s255 = sadd.s32 %s253, %s254
      %s256 = smul.addr %s255, 4
      %s257 = scalar_lea.vmem %s1, %s256
      %s258 = sadd.s32 %s20, 1
      %p259 = scmp.lt.s32.totalorder %s19, 1
      %s260 = scalar_select %p259, %s19, 1
      %p261 = scmp.lt.s32.totalorder %s20, 1
      %s262 = scalar_select %p261, %s20, 1
      %s263 = smul.addr %s260, 2
      %s264 = sadd.s32 %s262, %s263
      %s265 = smul.addr %s264, 8
      %s266 = scalar_lea.vmem %s4, %s265
      %v267 = vld [vmem:[%s248] sm:$0xf]
      %v268 = vld [vmem:[%s257] sm:$0xf]
      %270 = vrot.lane.b32.xlu0 %v268, 8
      %v271 = vpop.permute.xlu0 %270
      %vm273 = vcmask 64512
      %v274 = vsel %vm273, %v267, %v271
      %v275 = vlaneseq
      %v276 = vand.u32 %v275, 127
      %v277 = vlaneseq
      %v278 = vshrl.u32 %v277, 7
      %v279 = vmul.u32 %v278, 16
      %v280 = vsub.s32 %v276, %v279
      %s281 = scalar_lea.vmem %s2, 16
      %v282 = vld [vmem:[%s281] sm:$0x3f]
      %s283 = scalar_lea.vmem %s2, 144
      %v284 = vld [vmem:[%s283] sm:$0x3f]
      %vm285 = vcmask 31744
      %v287 = vsel %vm285, %v284, 0
      %vm289 = vcmask 1043456
      %v291 = vsel %vm289, %v274, 0
      %293 = vmatprep.subr.mxu0 0.0
      %294 = vmatpush1.msra.mxu0 0.0
      %295 = vmatprep.subr.mxu0 0.0
      %296 = vmatpush1.msra.mxu0 0.0
      %297 = vmatprep.subr.mxu0 0.0
      %298 = vmatpush1.msra.mxu0 0.0
      %299 = vmatprep.subr.mxu0 0.0
      %300 = vmatpush1.msra.mxu0 0.0
      %301 = vmatprep.subr.mxu0 0.0
      %302 = vmatpush1.msra.mxu0 0.0
      %303 = vmatprep.subr.mxu0 0.0
      %304 = vmatpush1.msra.mxu0 0.0
      %305 = vmatprep.subr.mxu0 0.0
      %306 = vmatpush1.msra.mxu0 0.0
      %307 = vmatprep.subr.mxu0 0.0
      %308 = vmatpush1.msra.mxu0 0.0
      %309 = vmatprep.subr.mxu0 0.0
      %310 = vmatpush1.msra.mxu0 0.0
      %311 = vmatprep.subr.mxu0 0.0
      %312 = vmatpush1.msra.mxu0 0.0
      %313 = vmatprep.subr.mxu0 0.0
      %314 = vmatpush1.msra.mxu0 0.0
      %315 = vmatprep.subr.mxu0 0.0
      %316 = vmatpush1.msra.mxu0 0.0
      %317 = vmatprep.subr.mxu0 0.0
      %318 = vmatpush1.msra.mxu0 0.0
      %319 = vmatprep.subr.mxu0 0.0
      %320 = vmatpush1.msra.mxu0 0.0
      %321 = vmatprep.subr.mxu0 0.0
      %322 = vmatpush1.msra.mxu0 0.0
      %323 = vmatprep.subr.mxu0 0.0
      %324 = vmatpush1.msra.mxu0 %v291
      %325 = vmatprep.subr.mxu0 0.0
      %326 = vmatpush2.msra.mxu0 0.0
      %327 = vmatprep.subr.mxu0 0.0
      %328 = vmatpush2.msra.mxu0 0.0
      %329 = vmatprep.subr.mxu0 0.0
      %330 = vmatpush2.msra.mxu0 0.0
      %331 = vmatprep.subr.mxu0 0.0
      %332 = vmatpush2.msra.mxu0 0.0
      %333 = vmatprep.subr.mxu0 0.0
      %334 = vmatpush2.msra.mxu0 0.0
      %335 = vmatprep.subr.mxu0 0.0
      %336 = vmatpush2.msra.mxu0 0.0
      %337 = vmatprep.subr.mxu0 0.0
      %338 = vmatpush2.msra.mxu0 0.0
      %339 = vmatprep.subr.mxu0 0.0
      %340 = vmatpush2.msra.mxu0 0.0
      %341 = vmatprep.subr.mxu0 0.0
      %342 = vmatpush2.msra.mxu0 0.0
      %343 = vmatprep.subr.mxu0 0.0
      %344 = vmatpush2.msra.mxu0 0.0
      %345 = vmatprep.subr.mxu0 0.0
      %346 = vmatpush2.msra.mxu0 0.0
      %347 = vmatprep.subr.mxu0 0.0
      %348 = vmatpush2.msra.mxu0 0.0
      %349 = vmatprep.subr.mxu0 0.0
      %350 = vmatpush2.msra.mxu0 0.0
      %351 = vmatprep.subr.mxu0 0.0
      %352 = vmatpush2.msra.mxu0 0.0
      %353 = vmatprep.subr.mxu0 0.0
      %354 = vmatpush2.msra.mxu0 0.0
      %355 = vmatprep.subr.mxu0 0.0
      %356 = vmatpush2.msra.mxu0 0.0
      %357 = vmatprep.mubr.f32.mxu0 0.0
      %358 = vmatmul.mubr.f32.gmra.mxu0 %v287
      %v359 = vpop.f32.mrf.mxu0
      %v360 = vadd.f32 0.0, %v359
      %v361 = vpop.f32.mrf.mxu0
      %362 = vdwg.mxu0
      %363 = vrot.lane.b32.xlu0 %v274, 127
      %v364 = vpop.permute.xlu0 %363
      %v366 = vsel %vm285, %v282, 0
      %v368 = vsel %vm289, %v364, 0
      %370 = vmatprep.subr.mxu0 0.0
      %371 = vmatpush1.msra.mxu0 0.0
      %372 = vmatprep.subr.mxu0 0.0
      %373 = vmatpush1.msra.mxu0 0.0
      %374 = vmatprep.subr.mxu0 0.0
      %375 = vmatpush1.msra.mxu0 0.0
      %376 = vmatprep.subr.mxu0 0.0
      %377 = vmatpush1.msra.mxu0 0.0
      %378 = vmatprep.subr.mxu0 0.0
      %379 = vmatpush1.msra.mxu0 0.0
      %380 = vmatprep.subr.mxu0 0.0
      %381 = vmatpush1.msra.mxu0 0.0
      %382 = vmatprep.subr.mxu0 0.0
      %383 = vmatpush1.msra.mxu0 0.0
      %384 = vmatprep.subr.mxu0 0.0
      %385 = vmatpush1.msra.mxu0 0.0
      %386 = vmatprep.subr.mxu0 0.0
      %387 = vmatpush1.msra.mxu0 0.0
      %388 = vmatprep.subr.mxu0 0.0
      %389 = vmatpush1.msra.mxu0 0.0
      %390 = vmatprep.subr.mxu0 0.0
      %391 = vmatpush1.msra.mxu0 0.0
      %392 = vmatprep.subr.mxu0 0.0
      %393 = vmatpush1.msra.mxu0 0.0
      %394 = vmatprep.subr.mxu0 0.0
      %395 = vmatpush1.msra.mxu0 0.0
      %396 = vmatprep.subr.mxu0 0.0
      %397 = vmatpush1.msra.mxu0 0.0
      %398 = vmatprep.subr.mxu0 0.0
      %399 = vmatpush1.msra.mxu0 0.0
      %400 = vmatprep.subr.mxu0 0.0
      %401 = vmatpush1.msra.mxu0 %v368
      %402 = vmatprep.subr.mxu0 0.0
      %403 = vmatpush2.msra.mxu0 0.0
      %404 = vmatprep.subr.mxu0 0.0
      %405 = vmatpush2.msra.mxu0 0.0
      %406 = vmatprep.subr.mxu0 0.0
      %407 = vmatpush2.msra.mxu0 0.0
      %408 = vmatprep.subr.mxu0 0.0
      %409 = vmatpush2.msra.mxu0 0.0
      %410 = vmatprep.subr.mxu0 0.0
      %411 = vmatpush2.msra.mxu0 0.0
      %412 = vmatprep.subr.mxu0 0.0
      %413 = vmatpush2.msra.mxu0 0.0
      %414 = vmatprep.subr.mxu0 0.0
      %415 = vmatpush2.msra.mxu0 0.0
      %416 = vmatprep.subr.mxu0 0.0
      %417 = vmatpush2.msra.mxu0 0.0
      %418 = vmatprep.subr.mxu0 0.0
      %419 = vmatpush2.msra.mxu0 0.0
      %420 = vmatprep.subr.mxu0 0.0
      %421 = vmatpush2.msra.mxu0 0.0
      %422 = vmatprep.subr.mxu0 0.0
      %423 = vmatpush2.msra.mxu0 0.0
      %424 = vmatprep.subr.mxu0 0.0
      %425 = vmatpush2.msra.mxu0 0.0
      %426 = vmatprep.subr.mxu0 0.0
      %427 = vmatpush2.msra.mxu0 0.0
      %428 = vmatprep.subr.mxu0 0.0
      %429 = vmatpush2.msra.mxu0 0.0
      %430 = vmatprep.subr.mxu0 0.0
      %431 = vmatpush2.msra.mxu0 0.0
      %432 = vmatprep.subr.mxu0 0.0
      %433 = vmatpush2.msra.mxu0 0.0
      %434 = vmatprep.mubr.f32.mxu0 0.0
      %435 = vmatmul.mubr.f32.gmra.mxu0 %v366
      %v436 = vpop.f32.mrf.mxu0
      %v437 = vadd.f32 %v360, %v436
      %v438 = vpop.f32.mrf.mxu0
      %439 = vdwg.mxu0
      %vm440 = vcmp.eq.s32.totalorder %v280, 0
      %v441 = vsel %vm440, 1, 0
      %v442 = vcvt.s32.f32 %v441
      %s443 = scalar_lea.vmem %s2, 24
      %v444 = vld [vmem:[%s443] sm:$0x3f]
      %s445 = scalar_lea.vmem %s2, 152
      %v446 = vld [vmem:[%s445] sm:$0x3f]
      %v448 = vsel %vm285, %v446, 0
      %450 = vmatprep.subr.mxu0 0.0
      %451 = vmatpush1.msra.mxu0 0.0
      %452 = vmatprep.subr.mxu0 0.0
      %453 = vmatpush1.msra.mxu0 0.0
      %454 = vmatprep.subr.mxu0 0.0
      %455 = vmatpush1.msra.mxu0 0.0
      %456 = vmatprep.subr.mxu0 0.0
      %457 = vmatpush1.msra.mxu0 0.0
      %458 = vmatprep.subr.mxu0 0.0
      %459 = vmatpush1.msra.mxu0 0.0
      %460 = vmatprep.subr.mxu0 0.0
      %461 = vmatpush1.msra.mxu0 0.0
      %462 = vmatprep.subr.mxu0 0.0
      %463 = vmatpush1.msra.mxu0 0.0
      %464 = vmatprep.subr.mxu0 0.0
      %465 = vmatpush1.msra.mxu0 0.0
      %466 = vmatprep.subr.mxu0 0.0
      %467 = vmatpush1.msra.mxu0 0.0
      %468 = vmatprep.subr.mxu0 0.0
      %469 = vmatpush1.msra.mxu0 0.0
      %470 = vmatprep.subr.mxu0 0.0
      %471 = vmatpush1.msra.mxu0 0.0
      %472 = vmatprep.subr.mxu0 0.0
      %473 = vmatpush1.msra.mxu0 0.0
      %474 = vmatprep.subr.mxu0 0.0
      %475 = vmatpush1.msra.mxu0 0.0
      %476 = vmatprep.subr.mxu0 0.0
      %477 = vmatpush1.msra.mxu0 0.0
      %478 = vmatprep.subr.mxu0 0.0
      %479 = vmatpush1.msra.mxu0 0.0
      %480 = vmatprep.subr.mxu0 0.0
      %481 = vmatpush1.msra.mxu0 %v291
      %482 = vmatprep.subr.mxu0 0.0
      %483 = vmatpush2.msra.mxu0 0.0
      %484 = vmatprep.subr.mxu0 0.0
      %485 = vmatpush2.msra.mxu0 0.0
      %486 = vmatprep.subr.mxu0 0.0
      %487 = vmatpush2.msra.mxu0 0.0
      %488 = vmatprep.subr.mxu0 0.0
      %489 = vmatpush2.msra.mxu0 0.0
      %490 = vmatprep.subr.mxu0 0.0
      %491 = vmatpush2.msra.mxu0 0.0
      %492 = vmatprep.subr.mxu0 0.0
      %493 = vmatpush2.msra.mxu0 0.0
      %494 = vmatprep.subr.mxu0 0.0
      %495 = vmatpush2.msra.mxu0 0.0
      %496 = vmatprep.subr.mxu0 0.0
      %497 = vmatpush2.msra.mxu0 0.0
      %498 = vmatprep.subr.mxu0 0.0
      %499 = vmatpush2.msra.mxu0 0.0
      %500 = vmatprep.subr.mxu0 0.0
      %501 = vmatpush2.msra.mxu0 0.0
      %502 = vmatprep.subr.mxu0 0.0
      %503 = vmatpush2.msra.mxu0 0.0
      %504 = vmatprep.subr.mxu0 0.0
      %505 = vmatpush2.msra.mxu0 0.0
      %506 = vmatprep.subr.mxu0 0.0
      %507 = vmatpush2.msra.mxu0 0.0
      %508 = vmatprep.subr.mxu0 0.0
      %509 = vmatpush2.msra.mxu0 0.0
      %510 = vmatprep.subr.mxu0 0.0
      %511 = vmatpush2.msra.mxu0 0.0
      %512 = vmatprep.subr.mxu0 0.0
      %513 = vmatpush2.msra.mxu0 0.0
      %514 = vmatprep.mubr.f32.mxu0 0.0
      %515 = vmatmul.mubr.f32.gmra.mxu0 %v448
      %v516 = vpop.f32.mrf.mxu0
      %v517 = vadd.f32 0.0, %v516
      %v518 = vpop.f32.mrf.mxu0
      %519 = vdwg.mxu0
      %v521 = vsel %vm285, %v444, 0
      %523 = vmatprep.subr.mxu0 0.0
      %524 = vmatpush1.msra.mxu0 0.0
      %525 = vmatprep.subr.mxu0 0.0
      %526 = vmatpush1.msra.mxu0 0.0
      %527 = vmatprep.subr.mxu0 0.0
      %528 = vmatpush1.msra.mxu0 0.0
      %529 = vmatprep.subr.mxu0 0.0
      %530 = vmatpush1.msra.mxu0 0.0
      %531 = vmatprep.subr.mxu0 0.0
      %532 = vmatpush1.msra.mxu0 0.0
      %533 = vmatprep.subr.mxu0 0.0
      %534 = vmatpush1.msra.mxu0 0.0
      %535 = vmatprep.subr.mxu0 0.0
      %536 = vmatpush1.msra.mxu0 0.0
      %537 = vmatprep.subr.mxu0 0.0
      %538 = vmatpush1.msra.mxu0 0.0
      %539 = vmatprep.subr.mxu0 0.0
      %540 = vmatpush1.msra.mxu0 0.0
      %541 = vmatprep.subr.mxu0 0.0
      %542 = vmatpush1.msra.mxu0 0.0
      %543 = vmatprep.subr.mxu0 0.0
      %544 = vmatpush1.msra.mxu0 0.0
      %545 = vmatprep.subr.mxu0 0.0
      %546 = vmatpush1.msra.mxu0 0.0
      %547 = vmatprep.subr.mxu0 0.0
      %548 = vmatpush1.msra.mxu0 0.0
      %549 = vmatprep.subr.mxu0 0.0
      %550 = vmatpush1.msra.mxu0 0.0
      %551 = vmatprep.subr.mxu0 0.0
      %552 = vmatpush1.msra.mxu0 0.0
      %553 = vmatprep.subr.mxu0 0.0
      %554 = vmatpush1.msra.mxu0 %v368
      %555 = vmatprep.subr.mxu0 0.0
      %556 = vmatpush2.msra.mxu0 0.0
      %557 = vmatprep.subr.mxu0 0.0
      %558 = vmatpush2.msra.mxu0 0.0
      %559 = vmatprep.subr.mxu0 0.0
      %560 = vmatpush2.msra.mxu0 0.0
      %561 = vmatprep.subr.mxu0 0.0
      %562 = vmatpush2.msra.mxu0 0.0
      %563 = vmatprep.subr.mxu0 0.0
      %564 = vmatpush2.msra.mxu0 0.0
      %565 = vmatprep.subr.mxu0 0.0
      %566 = vmatpush2.msra.mxu0 0.0
      %567 = vmatprep.subr.mxu0 0.0
      %568 = vmatpush2.msra.mxu0 0.0
      %569 = vmatprep.subr.mxu0 0.0
      %570 = vmatpush2.msra.mxu0 0.0
      %571 = vmatprep.subr.mxu0 0.0
      %572 = vmatpush2.msra.mxu0 0.0
      %573 = vmatprep.subr.mxu0 0.0
      %574 = vmatpush2.msra.mxu0 0.0
      %575 = vmatprep.subr.mxu0 0.0
      %576 = vmatpush2.msra.mxu0 0.0
      %577 = vmatprep.subr.mxu0 0.0
      %578 = vmatpush2.msra.mxu0 0.0
      %579 = vmatprep.subr.mxu0 0.0
      %580 = vmatpush2.msra.mxu0 0.0
      %581 = vmatprep.subr.mxu0 0.0
      %582 = vmatpush2.msra.mxu0 0.0
      %583 = vmatprep.subr.mxu0 0.0
      %584 = vmatpush2.msra.mxu0 0.0
      %585 = vmatprep.subr.mxu0 0.0
      %586 = vmatpush2.msra.mxu0 0.0
      %587 = vmatprep.mubr.f32.mxu0 0.0
      %588 = vmatmul.mubr.f32.gmra.mxu0 %v521
      %v589 = vpop.f32.mrf.mxu0
      %v590 = vadd.f32 %v517, %v589
      %v591 = vpop.f32.mrf.mxu0
      %592 = vdwg.mxu0
      %vm593 = vcmp.eq.s32.totalorder %v280, 1
      %v594 = vsel %vm593, 1, 0
      %v595 = vcvt.s32.f32 %v594
      %v597 = vsel %vm273, %v590, 0
      %599 = vmatprep.subr.mxu0 0.0
      %600 = vmatpush1.msra.mxu0 0.0
      %601 = vmatprep.subr.mxu0 0.0
      %602 = vmatpush1.msra.mxu0 0.0
      %603 = vmatprep.subr.mxu0 0.0
      %604 = vmatpush1.msra.mxu0 0.0
      %605 = vmatprep.subr.mxu0 0.0
      %606 = vmatpush1.msra.mxu0 0.0
      %607 = vmatprep.subr.mxu0 0.0
      %608 = vmatpush1.msra.mxu0 0.0
      %609 = vmatprep.subr.mxu0 0.0
      %610 = vmatpush1.msra.mxu0 0.0
      %611 = vmatprep.subr.mxu0 0.0
      %612 = vmatpush1.msra.mxu0 0.0
      %613 = vmatprep.subr.mxu0 0.0
      %614 = vmatpush1.msra.mxu0 0.0
      %615 = vmatprep.subr.mxu0 0.0
      %616 = vmatpush1.msra.mxu0 0.0
      %617 = vmatprep.subr.mxu0 0.0
      %618 = vmatpush1.msra.mxu0 0.0
      %619 = vmatprep.subr.mxu0 0.0
      %620 = vmatpush1.msra.mxu0 0.0
      %621 = vmatprep.subr.mxu0 0.0
      %622 = vmatpush1.msra.mxu0 0.0
      %623 = vmatprep.subr.mxu0 0.0
      %624 = vmatpush1.msra.mxu0 0.0
      %625 = vmatprep.subr.mxu0 0.0
      %626 = vmatpush1.msra.mxu0 0.0
      %627 = vmatprep.subr.mxu0 0.0
      %628 = vmatpush1.msra.mxu0 0.0
      %629 = vmatprep.subr.mxu0 0.0
      %630 = vmatpush1.msra.mxu0 %v595
      %631 = vmatprep.subr.mxu0 0.0
      %632 = vmatpush2.msra.mxu0 0.0
      %633 = vmatprep.subr.mxu0 0.0
      %634 = vmatpush2.msra.mxu0 0.0
      %635 = vmatprep.subr.mxu0 0.0
      %636 = vmatpush2.msra.mxu0 0.0
      %637 = vmatprep.subr.mxu0 0.0
      %638 = vmatpush2.msra.mxu0 0.0
      %639 = vmatprep.subr.mxu0 0.0
      %640 = vmatpush2.msra.mxu0 0.0
      %641 = vmatprep.subr.mxu0 0.0
      %642 = vmatpush2.msra.mxu0 0.0
      %643 = vmatprep.subr.mxu0 0.0
      %644 = vmatpush2.msra.mxu0 0.0
      %645 = vmatprep.subr.mxu0 0.0
      %646 = vmatpush2.msra.mxu0 0.0
      %647 = vmatprep.subr.mxu0 0.0
      %648 = vmatpush2.msra.mxu0 0.0
      %649 = vmatprep.subr.mxu0 0.0
      %650 = vmatpush2.msra.mxu0 0.0
      %651 = vmatprep.subr.mxu0 0.0
      %652 = vmatpush2.msra.mxu0 0.0
      %653 = vmatprep.subr.mxu0 0.0
      %654 = vmatpush2.msra.mxu0 0.0
      %655 = vmatprep.subr.mxu0 0.0
      %656 = vmatpush2.msra.mxu0 0.0
      %657 = vmatprep.subr.mxu0 0.0
      %658 = vmatpush2.msra.mxu0 0.0
      %659 = vmatprep.subr.mxu0 0.0
      %660 = vmatpush2.msra.mxu0 0.0
      %661 = vmatprep.subr.mxu0 0.0
      %662 = vmatpush2.msra.mxu0 0.0
      %663 = vmatprep.mubr.f32.mxu0 0.0
      %664 = vmatmul.mubr.f32.gmra.mxu0 %v597
      %v665 = vpop.f32.mrf.mxu0
      %v666 = vadd.f32 0.0, %v665
      %v667 = vpop.f32.mrf.mxu0
      %668 = vdwg.mxu0
      %v670 = vsel %vm273, %v437, 0
      %672 = vmatprep.subr.mxu0 0.0
      %673 = vmatpush1.msra.mxu0 0.0
      %674 = vmatprep.subr.mxu0 0.0
      %675 = vmatpush1.msra.mxu0 0.0
      %676 = vmatprep.subr.mxu0 0.0
      %677 = vmatpush1.msra.mxu0 0.0
      %678 = vmatprep.subr.mxu0 0.0
      %679 = vmatpush1.msra.mxu0 0.0
      %680 = vmatprep.subr.mxu0 0.0
      %681 = vmatpush1.msra.mxu0 0.0
      %682 = vmatprep.subr.mxu0 0.0
      %683 = vmatpush1.msra.mxu0 0.0
      %684 = vmatprep.subr.mxu0 0.0
      %685 = vmatpush1.msra.mxu0 0.0
      %686 = vmatprep.subr.mxu0 0.0
      %687 = vmatpush1.msra.mxu0 0.0
      %688 = vmatprep.subr.mxu0 0.0
      %689 = vmatpush1.msra.mxu0 0.0
      %690 = vmatprep.subr.mxu0 0.0
      %691 = vmatpush1.msra.mxu0 0.0
      %692 = vmatprep.subr.mxu0 0.0
      %693 = vmatpush1.msra.mxu0 0.0
      %694 = vmatprep.subr.mxu0 0.0
      %695 = vmatpush1.msra.mxu0 0.0
      %696 = vmatprep.subr.mxu0 0.0
      %697 = vmatpush1.msra.mxu0 0.0
      %698 = vmatprep.subr.mxu0 0.0
      %699 = vmatpush1.msra.mxu0 0.0
      %700 = vmatprep.subr.mxu0 0.0
      %701 = vmatpush1.msra.mxu0 0.0
      %702 = vmatprep.subr.mxu0 0.0
      %703 = vmatpush1.msra.mxu0 %v442
      %704 = vmatprep.subr.mxu0 0.0
      %705 = vmatpush2.msra.mxu0 0.0
      %706 = vmatprep.subr.mxu0 0.0
      %707 = vmatpush2.msra.mxu0 0.0
      %708 = vmatprep.subr.mxu0 0.0
      %709 = vmatpush2.msra.mxu0 0.0
      %710 = vmatprep.subr.mxu0 0.0
      %711 = vmatpush2.msra.mxu0 0.0
      %712 = vmatprep.subr.mxu0 0.0
      %713 = vmatpush2.msra.mxu0 0.0
      %714 = vmatprep.subr.mxu0 0.0
      %715 = vmatpush2.msra.mxu0 0.0
      %716 = vmatprep.subr.mxu0 0.0
      %717 = vmatpush2.msra.mxu0 0.0
      %718 = vmatprep.subr.mxu0 0.0
      %719 = vmatpush2.msra.mxu0 0.0
      %720 = vmatprep.subr.mxu0 0.0
      %721 = vmatpush2.msra.mxu0 0.0
      %722 = vmatprep.subr.mxu0 0.0
      %723 = vmatpush2.msra.mxu0 0.0
      %724 = vmatprep.subr.mxu0 0.0
      %725 = vmatpush2.msra.mxu0 0.0
      %726 = vmatprep.subr.mxu0 0.0
      %727 = vmatpush2.msra.mxu0 0.0
      %728 = vmatprep.subr.mxu0 0.0
      %729 = vmatpush2.msra.mxu0 0.0
      %730 = vmatprep.subr.mxu0 0.0
      %731 = vmatpush2.msra.mxu0 0.0
      %732 = vmatprep.subr.mxu0 0.0
      %733 = vmatpush2.msra.mxu0 0.0
      %734 = vmatprep.subr.mxu0 0.0
      %735 = vmatpush2.msra.mxu0 0.0
      %736 = vmatprep.mubr.f32.mxu0 0.0
      %737 = vmatmul.mubr.f32.gmra.mxu0 %v670
      %v738 = vpop.f32.mrf.mxu0
      %v739 = vadd.f32 %v666, %v738
      %v740 = vpop.f32.mrf.mxu0
      %741 = vdwg.mxu0
      %s742 = scalar_lea.vmem %s2, 32
      %v743 = vld [vmem:[%s742] sm:$0x3f]
      %v745 = vsel %vm285, %v743, 0
      %747 = vmatprep.subr.mxu0 0.0
      %748 = vmatpush1.msra.mxu0 0.0
      %749 = vmatprep.subr.mxu0 0.0
      %750 = vmatpush1.msra.mxu0 0.0
      %751 = vmatprep.subr.mxu0 0.0
      %752 = vmatpush1.msra.mxu0 0.0
      %753 = vmatprep.subr.mxu0 0.0
      %754 = vmatpush1.msra.mxu0 0.0
      %755 = vmatprep.subr.mxu0 0.0
      %756 = vmatpush1.msra.mxu0 0.0
      %757 = vmatprep.subr.mxu0 0.0
      %758 = vmatpush1.msra.mxu0 0.0
      %759 = vmatprep.subr.mxu0 0.0
      %760 = vmatpush1.msra.mxu0 0.0
      %761 = vmatprep.subr.mxu0 0.0
      %762 = vmatpush1.msra.mxu0 0.0
      %763 = vmatprep.subr.mxu0 0.0
      %764 = vmatpush1.msra.mxu0 0.0
      %765 = vmatprep.subr.mxu0 0.0
      %766 = vmatpush1.msra.mxu0 0.0
      %767 = vmatprep.subr.mxu0 0.0
      %768 = vmatpush1.msra.mxu0 0.0
      %769 = vmatprep.subr.mxu0 0.0
      %770 = vmatpush1.msra.mxu0 0.0
      %771 = vmatprep.subr.mxu0 0.0
      %772 = vmatpush1.msra.mxu0 0.0
      %773 = vmatprep.subr.mxu0 0.0
      %774 = vmatpush1.msra.mxu0 0.0
      %775 = vmatprep.subr.mxu0 0.0
      %776 = vmatpush1.msra.mxu0 0.0
      %777 = vmatprep.subr.mxu0 0.0
      %778 = vmatpush1.msra.mxu0 %v368
      %779 = vmatprep.subr.mxu0 0.0
      %780 = vmatpush2.msra.mxu0 0.0
      %781 = vmatprep.subr.mxu0 0.0
      %782 = vmatpush2.msra.mxu0 0.0
      %783 = vmatprep.subr.mxu0 0.0
      %784 = vmatpush2.msra.mxu0 0.0
      %785 = vmatprep.subr.mxu0 0.0
      %786 = vmatpush2.msra.mxu0 0.0
      %787 = vmatprep.subr.mxu0 0.0
      %788 = vmatpush2.msra.mxu0 0.0
      %789 = vmatprep.subr.mxu0 0.0
      %790 = vmatpush2.msra.mxu0 0.0
      %791 = vmatprep.subr.mxu0 0.0
      %792 = vmatpush2.msra.mxu0 0.0
      %793 = vmatprep.subr.mxu0 0.0
      %794 = vmatpush2.msra.mxu0 0.0
      %795 = vmatprep.subr.mxu0 0.0
      %796 = vmatpush2.msra.mxu0 0.0
      %797 = vmatprep.subr.mxu0 0.0
      %798 = vmatpush2.msra.mxu0 0.0
      %799 = vmatprep.subr.mxu0 0.0
      %800 = vmatpush2.msra.mxu0 0.0
      %801 = vmatprep.subr.mxu0 0.0
      %802 = vmatpush2.msra.mxu0 0.0
      %803 = vmatprep.subr.mxu0 0.0
      %804 = vmatpush2.msra.mxu0 0.0
      %805 = vmatprep.subr.mxu0 0.0
      %806 = vmatpush2.msra.mxu0 0.0
      %807 = vmatprep.subr.mxu0 0.0
      %808 = vmatpush2.msra.mxu0 0.0
      %809 = vmatprep.subr.mxu0 0.0
      %810 = vmatpush2.msra.mxu0 0.0
      %811 = vmatprep.mubr.f32.mxu0 0.0
      %812 = vmatmul.mubr.f32.gmra.mxu0 %v745
      %v813 = vpop.f32.mrf.mxu0
      %v814 = vadd.f32 0.0, %v813
      %v815 = vpop.f32.mrf.mxu0
      %816 = vdwg.mxu0
      %vm817 = vcmp.eq.s32.totalorder %v280, 2
      %v818 = vsel %vm817, 1, 0
      %v819 = vcvt.s32.f32 %v818
      %v821 = vsel %vm273, %v814, 0
      %823 = vmatprep.subr.mxu0 0.0
      %824 = vmatpush1.msra.mxu0 0.0
      %825 = vmatprep.subr.mxu0 0.0
      %826 = vmatpush1.msra.mxu0 0.0
      %827 = vmatprep.subr.mxu0 0.0
      %828 = vmatpush1.msra.mxu0 0.0
      %829 = vmatprep.subr.mxu0 0.0
      %830 = vmatpush1.msra.mxu0 0.0
      %831 = vmatprep.subr.mxu0 0.0
      %832 = vmatpush1.msra.mxu0 0.0
      %833 = vmatprep.subr.mxu0 0.0
      %834 = vmatpush1.msra.mxu0 0.0
      %835 = vmatprep.subr.mxu0 0.0
      %836 = vmatpush1.msra.mxu0 0.0
      %837 = vmatprep.subr.mxu0 0.0
      %838 = vmatpush1.msra.mxu0 0.0
      %839 = vmatprep.subr.mxu0 0.0
      %840 = vmatpush1.msra.mxu0 0.0
      %841 = vmatprep.subr.mxu0 0.0
      %842 = vmatpush1.msra.mxu0 0.0
      %843 = vmatprep.subr.mxu0 0.0
      %844 = vmatpush1.msra.mxu0 0.0
      %845 = vmatprep.subr.mxu0 0.0
      %846 = vmatpush1.msra.mxu0 0.0
      %847 = vmatprep.subr.mxu0 0.0
      %848 = vmatpush1.msra.mxu0 0.0
      %849 = vmatprep.subr.mxu0 0.0
      %850 = vmatpush1.msra.mxu0 0.0
      %851 = vmatprep.subr.mxu0 0.0
      %852 = vmatpush1.msra.mxu0 0.0
      %853 = vmatprep.subr.mxu0 0.0
      %854 = vmatpush1.msra.mxu0 %v819
      %855 = vmatprep.subr.mxu0 0.0
      %856 = vmatpush2.msra.mxu0 0.0
      %857 = vmatprep.subr.mxu0 0.0
      %858 = vmatpush2.msra.mxu0 0.0
      %859 = vmatprep.subr.mxu0 0.0
      %860 = vmatpush2.msra.mxu0 0.0
      %861 = vmatprep.subr.mxu0 0.0
      %862 = vmatpush2.msra.mxu0 0.0
      %863 = vmatprep.subr.mxu0 0.0
      %864 = vmatpush2.msra.mxu0 0.0
      %865 = vmatprep.subr.mxu0 0.0
      %866 = vmatpush2.msra.mxu0 0.0
      %867 = vmatprep.subr.mxu0 0.0
      %868 = vmatpush2.msra.mxu0 0.0
      %869 = vmatprep.subr.mxu0 0.0
      %870 = vmatpush2.msra.mxu0 0.0
      %871 = vmatprep.subr.mxu0 0.0
      %872 = vmatpush2.msra.mxu0 0.0
      %873 = vmatprep.subr.mxu0 0.0
      %874 = vmatpush2.msra.mxu0 0.0
      %875 = vmatprep.subr.mxu0 0.0
      %876 = vmatpush2.msra.mxu0 0.0
      %877 = vmatprep.subr.mxu0 0.0
      %878 = vmatpush2.msra.mxu0 0.0
      %879 = vmatprep.subr.mxu0 0.0
      %880 = vmatpush2.msra.mxu0 0.0
      %881 = vmatprep.subr.mxu0 0.0
      %882 = vmatpush2.msra.mxu0 0.0
      %883 = vmatprep.subr.mxu0 0.0
      %884 = vmatpush2.msra.mxu0 0.0
      %885 = vmatprep.subr.mxu0 0.0
      %886 = vmatpush2.msra.mxu0 0.0
      %887 = vmatprep.mubr.f32.mxu0 0.0
      %888 = vmatmul.mubr.f32.gmra.mxu0 %v821
      %v889 = vpop.f32.mrf.mxu0
      %v890 = vadd.f32 0.0, %v889
      %v891 = vpop.f32.mrf.mxu0
      %892 = vdwg.mxu0
      %v893 = vadd.f32 %v739, %v890
      %s894 = scalar_lea.vmem %s2, 40
      %v895 = vld [vmem:[%s894] sm:$0x3f]
      %v897 = vsel %vm285, %v895, 0
      %899 = vmatprep.subr.mxu0 0.0
      %900 = vmatpush1.msra.mxu0 0.0
      %901 = vmatprep.subr.mxu0 0.0
      %902 = vmatpush1.msra.mxu0 0.0
      %903 = vmatprep.subr.mxu0 0.0
      %904 = vmatpush1.msra.mxu0 0.0
      %905 = vmatprep.subr.mxu0 0.0
      %906 = vmatpush1.msra.mxu0 0.0
      %907 = vmatprep.subr.mxu0 0.0
      %908 = vmatpush1.msra.mxu0 0.0
      %909 = vmatprep.subr.mxu0 0.0
      %910 = vmatpush1.msra.mxu0 0.0
      %911 = vmatprep.subr.mxu0 0.0
      %912 = vmatpush1.msra.mxu0 0.0
      %913 = vmatprep.subr.mxu0 0.0
      %914 = vmatpush1.msra.mxu0 0.0
      %915 = vmatprep.subr.mxu0 0.0
      %916 = vmatpush1.msra.mxu0 0.0
      %917 = vmatprep.subr.mxu0 0.0
      %918 = vmatpush1.msra.mxu0 0.0
      %919 = vmatprep.subr.mxu0 0.0
      %920 = vmatpush1.msra.mxu0 0.0
      %921 = vmatprep.subr.mxu0 0.0
      %922 = vmatpush1.msra.mxu0 0.0
      %923 = vmatprep.subr.mxu0 0.0
      %924 = vmatpush1.msra.mxu0 0.0
      %925 = vmatprep.subr.mxu0 0.0
      %926 = vmatpush1.msra.mxu0 0.0
      %927 = vmatprep.subr.mxu0 0.0
      %928 = vmatpush1.msra.mxu0 0.0
      %929 = vmatprep.subr.mxu0 0.0
      %930 = vmatpush1.msra.mxu0 %v368
      %931 = vmatprep.subr.mxu0 0.0
      %932 = vmatpush2.msra.mxu0 0.0
      %933 = vmatprep.subr.mxu0 0.0
      %934 = vmatpush2.msra.mxu0 0.0
      %935 = vmatprep.subr.mxu0 0.0
      %936 = vmatpush2.msra.mxu0 0.0
      %937 = vmatprep.subr.mxu0 0.0
      %938 = vmatpush2.msra.mxu0 0.0
      %939 = vmatprep.subr.mxu0 0.0
      %940 = vmatpush2.msra.mxu0 0.0
      %941 = vmatprep.subr.mxu0 0.0
      %942 = vmatpush2.msra.mxu0 0.0
      %943 = vmatprep.subr.mxu0 0.0
      %944 = vmatpush2.msra.mxu0 0.0
      %945 = vmatprep.subr.mxu0 0.0
      %946 = vmatpush2.msra.mxu0 0.0
      %947 = vmatprep.subr.mxu0 0.0
      %948 = vmatpush2.msra.mxu0 0.0
      %949 = vmatprep.subr.mxu0 0.0
      %950 = vmatpush2.msra.mxu0 0.0
      %951 = vmatprep.subr.mxu0 0.0
      %952 = vmatpush2.msra.mxu0 0.0
      %953 = vmatprep.subr.mxu0 0.0
      %954 = vmatpush2.msra.mxu0 0.0
      %955 = vmatprep.subr.mxu0 0.0
      %956 = vmatpush2.msra.mxu0 0.0
      %957 = vmatprep.subr.mxu0 0.0
      %958 = vmatpush2.msra.mxu0 0.0
      %959 = vmatprep.subr.mxu0 0.0
      %960 = vmatpush2.msra.mxu0 0.0
      %961 = vmatprep.subr.mxu0 0.0
      %962 = vmatpush2.msra.mxu0 0.0
      %963 = vmatprep.mubr.f32.mxu0 0.0
      %964 = vmatmul.mubr.f32.gmra.mxu0 %v897
      %v965 = vpop.f32.mrf.mxu0
      %v966 = vadd.f32 0.0, %v965
      %v967 = vpop.f32.mrf.mxu0
      %968 = vdwg.mxu0
      %vm969 = vcmp.eq.s32.totalorder %v280, 3
      %v970 = vsel %vm969, 1, 0
      %v971 = vcvt.s32.f32 %v970
      %v973 = vsel %vm273, %v966, 0
      %975 = vmatprep.subr.mxu0 0.0
      %976 = vmatpush1.msra.mxu0 0.0
      %977 = vmatprep.subr.mxu0 0.0
      %978 = vmatpush1.msra.mxu0 0.0
      %979 = vmatprep.subr.mxu0 0.0
      %980 = vmatpush1.msra.mxu0 0.0
      %981 = vmatprep.subr.mxu0 0.0
      %982 = vmatpush1.msra.mxu0 0.0
      %983 = vmatprep.subr.mxu0 0.0
      %984 = vmatpush1.msra.mxu0 0.0
      %985 = vmatprep.subr.mxu0 0.0
      %986 = vmatpush1.msra.mxu0 0.0
      %987 = vmatprep.subr.mxu0 0.0
      %988 = vmatpush1.msra.mxu0 0.0
      %989 = vmatprep.subr.mxu0 0.0
      %990 = vmatpush1.msra.mxu0 0.0
      %991 = vmatprep.subr.mxu0 0.0
      %992 = vmatpush1.msra.mxu0 0.0
      %993 = vmatprep.subr.mxu0 0.0
      %994 = vmatpush1.msra.mxu0 0.0
      %995 = vmatprep.subr.mxu0 0.0
      %996 = vmatpush1.msra.mxu0 0.0
      %997 = vmatprep.subr.mxu0 0.0
      %998 = vmatpush1.msra.mxu0 0.0
      %999 = vmatprep.subr.mxu0 0.0
      %1000 = vmatpush1.msra.mxu0 0.0
      %1001 = vmatprep.subr.mxu0 0.0
      %1002 = vmatpush1.msra.mxu0 0.0
      %1003 = vmatprep.subr.mxu0 0.0
      %1004 = vmatpush1.msra.mxu0 0.0
      %1005 = vmatprep.subr.mxu0 0.0
      %1006 = vmatpush1.msra.mxu0 %v971
      %1007 = vmatprep.subr.mxu0 0.0
      %1008 = vmatpush2.msra.mxu0 0.0
      %1009 = vmatprep.subr.mxu0 0.0
      %1010 = vmatpush2.msra.mxu0 0.0
      %1011 = vmatprep.subr.mxu0 0.0
      %1012 = vmatpush2.msra.mxu0 0.0
      %1013 = vmatprep.subr.mxu0 0.0
      %1014 = vmatpush2.msra.mxu0 0.0
      %1015 = vmatprep.subr.mxu0 0.0
      %1016 = vmatpush2.msra.mxu0 0.0
      %1017 = vmatprep.subr.mxu0 0.0
      %1018 = vmatpush2.msra.mxu0 0.0
      %1019 = vmatprep.subr.mxu0 0.0
      %1020 = vmatpush2.msra.mxu0 0.0
      %1021 = vmatprep.subr.mxu0 0.0
      %1022 = vmatpush2.msra.mxu0 0.0
      %1023 = vmatprep.subr.mxu0 0.0
      %1024 = vmatpush2.msra.mxu0 0.0
      %1025 = vmatprep.subr.mxu0 0.0
      %1026 = vmatpush2.msra.mxu0 0.0
      %1027 = vmatprep.subr.mxu0 0.0
      %1028 = vmatpush2.msra.mxu0 0.0
      %1029 = vmatprep.subr.mxu0 0.0
      %1030 = vmatpush2.msra.mxu0 0.0
      %1031 = vmatprep.subr.mxu0 0.0
      %1032 = vmatpush2.msra.mxu0 0.0
      %1033 = vmatprep.subr.mxu0 0.0
      %1034 = vmatpush2.msra.mxu0 0.0
      %1035 = vmatprep.subr.mxu0 0.0
      %1036 = vmatpush2.msra.mxu0 0.0
      %1037 = vmatprep.subr.mxu0 0.0
      %1038 = vmatpush2.msra.mxu0 0.0
      %1039 = vmatprep.mubr.f32.mxu0 0.0
      %1040 = vmatmul.mubr.f32.gmra.mxu0 %v973
      %v1041 = vpop.f32.mrf.mxu0
      %v1042 = vadd.f32 0.0, %v1041
      %v1043 = vpop.f32.mrf.mxu0
      %1044 = vdwg.mxu0
      %v1045 = vadd.f32 %v893, %v1042
      %s1046 = scalar_lea.vmem %s2, 48
      %v1047 = vld [vmem:[%s1046] sm:$0x3f]
      %v1049 = vsel %vm285, %v1047, 0
      %1051 = vmatprep.subr.mxu0 0.0
      %1052 = vmatpush1.msra.mxu0 0.0
      %1053 = vmatprep.subr.mxu0 0.0
      %1054 = vmatpush1.msra.mxu0 0.0
      %1055 = vmatprep.subr.mxu0 0.0
      %1056 = vmatpush1.msra.mxu0 0.0
      %1057 = vmatprep.subr.mxu0 0.0
      %1058 = vmatpush1.msra.mxu0 0.0
      %1059 = vmatprep.subr.mxu0 0.0
      %1060 = vmatpush1.msra.mxu0 0.0
      %1061 = vmatprep.subr.mxu0 0.0
      %1062 = vmatpush1.msra.mxu0 0.0
      %1063 = vmatprep.subr.mxu0 0.0
      %1064 = vmatpush1.msra.mxu0 0.0
      %1065 = vmatprep.subr.mxu0 0.0
      %1066 = vmatpush1.msra.mxu0 0.0
      %1067 = vmatprep.subr.mxu0 0.0
      %1068 = vmatpush1.msra.mxu0 0.0
      %1069 = vmatprep.subr.mxu0 0.0
      %1070 = vmatpush1.msra.mxu0 0.0
      %1071 = vmatprep.subr.mxu0 0.0
      %1072 = vmatpush1.msra.mxu0 0.0
      %1073 = vmatprep.subr.mxu0 0.0
      %1074 = vmatpush1.msra.mxu0 0.0
      %1075 = vmatprep.subr.mxu0 0.0
      %1076 = vmatpush1.msra.mxu0 0.0
      %1077 = vmatprep.subr.mxu0 0.0
      %1078 = vmatpush1.msra.mxu0 0.0
      %1079 = vmatprep.subr.mxu0 0.0
      %1080 = vmatpush1.msra.mxu0 0.0
      %1081 = vmatprep.subr.mxu0 0.0
      %1082 = vmatpush1.msra.mxu0 %v368
      %1083 = vmatprep.subr.mxu0 0.0
      %1084 = vmatpush2.msra.mxu0 0.0
      %1085 = vmatprep.subr.mxu0 0.0
      %1086 = vmatpush2.msra.mxu0 0.0
      %1087 = vmatprep.subr.mxu0 0.0
      %1088 = vmatpush2.msra.mxu0 0.0
      %1089 = vmatprep.subr.mxu0 0.0
      %1090 = vmatpush2.msra.mxu0 0.0
      %1091 = vmatprep.subr.mxu0 0.0
      %1092 = vmatpush2.msra.mxu0 0.0
      %1093 = vmatprep.subr.mxu0 0.0
      %1094 = vmatpush2.msra.mxu0 0.0
      %1095 = vmatprep.subr.mxu0 0.0
      %1096 = vmatpush2.msra.mxu0 0.0
      %1097 = vmatprep.subr.mxu0 0.0
      %1098 = vmatpush2.msra.mxu0 0.0
      %1099 = vmatprep.subr.mxu0 0.0
      %1100 = vmatpush2.msra.mxu0 0.0
      %1101 = vmatprep.subr.mxu0 0.0
      %1102 = vmatpush2.msra.mxu0 0.0
      %1103 = vmatprep.subr.mxu0 0.0
      %1104 = vmatpush2.msra.mxu0 0.0
      %1105 = vmatprep.subr.mxu0 0.0
      %1106 = vmatpush2.msra.mxu0 0.0
      %1107 = vmatprep.subr.mxu0 0.0
      %1108 = vmatpush2.msra.mxu0 0.0
      %1109 = vmatprep.subr.mxu0 0.0
      %1110 = vmatpush2.msra.mxu0 0.0
      %1111 = vmatprep.subr.mxu0 0.0
      %1112 = vmatpush2.msra.mxu0 0.0
      %1113 = vmatprep.subr.mxu0 0.0
      %1114 = vmatpush2.msra.mxu0 0.0
      %1115 = vmatprep.mubr.f32.mxu0 0.0
      %1116 = vmatmul.mubr.f32.gmra.mxu0 %v1049
      %v1117 = vpop.f32.mrf.mxu0
      %v1118 = vadd.f32 0.0, %v1117
      %v1119 = vpop.f32.mrf.mxu0
      %1120 = vdwg.mxu0
      %vm1121 = vcmp.eq.s32.totalorder %v280, 4
      %v1122 = vsel %vm1121, 1, 0
      %v1123 = vcvt.s32.f32 %v1122
      %v1125 = vsel %vm273, %v1118, 0
      %1127 = vmatprep.subr.mxu0 0.0
      %1128 = vmatpush1.msra.mxu0 0.0
      %1129 = vmatprep.subr.mxu0 0.0
      %1130 = vmatpush1.msra.mxu0 0.0
      %1131 = vmatprep.subr.mxu0 0.0
      %1132 = vmatpush1.msra.mxu0 0.0
      %1133 = vmatprep.subr.mxu0 0.0
      %1134 = vmatpush1.msra.mxu0 0.0
      %1135 = vmatprep.subr.mxu0 0.0
      %1136 = vmatpush1.msra.mxu0 0.0
      %1137 = vmatprep.subr.mxu0 0.0
      %1138 = vmatpush1.msra.mxu0 0.0
      %1139 = vmatprep.subr.mxu0 0.0
      %1140 = vmatpush1.msra.mxu0 0.0
      %1141 = vmatprep.subr.mxu0 0.0
      %1142 = vmatpush1.msra.mxu0 0.0
      %1143 = vmatprep.subr.mxu0 0.0
      %1144 = vmatpush1.msra.mxu0 0.0
      %1145 = vmatprep.subr.mxu0 0.0
      %1146 = vmatpush1.msra.mxu0 0.0
      %1147 = vmatprep.subr.mxu0 0.0
      %1148 = vmatpush1.msra.mxu0 0.0
      %1149 = vmatprep.subr.mxu0 0.0
      %1150 = vmatpush1.msra.mxu0 0.0
      %1151 = vmatprep.subr.mxu0 0.0
      %1152 = vmatpush1.msra.mxu0 0.0
      %1153 = vmatprep.subr.mxu0 0.0
      %1154 = vmatpush1.msra.mxu0 0.0
      %1155 = vmatprep.subr.mxu0 0.0
      %1156 = vmatpush1.msra.mxu0 0.0
      %1157 = vmatprep.subr.mxu0 0.0
      %1158 = vmatpush1.msra.mxu0 %v1123
      %1159 = vmatprep.subr.mxu0 0.0
      %1160 = vmatpush2.msra.mxu0 0.0
      %1161 = vmatprep.subr.mxu0 0.0
      %1162 = vmatpush2.msra.mxu0 0.0
      %1163 = vmatprep.subr.mxu0 0.0
      %1164 = vmatpush2.msra.mxu0 0.0
      %1165 = vmatprep.subr.mxu0 0.0
      %1166 = vmatpush2.msra.mxu0 0.0
      %1167 = vmatprep.subr.mxu0 0.0
      %1168 = vmatpush2.msra.mxu0 0.0
      %1169 = vmatprep.subr.mxu0 0.0
      %1170 = vmatpush2.msra.mxu0 0.0
      %1171 = vmatprep.subr.mxu0 0.0
      %1172 = vmatpush2.msra.mxu0 0.0
      %1173 = vmatprep.subr.mxu0 0.0
      %1174 = vmatpush2.msra.mxu0 0.0
      %1175 = vmatprep.subr.mxu0 0.0
      %1176 = vmatpush2.msra.mxu0 0.0
      %1177 = vmatprep.subr.mxu0 0.0
      %1178 = vmatpush2.msra.mxu0 0.0
      %1179 = vmatprep.subr.mxu0 0.0
      %1180 = vmatpush2.msra.mxu0 0.0
      %1181 = vmatprep.subr.mxu0 0.0
      %1182 = vmatpush2.msra.mxu0 0.0
      %1183 = vmatprep.subr.mxu0 0.0
      %1184 = vmatpush2.msra.mxu0 0.0
      %1185 = vmatprep.subr.mxu0 0.0
      %1186 = vmatpush2.msra.mxu0 0.0
      %1187 = vmatprep.subr.mxu0 0.0
      %1188 = vmatpush2.msra.mxu0 0.0
      %1189 = vmatprep.subr.mxu0 0.0
      %1190 = vmatpush2.msra.mxu0 0.0
      %1191 = vmatprep.mubr.f32.mxu0 0.0
      %1192 = vmatmul.mubr.f32.gmra.mxu0 %v1125
      %v1193 = vpop.f32.mrf.mxu0
      %v1194 = vadd.f32 0.0, %v1193
      %v1195 = vpop.f32.mrf.mxu0
      %1196 = vdwg.mxu0
      %v1197 = vadd.f32 %v1045, %v1194
      %s1198 = scalar_lea.vmem %s2, 56
      %v1199 = vld [vmem:[%s1198] sm:$0x3f]
      %v1201 = vsel %vm285, %v1199, 0
      %1203 = vmatprep.subr.mxu0 0.0
      %1204 = vmatpush1.msra.mxu0 0.0
      %1205 = vmatprep.subr.mxu0 0.0
      %1206 = vmatpush1.msra.mxu0 0.0
      %1207 = vmatprep.subr.mxu0 0.0
      %1208 = vmatpush1.msra.mxu0 0.0
      %1209 = vmatprep.subr.mxu0 0.0
      %1210 = vmatpush1.msra.mxu0 0.0
      %1211 = vmatprep.subr.mxu0 0.0
      %1212 = vmatpush1.msra.mxu0 0.0
      %1213 = vmatprep.subr.mxu0 0.0
      %1214 = vmatpush1.msra.mxu0 0.0
      %1215 = vmatprep.subr.mxu0 0.0
      %1216 = vmatpush1.msra.mxu0 0.0
      %1217 = vmatprep.subr.mxu0 0.0
      %1218 = vmatpush1.msra.mxu0 0.0
      %1219 = vmatprep.subr.mxu0 0.0
      %1220 = vmatpush1.msra.mxu0 0.0
      %1221 = vmatprep.subr.mxu0 0.0
      %1222 = vmatpush1.msra.mxu0 0.0
      %1223 = vmatprep.subr.mxu0 0.0
      %1224 = vmatpush1.msra.mxu0 0.0
      %1225 = vmatprep.subr.mxu0 0.0
      %1226 = vmatpush1.msra.mxu0 0.0
      %1227 = vmatprep.subr.mxu0 0.0
      %1228 = vmatpush1.msra.mxu0 0.0
      %1229 = vmatprep.subr.mxu0 0.0
      %1230 = vmatpush1.msra.mxu0 0.0
      %1231 = vmatprep.subr.mxu0 0.0
      %1232 = vmatpush1.msra.mxu0 0.0
      %1233 = vmatprep.subr.mxu0 0.0
      %1234 = vmatpush1.msra.mxu0 %v368
      %1235 = vmatprep.subr.mxu0 0.0
      %1236 = vmatpush2.msra.mxu0 0.0
      %1237 = vmatprep.subr.mxu0 0.0
      %1238 = vmatpush2.msra.mxu0 0.0
      %1239 = vmatprep.subr.mxu0 0.0
      %1240 = vmatpush2.msra.mxu0 0.0
      %1241 = vmatprep.subr.mxu0 0.0
      %1242 = vmatpush2.msra.mxu0 0.0
      %1243 = vmatprep.subr.mxu0 0.0
      %1244 = vmatpush2.msra.mxu0 0.0
      %1245 = vmatprep.subr.mxu0 0.0
      %1246 = vmatpush2.msra.mxu0 0.0
      %1247 = vmatprep.subr.mxu0 0.0
      %1248 = vmatpush2.msra.mxu0 0.0
      %1249 = vmatprep.subr.mxu0 0.0
      %1250 = vmatpush2.msra.mxu0 0.0
      %1251 = vmatprep.subr.mxu0 0.0
      %1252 = vmatpush2.msra.mxu0 0.0
      %1253 = vmatprep.subr.mxu0 0.0
      %1254 = vmatpush2.msra.mxu0 0.0
      %1255 = vmatprep.subr.mxu0 0.0
      %1256 = vmatpush2.msra.mxu0 0.0
      %1257 = vmatprep.subr.mxu0 0.0
      %1258 = vmatpush2.msra.mxu0 0.0
      %1259 = vmatprep.subr.mxu0 0.0
      %1260 = vmatpush2.msra.mxu0 0.0
      %1261 = vmatprep.subr.mxu0 0.0
      %1262 = vmatpush2.msra.mxu0 0.0
      %1263 = vmatprep.subr.mxu0 0.0
      %1264 = vmatpush2.msra.mxu0 0.0
      %1265 = vmatprep.subr.mxu0 0.0
      %1266 = vmatpush2.msra.mxu0 0.0
      %1267 = vmatprep.mubr.f32.mxu0 0.0
      %1268 = vmatmul.mubr.f32.gmra.mxu0 %v1201
      %v1269 = vpop.f32.mrf.mxu0
      %v1270 = vadd.f32 0.0, %v1269
      %v1271 = vpop.f32.mrf.mxu0
      %1272 = vdwg.mxu0
      %vm1273 = vcmp.eq.s32.totalorder %v280, 5
      %v1274 = vsel %vm1273, 1, 0
      %v1275 = vcvt.s32.f32 %v1274
      %v1277 = vsel %vm273, %v1270, 0
      %1279 = vmatprep.subr.mxu0 0.0
      %1280 = vmatpush1.msra.mxu0 0.0
      %1281 = vmatprep.subr.mxu0 0.0
      %1282 = vmatpush1.msra.mxu0 0.0
      %1283 = vmatprep.subr.mxu0 0.0
      %1284 = vmatpush1.msra.mxu0 0.0
      %1285 = vmatprep.subr.mxu0 0.0
      %1286 = vmatpush1.msra.mxu0 0.0
      %1287 = vmatprep.subr.mxu0 0.0
      %1288 = vmatpush1.msra.mxu0 0.0
      %1289 = vmatprep.subr.mxu0 0.0
      %1290 = vmatpush1.msra.mxu0 0.0
      %1291 = vmatprep.subr.mxu0 0.0
      %1292 = vmatpush1.msra.mxu0 0.0
      %1293 = vmatprep.subr.mxu0 0.0
      %1294 = vmatpush1.msra.mxu0 0.0
      %1295 = vmatprep.subr.mxu0 0.0
      %1296 = vmatpush1.msra.mxu0 0.0
      %1297 = vmatprep.subr.mxu0 0.0
      %1298 = vmatpush1.msra.mxu0 0.0
      %1299 = vmatprep.subr.mxu0 0.0
      %1300 = vmatpush1.msra.mxu0 0.0
      %1301 = vmatprep.subr.mxu0 0.0
      %1302 = vmatpush1.msra.mxu0 0.0
      %1303 = vmatprep.subr.mxu0 0.0
      %1304 = vmatpush1.msra.mxu0 0.0
      %1305 = vmatprep.subr.mxu0 0.0
      %1306 = vmatpush1.msra.mxu0 0.0
      %1307 = vmatprep.subr.mxu0 0.0
      %1308 = vmatpush1.msra.mxu0 0.0
      %1309 = vmatprep.subr.mxu0 0.0
      %1310 = vmatpush1.msra.mxu0 %v1275
      %1311 = vmatprep.subr.mxu0 0.0
      %1312 = vmatpush2.msra.mxu0 0.0
      %1313 = vmatprep.subr.mxu0 0.0
      %1314 = vmatpush2.msra.mxu0 0.0
      %1315 = vmatprep.subr.mxu0 0.0
      %1316 = vmatpush2.msra.mxu0 0.0
      %1317 = vmatprep.subr.mxu0 0.0
      %1318 = vmatpush2.msra.mxu0 0.0
      %1319 = vmatprep.subr.mxu0 0.0
      %1320 = vmatpush2.msra.mxu0 0.0
      %1321 = vmatprep.subr.mxu0 0.0
      %1322 = vmatpush2.msra.mxu0 0.0
      %1323 = vmatprep.subr.mxu0 0.0
      %1324 = vmatpush2.msra.mxu0 0.0
      %1325 = vmatprep.subr.mxu0 0.0
      %1326 = vmatpush2.msra.mxu0 0.0
      %1327 = vmatprep.subr.mxu0 0.0
      %1328 = vmatpush2.msra.mxu0 0.0
      %1329 = vmatprep.subr.mxu0 0.0
      %1330 = vmatpush2.msra.mxu0 0.0
      %1331 = vmatprep.subr.mxu0 0.0
      %1332 = vmatpush2.msra.mxu0 0.0
      %1333 = vmatprep.subr.mxu0 0.0
      %1334 = vmatpush2.msra.mxu0 0.0
      %1335 = vmatprep.subr.mxu0 0.0
      %1336 = vmatpush2.msra.mxu0 0.0
      %1337 = vmatprep.subr.mxu0 0.0
      %1338 = vmatpush2.msra.mxu0 0.0
      %1339 = vmatprep.subr.mxu0 0.0
      %1340 = vmatpush2.msra.mxu0 0.0
      %1341 = vmatprep.subr.mxu0 0.0
      %1342 = vmatpush2.msra.mxu0 0.0
      %1343 = vmatprep.mubr.f32.mxu0 0.0
      %1344 = vmatmul.mubr.f32.gmra.mxu0 %v1277
      %v1345 = vpop.f32.mrf.mxu0
      %v1346 = vadd.f32 0.0, %v1345
      %v1347 = vpop.f32.mrf.mxu0
      %1348 = vdwg.mxu0
      %v1349 = vadd.f32 %v1197, %v1346
      %s1350 = scalar_lea.vmem %s2, 64
      %v1351 = vld [vmem:[%s1350] sm:$0x3f]
      %v1353 = vsel %vm285, %v1351, 0
      %1355 = vmatprep.subr.mxu0 0.0
      %1356 = vmatpush1.msra.mxu0 0.0
      %1357 = vmatprep.subr.mxu0 0.0
      %1358 = vmatpush1.msra.mxu0 0.0
      %1359 = vmatprep.subr.mxu0 0.0
      %1360 = vmatpush1.msra.mxu0 0.0
      %1361 = vmatprep.subr.mxu0 0.0
      %1362 = vmatpush1.msra.mxu0 0.0
      %1363 = vmatprep.subr.mxu0 0.0
      %1364 = vmatpush1.msra.mxu0 0.0
      %1365 = vmatprep.subr.mxu0 0.0
      %1366 = vmatpush1.msra.mxu0 0.0
      %1367 = vmatprep.subr.mxu0 0.0
      %1368 = vmatpush1.msra.mxu0 0.0
      %1369 = vmatprep.subr.mxu0 0.0
      %1370 = vmatpush1.msra.mxu0 0.0
      %1371 = vmatprep.subr.mxu0 0.0
      %1372 = vmatpush1.msra.mxu0 0.0
      %1373 = vmatprep.subr.mxu0 0.0
      %1374 = vmatpush1.msra.mxu0 0.0
      %1375 = vmatprep.subr.mxu0 0.0
      %1376 = vmatpush1.msra.mxu0 0.0
      %1377 = vmatprep.subr.mxu0 0.0
      %1378 = vmatpush1.msra.mxu0 0.0
      %1379 = vmatprep.subr.mxu0 0.0
      %1380 = vmatpush1.msra.mxu0 0.0
      %1381 = vmatprep.subr.mxu0 0.0
      %1382 = vmatpush1.msra.mxu0 0.0
      %1383 = vmatprep.subr.mxu0 0.0
      %1384 = vmatpush1.msra.mxu0 0.0
      %1385 = vmatprep.subr.mxu0 0.0
      %1386 = vmatpush1.msra.mxu0 %v368
      %1387 = vmatprep.subr.mxu0 0.0
      %1388 = vmatpush2.msra.mxu0 0.0
      %1389 = vmatprep.subr.mxu0 0.0
      %1390 = vmatpush2.msra.mxu0 0.0
      %1391 = vmatprep.subr.mxu0 0.0
      %1392 = vmatpush2.msra.mxu0 0.0
      %1393 = vmatprep.subr.mxu0 0.0
      %1394 = vmatpush2.msra.mxu0 0.0
      %1395 = vmatprep.subr.mxu0 0.0
      %1396 = vmatpush2.msra.mxu0 0.0
      %1397 = vmatprep.subr.mxu0 0.0
      %1398 = vmatpush2.msra.mxu0 0.0
      %1399 = vmatprep.subr.mxu0 0.0
      %1400 = vmatpush2.msra.mxu0 0.0
      %1401 = vmatprep.subr.mxu0 0.0
      %1402 = vmatpush2.msra.mxu0 0.0
      %1403 = vmatprep.subr.mxu0 0.0
      %1404 = vmatpush2.msra.mxu0 0.0
      %1405 = vmatprep.subr.mxu0 0.0
      %1406 = vmatpush2.msra.mxu0 0.0
      %1407 = vmatprep.subr.mxu0 0.0
      %1408 = vmatpush2.msra.mxu0 0.0
      %1409 = vmatprep.subr.mxu0 0.0
      %1410 = vmatpush2.msra.mxu0 0.0
      %1411 = vmatprep.subr.mxu0 0.0
      %1412 = vmatpush2.msra.mxu0 0.0
      %1413 = vmatprep.subr.mxu0 0.0
      %1414 = vmatpush2.msra.mxu0 0.0
      %1415 = vmatprep.subr.mxu0 0.0
      %1416 = vmatpush2.msra.mxu0 0.0
      %1417 = vmatprep.subr.mxu0 0.0
      %1418 = vmatpush2.msra.mxu0 0.0
      %1419 = vmatprep.mubr.f32.mxu0 0.0
      %1420 = vmatmul.mubr.f32.gmra.mxu0 %v1353
      %v1421 = vpop.f32.mrf.mxu0
      %v1422 = vadd.f32 0.0, %v1421
      %v1423 = vpop.f32.mrf.mxu0
      %1424 = vdwg.mxu0
      %vm1425 = vcmp.eq.s32.totalorder %v280, 6
      %v1426 = vsel %vm1425, 1, 0
      %v1427 = vcvt.s32.f32 %v1426
      %v1429 = vsel %vm273, %v1422, 0
      %1431 = vmatprep.subr.mxu0 0.0
      %1432 = vmatpush1.msra.mxu0 0.0
      %1433 = vmatprep.subr.mxu0 0.0
      %1434 = vmatpush1.msra.mxu0 0.0
      %1435 = vmatprep.subr.mxu0 0.0
      %1436 = vmatpush1.msra.mxu0 0.0
      %1437 = vmatprep.subr.mxu0 0.0
      %1438 = vmatpush1.msra.mxu0 0.0
      %1439 = vmatprep.subr.mxu0 0.0
      %1440 = vmatpush1.msra.mxu0 0.0
      %1441 = vmatprep.subr.mxu0 0.0
      %1442 = vmatpush1.msra.mxu0 0.0
      %1443 = vmatprep.subr.mxu0 0.0
      %1444 = vmatpush1.msra.mxu0 0.0
      %1445 = vmatprep.subr.mxu0 0.0
      %1446 = vmatpush1.msra.mxu0 0.0
      %1447 = vmatprep.subr.mxu0 0.0
      %1448 = vmatpush1.msra.mxu0 0.0
      %1449 = vmatprep.subr.mxu0 0.0
      %1450 = vmatpush1.msra.mxu0 0.0
      %1451 = vmatprep.subr.mxu0 0.0
      %1452 = vmatpush1.msra.mxu0 0.0
      %1453 = vmatprep.subr.mxu0 0.0
      %1454 = vmatpush1.msra.mxu0 0.0
      %1455 = vmatprep.subr.mxu0 0.0
      %1456 = vmatpush1.msra.mxu0 0.0
      %1457 = vmatprep.subr.mxu0 0.0
      %1458 = vmatpush1.msra.mxu0 0.0
      %1459 = vmatprep.subr.mxu0 0.0
      %1460 = vmatpush1.msra.mxu0 0.0
      %1461 = vmatprep.subr.mxu0 0.0
      %1462 = vmatpush1.msra.mxu0 %v1427
      %1463 = vmatprep.subr.mxu0 0.0
      %1464 = vmatpush2.msra.mxu0 0.0
      %1465 = vmatprep.subr.mxu0 0.0
      %1466 = vmatpush2.msra.mxu0 0.0
      %1467 = vmatprep.subr.mxu0 0.0
      %1468 = vmatpush2.msra.mxu0 0.0
      %1469 = vmatprep.subr.mxu0 0.0
      %1470 = vmatpush2.msra.mxu0 0.0
      %1471 = vmatprep.subr.mxu0 0.0
      %1472 = vmatpush2.msra.mxu0 0.0
      %1473 = vmatprep.subr.mxu0 0.0
      %1474 = vmatpush2.msra.mxu0 0.0
      %1475 = vmatprep.subr.mxu0 0.0
      %1476 = vmatpush2.msra.mxu0 0.0
      %1477 = vmatprep.subr.mxu0 0.0
      %1478 = vmatpush2.msra.mxu0 0.0
      %1479 = vmatprep.subr.mxu0 0.0
      %1480 = vmatpush2.msra.mxu0 0.0
      %1481 = vmatprep.subr.mxu0 0.0
      %1482 = vmatpush2.msra.mxu0 0.0
      %1483 = vmatprep.subr.mxu0 0.0
      %1484 = vmatpush2.msra.mxu0 0.0
      %1485 = vmatprep.subr.mxu0 0.0
      %1486 = vmatpush2.msra.mxu0 0.0
      %1487 = vmatprep.subr.mxu0 0.0
      %1488 = vmatpush2.msra.mxu0 0.0
      %1489 = vmatprep.subr.mxu0 0.0
      %1490 = vmatpush2.msra.mxu0 0.0
      %1491 = vmatprep.subr.mxu0 0.0
      %1492 = vmatpush2.msra.mxu0 0.0
      %1493 = vmatprep.subr.mxu0 0.0
      %1494 = vmatpush2.msra.mxu0 0.0
      %1495 = vmatprep.mubr.f32.mxu0 0.0
      %1496 = vmatmul.mubr.f32.gmra.mxu0 %v1429
      %v1497 = vpop.f32.mrf.mxu0
      %v1498 = vadd.f32 0.0, %v1497
      %v1499 = vpop.f32.mrf.mxu0
      %1500 = vdwg.mxu0
      %v1501 = vadd.f32 %v1349, %v1498
      %s1502 = scalar_lea.vmem %s2, 72
      %v1503 = vld [vmem:[%s1502] sm:$0x3f]
      %v1505 = vsel %vm285, %v1503, 0
      %1507 = vmatprep.subr.mxu0 0.0
      %1508 = vmatpush1.msra.mxu0 0.0
      %1509 = vmatprep.subr.mxu0 0.0
      %1510 = vmatpush1.msra.mxu0 0.0
      %1511 = vmatprep.subr.mxu0 0.0
      %1512 = vmatpush1.msra.mxu0 0.0
      %1513 = vmatprep.subr.mxu0 0.0
      %1514 = vmatpush1.msra.mxu0 0.0
      %1515 = vmatprep.subr.mxu0 0.0
      %1516 = vmatpush1.msra.mxu0 0.0
      %1517 = vmatprep.subr.mxu0 0.0
      %1518 = vmatpush1.msra.mxu0 0.0
      %1519 = vmatprep.subr.mxu0 0.0
      %1520 = vmatpush1.msra.mxu0 0.0
      %1521 = vmatprep.subr.mxu0 0.0
      %1522 = vmatpush1.msra.mxu0 0.0
      %1523 = vmatprep.subr.mxu0 0.0
      %1524 = vmatpush1.msra.mxu0 0.0
      %1525 = vmatprep.subr.mxu0 0.0
      %1526 = vmatpush1.msra.mxu0 0.0
      %1527 = vmatprep.subr.mxu0 0.0
      %1528 = vmatpush1.msra.mxu0 0.0
      %1529 = vmatprep.subr.mxu0 0.0
      %1530 = vmatpush1.msra.mxu0 0.0
      %1531 = vmatprep.subr.mxu0 0.0
      %1532 = vmatpush1.msra.mxu0 0.0
      %1533 = vmatprep.subr.mxu0 0.0
      %1534 = vmatpush1.msra.mxu0 0.0
      %1535 = vmatprep.subr.mxu0 0.0
      %1536 = vmatpush1.msra.mxu0 0.0
      %1537 = vmatprep.subr.mxu0 0.0
      %1538 = vmatpush1.msra.mxu0 %v368
      %1539 = vmatprep.subr.mxu0 0.0
      %1540 = vmatpush2.msra.mxu0 0.0
      %1541 = vmatprep.subr.mxu0 0.0
      %1542 = vmatpush2.msra.mxu0 0.0
      %1543 = vmatprep.subr.mxu0 0.0
      %1544 = vmatpush2.msra.mxu0 0.0
      %1545 = vmatprep.subr.mxu0 0.0
      %1546 = vmatpush2.msra.mxu0 0.0
      %1547 = vmatprep.subr.mxu0 0.0
      %1548 = vmatpush2.msra.mxu0 0.0
      %1549 = vmatprep.subr.mxu0 0.0
      %1550 = vmatpush2.msra.mxu0 0.0
      %1551 = vmatprep.subr.mxu0 0.0
      %1552 = vmatpush2.msra.mxu0 0.0
      %1553 = vmatprep.subr.mxu0 0.0
      %1554 = vmatpush2.msra.mxu0 0.0
      %1555 = vmatprep.subr.mxu0 0.0
      %1556 = vmatpush2.msra.mxu0 0.0
      %1557 = vmatprep.subr.mxu0 0.0
      %1558 = vmatpush2.msra.mxu0 0.0
      %1559 = vmatprep.subr.mxu0 0.0
      %1560 = vmatpush2.msra.mxu0 0.0
      %1561 = vmatprep.subr.mxu0 0.0
      %1562 = vmatpush2.msra.mxu0 0.0
      %1563 = vmatprep.subr.mxu0 0.0
      %1564 = vmatpush2.msra.mxu0 0.0
      %1565 = vmatprep.subr.mxu0 0.0
      %1566 = vmatpush2.msra.mxu0 0.0
      %1567 = vmatprep.subr.mxu0 0.0
      %1568 = vmatpush2.msra.mxu0 0.0
      %1569 = vmatprep.subr.mxu0 0.0
      %1570 = vmatpush2.msra.mxu0 0.0
      %1571 = vmatprep.mubr.f32.mxu0 0.0
      %1572 = vmatmul.mubr.f32.gmra.mxu0 %v1505
      %v1573 = vpop.f32.mrf.mxu0
      %v1574 = vadd.f32 0.0, %v1573
      %v1575 = vpop.f32.mrf.mxu0
      %1576 = vdwg.mxu0
      %vm1577 = vcmp.eq.s32.totalorder %v280, 7
      %v1578 = vsel %vm1577, 1, 0
      %v1579 = vcvt.s32.f32 %v1578
      %v1581 = vsel %vm273, %v1574, 0
      %1583 = vmatprep.subr.mxu0 0.0
      %1584 = vmatpush1.msra.mxu0 0.0
      %1585 = vmatprep.subr.mxu0 0.0
      %1586 = vmatpush1.msra.mxu0 0.0
      %1587 = vmatprep.subr.mxu0 0.0
      %1588 = vmatpush1.msra.mxu0 0.0
      %1589 = vmatprep.subr.mxu0 0.0
      %1590 = vmatpush1.msra.mxu0 0.0
      %1591 = vmatprep.subr.mxu0 0.0
      %1592 = vmatpush1.msra.mxu0 0.0
      %1593 = vmatprep.subr.mxu0 0.0
      %1594 = vmatpush1.msra.mxu0 0.0
      %1595 = vmatprep.subr.mxu0 0.0
      %1596 = vmatpush1.msra.mxu0 0.0
      %1597 = vmatprep.subr.mxu0 0.0
      %1598 = vmatpush1.msra.mxu0 0.0
      %1599 = vmatprep.subr.mxu0 0.0
      %1600 = vmatpush1.msra.mxu0 0.0
      %1601 = vmatprep.subr.mxu0 0.0
      %1602 = vmatpush1.msra.mxu0 0.0
      %1603 = vmatprep.subr.mxu0 0.0
      %1604 = vmatpush1.msra.mxu0 0.0
      %1605 = vmatprep.subr.mxu0 0.0
      %1606 = vmatpush1.msra.mxu0 0.0
      %1607 = vmatprep.subr.mxu0 0.0
      %1608 = vmatpush1.msra.mxu0 0.0
      %1609 = vmatprep.subr.mxu0 0.0
      %1610 = vmatpush1.msra.mxu0 0.0
      %1611 = vmatprep.subr.mxu0 0.0
      %1612 = vmatpush1.msra.mxu0 0.0
      %1613 = vmatprep.subr.mxu0 0.0
      %1614 = vmatpush1.msra.mxu0 %v1579
      %1615 = vmatprep.subr.mxu0 0.0
      %1616 = vmatpush2.msra.mxu0 0.0
      %1617 = vmatprep.subr.mxu0 0.0
      %1618 = vmatpush2.msra.mxu0 0.0
      %1619 = vmatprep.subr.mxu0 0.0
      %1620 = vmatpush2.msra.mxu0 0.0
      %1621 = vmatprep.subr.mxu0 0.0
      %1622 = vmatpush2.msra.mxu0 0.0
      %1623 = vmatprep.subr.mxu0 0.0
      %1624 = vmatpush2.msra.mxu0 0.0
      %1625 = vmatprep.subr.mxu0 0.0
      %1626 = vmatpush2.msra.mxu0 0.0
      %1627 = vmatprep.subr.mxu0 0.0
      %1628 = vmatpush2.msra.mxu0 0.0
      %1629 = vmatprep.subr.mxu0 0.0
      %1630 = vmatpush2.msra.mxu0 0.0
      %1631 = vmatprep.subr.mxu0 0.0
      %1632 = vmatpush2.msra.mxu0 0.0
      %1633 = vmatprep.subr.mxu0 0.0
      %1634 = vmatpush2.msra.mxu0 0.0
      %1635 = vmatprep.subr.mxu0 0.0
      %1636 = vmatpush2.msra.mxu0 0.0
      %1637 = vmatprep.subr.mxu0 0.0
      %1638 = vmatpush2.msra.mxu0 0.0
      %1639 = vmatprep.subr.mxu0 0.0
      %1640 = vmatpush2.msra.mxu0 0.0
      %1641 = vmatprep.subr.mxu0 0.0
      %1642 = vmatpush2.msra.mxu0 0.0
      %1643 = vmatprep.subr.mxu0 0.0
      %1644 = vmatpush2.msra.mxu0 0.0
      %1645 = vmatprep.subr.mxu0 0.0
      %1646 = vmatpush2.msra.mxu0 0.0
      %1647 = vmatprep.mubr.f32.mxu0 0.0
      %1648 = vmatmul.mubr.f32.gmra.mxu0 %v1581
      %v1649 = vpop.f32.mrf.mxu0
      %v1650 = vadd.f32 0.0, %v1649
      %v1651 = vpop.f32.mrf.mxu0
      %1652 = vdwg.mxu0
      %v1653 = vadd.f32 %v1501, %v1650
      %s1654 = scalar_lea.vmem %s2, 80
      %v1655 = vld [vmem:[%s1654] sm:$0x3f]
      %v1657 = vsel %vm285, %v1655, 0
      %1659 = vmatprep.subr.mxu0 0.0
      %1660 = vmatpush1.msra.mxu0 0.0
      %1661 = vmatprep.subr.mxu0 0.0
      %1662 = vmatpush1.msra.mxu0 0.0
      %1663 = vmatprep.subr.mxu0 0.0
      %1664 = vmatpush1.msra.mxu0 0.0
      %1665 = vmatprep.subr.mxu0 0.0
      %1666 = vmatpush1.msra.mxu0 0.0
      %1667 = vmatprep.subr.mxu0 0.0
      %1668 = vmatpush1.msra.mxu0 0.0
      %1669 = vmatprep.subr.mxu0 0.0
      %1670 = vmatpush1.msra.mxu0 0.0
      %1671 = vmatprep.subr.mxu0 0.0
      %1672 = vmatpush1.msra.mxu0 0.0
      %1673 = vmatprep.subr.mxu0 0.0
      %1674 = vmatpush1.msra.mxu0 0.0
      %1675 = vmatprep.subr.mxu0 0.0
      %1676 = vmatpush1.msra.mxu0 0.0
      %1677 = vmatprep.subr.mxu0 0.0
      %1678 = vmatpush1.msra.mxu0 0.0
      %1679 = vmatprep.subr.mxu0 0.0
      %1680 = vmatpush1.msra.mxu0 0.0
      %1681 = vmatprep.subr.mxu0 0.0
      %1682 = vmatpush1.msra.mxu0 0.0
      %1683 = vmatprep.subr.mxu0 0.0
      %1684 = vmatpush1.msra.mxu0 0.0
      %1685 = vmatprep.subr.mxu0 0.0
      %1686 = vmatpush1.msra.mxu0 0.0
      %1687 = vmatprep.subr.mxu0 0.0
      %1688 = vmatpush1.msra.mxu0 0.0
      %1689 = vmatprep.subr.mxu0 0.0
      %1690 = vmatpush1.msra.mxu0 %v368
      %1691 = vmatprep.subr.mxu0 0.0
      %1692 = vmatpush2.msra.mxu0 0.0
      %1693 = vmatprep.subr.mxu0 0.0
      %1694 = vmatpush2.msra.mxu0 0.0
      %1695 = vmatprep.subr.mxu0 0.0
      %1696 = vmatpush2.msra.mxu0 0.0
      %1697 = vmatprep.subr.mxu0 0.0
      %1698 = vmatpush2.msra.mxu0 0.0
      %1699 = vmatprep.subr.mxu0 0.0
      %1700 = vmatpush2.msra.mxu0 0.0
      %1701 = vmatprep.subr.mxu0 0.0
      %1702 = vmatpush2.msra.mxu0 0.0
      %1703 = vmatprep.subr.mxu0 0.0
      %1704 = vmatpush2.msra.mxu0 0.0
      %1705 = vmatprep.subr.mxu0 0.0
      %1706 = vmatpush2.msra.mxu0 0.0
      %1707 = vmatprep.subr.mxu0 0.0
      %1708 = vmatpush2.msra.mxu0 0.0
      %1709 = vmatprep.subr.mxu0 0.0
      %1710 = vmatpush2.msra.mxu0 0.0
      %1711 = vmatprep.subr.mxu0 0.0
      %1712 = vmatpush2.msra.mxu0 0.0
      %1713 = vmatprep.subr.mxu0 0.0
      %1714 = vmatpush2.msra.mxu0 0.0
      %1715 = vmatprep.subr.mxu0 0.0
      %1716 = vmatpush2.msra.mxu0 0.0
      %1717 = vmatprep.subr.mxu0 0.0
      %1718 = vmatpush2.msra.mxu0 0.0
      %1719 = vmatprep.subr.mxu0 0.0
      %1720 = vmatpush2.msra.mxu0 0.0
      %1721 = vmatprep.subr.mxu0 0.0
      %1722 = vmatpush2.msra.mxu0 0.0
      %1723 = vmatprep.mubr.f32.mxu0 0.0
      %1724 = vmatmul.mubr.f32.gmra.mxu0 %v1657
      %v1725 = vpop.f32.mrf.mxu0
      %v1726 = vadd.f32 0.0, %v1725
      %v1727 = vpop.f32.mrf.mxu0
      %1728 = vdwg.mxu0
      %vm1729 = vcmp.eq.s32.totalorder %v280, 8
      %v1730 = vsel %vm1729, 1, 0
      %v1731 = vcvt.s32.f32 %v1730
      %v1733 = vsel %vm273, %v1726, 0
      %1735 = vmatprep.subr.mxu0 0.0
      %1736 = vmatpush1.msra.mxu0 0.0
      %1737 = vmatprep.subr.mxu0 0.0
      %1738 = vmatpush1.msra.mxu0 0.0
      %1739 = vmatprep.subr.mxu0 0.0
      %1740 = vmatpush1.msra.mxu0 0.0
      %1741 = vmatprep.subr.mxu0 0.0
      %1742 = vmatpush1.msra.mxu0 0.0
      %1743 = vmatprep.subr.mxu0 0.0
      %1744 = vmatpush1.msra.mxu0 0.0
      %1745 = vmatprep.subr.mxu0 0.0
      %1746 = vmatpush1.msra.mxu0 0.0
      %1747 = vmatprep.subr.mxu0 0.0
      %1748 = vmatpush1.msra.mxu0 0.0
      %1749 = vmatprep.subr.mxu0 0.0
      %1750 = vmatpush1.msra.mxu0 0.0
      %1751 = vmatprep.subr.mxu0 0.0
      %1752 = vmatpush1.msra.mxu0 0.0
      %1753 = vmatprep.subr.mxu0 0.0
      %1754 = vmatpush1.msra.mxu0 0.0
      %1755 = vmatprep.subr.mxu0 0.0
      %1756 = vmatpush1.msra.mxu0 0.0
      %1757 = vmatprep.subr.mxu0 0.0
      %1758 = vmatpush1.msra.mxu0 0.0
      %1759 = vmatprep.subr.mxu0 0.0
      %1760 = vmatpush1.msra.mxu0 0.0
      %1761 = vmatprep.subr.mxu0 0.0
      %1762 = vmatpush1.msra.mxu0 0.0
      %1763 = vmatprep.subr.mxu0 0.0
      %1764 = vmatpush1.msra.mxu0 0.0
      %1765 = vmatprep.subr.mxu0 0.0
      %1766 = vmatpush1.msra.mxu0 %v1731
      %1767 = vmatprep.subr.mxu0 0.0
      %1768 = vmatpush2.msra.mxu0 0.0
      %1769 = vmatprep.subr.mxu0 0.0
      %1770 = vmatpush2.msra.mxu0 0.0
      %1771 = vmatprep.subr.mxu0 0.0
      %1772 = vmatpush2.msra.mxu0 0.0
      %1773 = vmatprep.subr.mxu0 0.0
      %1774 = vmatpush2.msra.mxu0 0.0
      %1775 = vmatprep.subr.mxu0 0.0
      %1776 = vmatpush2.msra.mxu0 0.0
      %1777 = vmatprep.subr.mxu0 0.0
      %1778 = vmatpush2.msra.mxu0 0.0
      %1779 = vmatprep.subr.mxu0 0.0
      %1780 = vmatpush2.msra.mxu0 0.0
      %1781 = vmatprep.subr.mxu0 0.0
      %1782 = vmatpush2.msra.mxu0 0.0
      %1783 = vmatprep.subr.mxu0 0.0
      %1784 = vmatpush2.msra.mxu0 0.0
      %1785 = vmatprep.subr.mxu0 0.0
      %1786 = vmatpush2.msra.mxu0 0.0
      %1787 = vmatprep.subr.mxu0 0.0
      %1788 = vmatpush2.msra.mxu0 0.0
      %1789 = vmatprep.subr.mxu0 0.0
      %1790 = vmatpush2.msra.mxu0 0.0
      %1791 = vmatprep.subr.mxu0 0.0
      %1792 = vmatpush2.msra.mxu0 0.0
      %1793 = vmatprep.subr.mxu0 0.0
      %1794 = vmatpush2.msra.mxu0 0.0
      %1795 = vmatprep.subr.mxu0 0.0
      %1796 = vmatpush2.msra.mxu0 0.0
      %1797 = vmatprep.subr.mxu0 0.0
      %1798 = vmatpush2.msra.mxu0 0.0
      %1799 = vmatprep.mubr.f32.mxu0 0.0
      %1800 = vmatmul.mubr.f32.gmra.mxu0 %v1733
      %v1801 = vpop.f32.mrf.mxu0
      %v1802 = vadd.f32 0.0, %v1801
      %v1803 = vpop.f32.mrf.mxu0
      %1804 = vdwg.mxu0
      %v1805 = vadd.f32 %v1653, %v1802
      %s1806 = scalar_lea.vmem %s2, 88
      %v1807 = vld [vmem:[%s1806] sm:$0x3f]
      %v1809 = vsel %vm285, %v1807, 0
      %1811 = vmatprep.subr.mxu0 0.0
      %1812 = vmatpush1.msra.mxu0 0.0
      %1813 = vmatprep.subr.mxu0 0.0
      %1814 = vmatpush1.msra.mxu0 0.0
      %1815 = vmatprep.subr.mxu0 0.0
      %1816 = vmatpush1.msra.mxu0 0.0
      %1817 = vmatprep.subr.mxu0 0.0
      %1818 = vmatpush1.msra.mxu0 0.0
      %1819 = vmatprep.subr.mxu0 0.0
      %1820 = vmatpush1.msra.mxu0 0.0
      %1821 = vmatprep.subr.mxu0 0.0
      %1822 = vmatpush1.msra.mxu0 0.0
      %1823 = vmatprep.subr.mxu0 0.0
      %1824 = vmatpush1.msra.mxu0 0.0
      %1825 = vmatprep.subr.mxu0 0.0
      %1826 = vmatpush1.msra.mxu0 0.0
      %1827 = vmatprep.subr.mxu0 0.0
      %1828 = vmatpush1.msra.mxu0 0.0
      %1829 = vmatprep.subr.mxu0 0.0
      %1830 = vmatpush1.msra.mxu0 0.0
      %1831 = vmatprep.subr.mxu0 0.0
      %1832 = vmatpush1.msra.mxu0 0.0
      %1833 = vmatprep.subr.mxu0 0.0
      %1834 = vmatpush1.msra.mxu0 0.0
      %1835 = vmatprep.subr.mxu0 0.0
      %1836 = vmatpush1.msra.mxu0 0.0
      %1837 = vmatprep.subr.mxu0 0.0
      %1838 = vmatpush1.msra.mxu0 0.0
      %1839 = vmatprep.subr.mxu0 0.0
      %1840 = vmatpush1.msra.mxu0 0.0
      %1841 = vmatprep.subr.mxu0 0.0
      %1842 = vmatpush1.msra.mxu0 %v368
      %1843 = vmatprep.subr.mxu0 0.0
      %1844 = vmatpush2.msra.mxu0 0.0
      %1845 = vmatprep.subr.mxu0 0.0
      %1846 = vmatpush2.msra.mxu0 0.0
      %1847 = vmatprep.subr.mxu0 0.0
      %1848 = vmatpush2.msra.mxu0 0.0
      %1849 = vmatprep.subr.mxu0 0.0
      %1850 = vmatpush2.msra.mxu0 0.0
      %1851 = vmatprep.subr.mxu0 0.0
      %1852 = vmatpush2.msra.mxu0 0.0
      %1853 = vmatprep.subr.mxu0 0.0
      %1854 = vmatpush2.msra.mxu0 0.0
      %1855 = vmatprep.subr.mxu0 0.0
      %1856 = vmatpush2.msra.mxu0 0.0
      %1857 = vmatprep.subr.mxu0 0.0
      %1858 = vmatpush2.msra.mxu0 0.0
      %1859 = vmatprep.subr.mxu0 0.0
      %1860 = vmatpush2.msra.mxu0 0.0
      %1861 = vmatprep.subr.mxu0 0.0
      %1862 = vmatpush2.msra.mxu0 0.0
      %1863 = vmatprep.subr.mxu0 0.0
      %1864 = vmatpush2.msra.mxu0 0.0
      %1865 = vmatprep.subr.mxu0 0.0
      %1866 = vmatpush2.msra.mxu0 0.0
      %1867 = vmatprep.subr.mxu0 0.0
      %1868 = vmatpush2.msra.mxu0 0.0
      %1869 = vmatprep.subr.mxu0 0.0
      %1870 = vmatpush2.msra.mxu0 0.0
      %1871 = vmatprep.subr.mxu0 0.0
      %1872 = vmatpush2.msra.mxu0 0.0
      %1873 = vmatprep.subr.mxu0 0.0
      %1874 = vmatpush2.msra.mxu0 0.0
      %1875 = vmatprep.mubr.f32.mxu0 0.0
      %1876 = vmatmul.mubr.f32.gmra.mxu0 %v1809
      %v1877 = vpop.f32.mrf.mxu0
      %v1878 = vadd.f32 0.0, %v1877
      %v1879 = vpop.f32.mrf.mxu0
      %1880 = vdwg.mxu0
      %vm1881 = vcmp.eq.s32.totalorder %v280, 9
      %v1882 = vsel %vm1881, 1, 0
      %v1883 = vcvt.s32.f32 %v1882
      %v1885 = vsel %vm273, %v1878, 0
      %1887 = vmatprep.subr.mxu0 0.0
      %1888 = vmatpush1.msra.mxu0 0.0
      %1889 = vmatprep.subr.mxu0 0.0
      %1890 = vmatpush1.msra.mxu0 0.0
      %1891 = vmatprep.subr.mxu0 0.0
      %1892 = vmatpush1.msra.mxu0 0.0
      %1893 = vmatprep.subr.mxu0 0.0
      %1894 = vmatpush1.msra.mxu0 0.0
      %1895 = vmatprep.subr.mxu0 0.0
      %1896 = vmatpush1.msra.mxu0 0.0
      %1897 = vmatprep.subr.mxu0 0.0
      %1898 = vmatpush1.msra.mxu0 0.0
      %1899 = vmatprep.subr.mxu0 0.0
      %1900 = vmatpush1.msra.mxu0 0.0
      %1901 = vmatprep.subr.mxu0 0.0
      %1902 = vmatpush1.msra.mxu0 0.0
      %1903 = vmatprep.subr.mxu0 0.0
      %1904 = vmatpush1.msra.mxu0 0.0
      %1905 = vmatprep.subr.mxu0 0.0
      %1906 = vmatpush1.msra.mxu0 0.0
      %1907 = vmatprep.subr.mxu0 0.0
      %1908 = vmatpush1.msra.mxu0 0.0
      %1909 = vmatprep.subr.mxu0 0.0
      %1910 = vmatpush1.msra.mxu0 0.0
      %1911 = vmatprep.subr.mxu0 0.0
      %1912 = vmatpush1.msra.mxu0 0.0
      %1913 = vmatprep.subr.mxu0 0.0
      %1914 = vmatpush1.msra.mxu0 0.0
      %1915 = vmatprep.subr.mxu0 0.0
      %1916 = vmatpush1.msra.mxu0 0.0
      %1917 = vmatprep.subr.mxu0 0.0
      %1918 = vmatpush1.msra.mxu0 %v1883
      %1919 = vmatprep.subr.mxu0 0.0
      %1920 = vmatpush2.msra.mxu0 0.0
      %1921 = vmatprep.subr.mxu0 0.0
      %1922 = vmatpush2.msra.mxu0 0.0
      %1923 = vmatprep.subr.mxu0 0.0
      %1924 = vmatpush2.msra.mxu0 0.0
      %1925 = vmatprep.subr.mxu0 0.0
      %1926 = vmatpush2.msra.mxu0 0.0
      %1927 = vmatprep.subr.mxu0 0.0
      %1928 = vmatpush2.msra.mxu0 0.0
      %1929 = vmatprep.subr.mxu0 0.0
      %1930 = vmatpush2.msra.mxu0 0.0
      %1931 = vmatprep.subr.mxu0 0.0
      %1932 = vmatpush2.msra.mxu0 0.0
      %1933 = vmatprep.subr.mxu0 0.0
      %1934 = vmatpush2.msra.mxu0 0.0
      %1935 = vmatprep.subr.mxu0 0.0
      %1936 = vmatpush2.msra.mxu0 0.0
      %1937 = vmatprep.subr.mxu0 0.0
      %1938 = vmatpush2.msra.mxu0 0.0
      %1939 = vmatprep.subr.mxu0 0.0
      %1940 = vmatpush2.msra.mxu0 0.0
      %1941 = vmatprep.subr.mxu0 0.0
      %1942 = vmatpush2.msra.mxu0 0.0
      %1943 = vmatprep.subr.mxu0 0.0
      %1944 = vmatpush2.msra.mxu0 0.0
      %1945 = vmatprep.subr.mxu0 0.0
      %1946 = vmatpush2.msra.mxu0 0.0
      %1947 = vmatprep.subr.mxu0 0.0
      %1948 = vmatpush2.msra.mxu0 0.0
      %1949 = vmatprep.subr.mxu0 0.0
      %1950 = vmatpush2.msra.mxu0 0.0
      %1951 = vmatprep.mubr.f32.mxu0 0.0
      %1952 = vmatmul.mubr.f32.gmra.mxu0 %v1885
      %v1953 = vpop.f32.mrf.mxu0
      %v1954 = vadd.f32 0.0, %v1953
      %v1955 = vpop.f32.mrf.mxu0
      %1956 = vdwg.mxu0
      %v1957 = vadd.f32 %v1805, %v1954
      %s1958 = scalar_lea.vmem %s2, 96
      %v1959 = vld [vmem:[%s1958] sm:$0x3f]
      %v1961 = vsel %vm285, %v1959, 0
      %1963 = vmatprep.subr.mxu0 0.0
      %1964 = vmatpush1.msra.mxu0 0.0
      %1965 = vmatprep.subr.mxu0 0.0
      %1966 = vmatpush1.msra.mxu0 0.0
      %1967 = vmatprep.subr.mxu0 0.0
      %1968 = vmatpush1.msra.mxu0 0.0
      %1969 = vmatprep.subr.mxu0 0.0
      %1970 = vmatpush1.msra.mxu0 0.0
      %1971 = vmatprep.subr.mxu0 0.0
      %1972 = vmatpush1.msra.mxu0 0.0
      %1973 = vmatprep.subr.mxu0 0.0
      %1974 = vmatpush1.msra.mxu0 0.0
      %1975 = vmatprep.subr.mxu0 0.0
      %1976 = vmatpush1.msra.mxu0 0.0
      %1977 = vmatprep.subr.mxu0 0.0
      %1978 = vmatpush1.msra.mxu0 0.0
      %1979 = vmatprep.subr.mxu0 0.0
      %1980 = vmatpush1.msra.mxu0 0.0
      %1981 = vmatprep.subr.mxu0 0.0
      %1982 = vmatpush1.msra.mxu0 0.0
      %1983 = vmatprep.subr.mxu0 0.0
      %1984 = vmatpush1.msra.mxu0 0.0
      %1985 = vmatprep.subr.mxu0 0.0
      %1986 = vmatpush1.msra.mxu0 0.0
      %1987 = vmatprep.subr.mxu0 0.0
      %1988 = vmatpush1.msra.mxu0 0.0
      %1989 = vmatprep.subr.mxu0 0.0
      %1990 = vmatpush1.msra.mxu0 0.0
      %1991 = vmatprep.subr.mxu0 0.0
      %1992 = vmatpush1.msra.mxu0 0.0
      %1993 = vmatprep.subr.mxu0 0.0
      %1994 = vmatpush1.msra.mxu0 %v368
      %1995 = vmatprep.subr.mxu0 0.0
      %1996 = vmatpush2.msra.mxu0 0.0
      %1997 = vmatprep.subr.mxu0 0.0
      %1998 = vmatpush2.msra.mxu0 0.0
      %1999 = vmatprep.subr.mxu0 0.0
      %2000 = vmatpush2.msra.mxu0 0.0
      %2001 = vmatprep.subr.mxu0 0.0
      %2002 = vmatpush2.msra.mxu0 0.0
      %2003 = vmatprep.subr.mxu0 0.0
      %2004 = vmatpush2.msra.mxu0 0.0
      %2005 = vmatprep.subr.mxu0 0.0
      %2006 = vmatpush2.msra.mxu0 0.0
      %2007 = vmatprep.subr.mxu0 0.0
      %2008 = vmatpush2.msra.mxu0 0.0
      %2009 = vmatprep.subr.mxu0 0.0
      %2010 = vmatpush2.msra.mxu0 0.0
      %2011 = vmatprep.subr.mxu0 0.0
      %2012 = vmatpush2.msra.mxu0 0.0
      %2013 = vmatprep.subr.mxu0 0.0
      %2014 = vmatpush2.msra.mxu0 0.0
      %2015 = vmatprep.subr.mxu0 0.0
      %2016 = vmatpush2.msra.mxu0 0.0
      %2017 = vmatprep.subr.mxu0 0.0
      %2018 = vmatpush2.msra.mxu0 0.0
      %2019 = vmatprep.subr.mxu0 0.0
      %2020 = vmatpush2.msra.mxu0 0.0
      %2021 = vmatprep.subr.mxu0 0.0
      %2022 = vmatpush2.msra.mxu0 0.0
      %2023 = vmatprep.subr.mxu0 0.0
      %2024 = vmatpush2.msra.mxu0 0.0
      %2025 = vmatprep.subr.mxu0 0.0
      %2026 = vmatpush2.msra.mxu0 0.0
      %2027 = vmatprep.mubr.f32.mxu0 0.0
      %2028 = vmatmul.mubr.f32.gmra.mxu0 %v1961
      %v2029 = vpop.f32.mrf.mxu0
      %v2030 = vadd.f32 0.0, %v2029
      %v2031 = vpop.f32.mrf.mxu0
      %2032 = vdwg.mxu0
      %vm2033 = vcmp.eq.s32.totalorder %v280, 10
      %v2034 = vsel %vm2033, 1, 0
      %v2035 = vcvt.s32.f32 %v2034
      %v2037 = vsel %vm273, %v2030, 0
      %2039 = vmatprep.subr.mxu0 0.0
      %2040 = vmatpush1.msra.mxu0 0.0
      %2041 = vmatprep.subr.mxu0 0.0
      %2042 = vmatpush1.msra.mxu0 0.0
      %2043 = vmatprep.subr.mxu0 0.0
      %2044 = vmatpush1.msra.mxu0 0.0
      %2045 = vmatprep.subr.mxu0 0.0
      %2046 = vmatpush1.msra.mxu0 0.0
      %2047 = vmatprep.subr.mxu0 0.0
      %2048 = vmatpush1.msra.mxu0 0.0
      %2049 = vmatprep.subr.mxu0 0.0
      %2050 = vmatpush1.msra.mxu0 0.0
      %2051 = vmatprep.subr.mxu0 0.0
      %2052 = vmatpush1.msra.mxu0 0.0
      %2053 = vmatprep.subr.mxu0 0.0
      %2054 = vmatpush1.msra.mxu0 0.0
      %2055 = vmatprep.subr.mxu0 0.0
      %2056 = vmatpush1.msra.mxu0 0.0
      %2057 = vmatprep.subr.mxu0 0.0
      %2058 = vmatpush1.msra.mxu0 0.0
      %2059 = vmatprep.subr.mxu0 0.0
      %2060 = vmatpush1.msra.mxu0 0.0
      %2061 = vmatprep.subr.mxu0 0.0
      %2062 = vmatpush1.msra.mxu0 0.0
      %2063 = vmatprep.subr.mxu0 0.0
      %2064 = vmatpush1.msra.mxu0 0.0
      %2065 = vmatprep.subr.mxu0 0.0
      %2066 = vmatpush1.msra.mxu0 0.0
      %2067 = vmatprep.subr.mxu0 0.0
      %2068 = vmatpush1.msra.mxu0 0.0
      %2069 = vmatprep.subr.mxu0 0.0
      %2070 = vmatpush1.msra.mxu0 %v2035
      %2071 = vmatprep.subr.mxu0 0.0
      %2072 = vmatpush2.msra.mxu0 0.0
      %2073 = vmatprep.subr.mxu0 0.0
      %2074 = vmatpush2.msra.mxu0 0.0
      %2075 = vmatprep.subr.mxu0 0.0
      %2076 = vmatpush2.msra.mxu0 0.0
      %2077 = vmatprep.subr.mxu0 0.0
      %2078 = vmatpush2.msra.mxu0 0.0
      %2079 = vmatprep.subr.mxu0 0.0
      %2080 = vmatpush2.msra.mxu0 0.0
      %2081 = vmatprep.subr.mxu0 0.0
      %2082 = vmatpush2.msra.mxu0 0.0
      %2083 = vmatprep.subr.mxu0 0.0
      %2084 = vmatpush2.msra.mxu0 0.0
      %2085 = vmatprep.subr.mxu0 0.0
      %2086 = vmatpush2.msra.mxu0 0.0
      %2087 = vmatprep.subr.mxu0 0.0
      %2088 = vmatpush2.msra.mxu0 0.0
      %2089 = vmatprep.subr.mxu0 0.0
      %2090 = vmatpush2.msra.mxu0 0.0
      %2091 = vmatprep.subr.mxu0 0.0
      %2092 = vmatpush2.msra.mxu0 0.0
      %2093 = vmatprep.subr.mxu0 0.0
      %2094 = vmatpush2.msra.mxu0 0.0
      %2095 = vmatprep.subr.mxu0 0.0
      %2096 = vmatpush2.msra.mxu0 0.0
      %2097 = vmatprep.subr.mxu0 0.0
      %2098 = vmatpush2.msra.mxu0 0.0
      %2099 = vmatprep.subr.mxu0 0.0
      %2100 = vmatpush2.msra.mxu0 0.0
      %2101 = vmatprep.subr.mxu0 0.0
      %2102 = vmatpush2.msra.mxu0 0.0
      %2103 = vmatprep.mubr.f32.mxu0 0.0
      %2104 = vmatmul.mubr.f32.gmra.mxu0 %v2037
      %v2105 = vpop.f32.mrf.mxu0
      %v2106 = vadd.f32 0.0, %v2105
      %v2107 = vpop.f32.mrf.mxu0
      %2108 = vdwg.mxu0
      %v2109 = vadd.f32 %v1957, %v2106
      %s2110 = scalar_lea.vmem %s2, 104
      %v2111 = vld [vmem:[%s2110] sm:$0x3f]
      %v2113 = vsel %vm285, %v2111, 0
      %2115 = vmatprep.subr.mxu0 0.0
      %2116 = vmatpush1.msra.mxu0 0.0
      %2117 = vmatprep.subr.mxu0 0.0
      %2118 = vmatpush1.msra.mxu0 0.0
      %2119 = vmatprep.subr.mxu0 0.0
      %2120 = vmatpush1.msra.mxu0 0.0
      %2121 = vmatprep.subr.mxu0 0.0
      %2122 = vmatpush1.msra.mxu0 0.0
      %2123 = vmatprep.subr.mxu0 0.0
      %2124 = vmatpush1.msra.mxu0 0.0
      %2125 = vmatprep.subr.mxu0 0.0
      %2126 = vmatpush1.msra.mxu0 0.0
      %2127 = vmatprep.subr.mxu0 0.0
      %2128 = vmatpush1.msra.mxu0 0.0
      %2129 = vmatprep.subr.mxu0 0.0
      %2130 = vmatpush1.msra.mxu0 0.0
      %2131 = vmatprep.subr.mxu0 0.0
      %2132 = vmatpush1.msra.mxu0 0.0
      %2133 = vmatprep.subr.mxu0 0.0
      %2134 = vmatpush1.msra.mxu0 0.0
      %2135 = vmatprep.subr.mxu0 0.0
      %2136 = vmatpush1.msra.mxu0 0.0
      %2137 = vmatprep.subr.mxu0 0.0
      %2138 = vmatpush1.msra.mxu0 0.0
      %2139 = vmatprep.subr.mxu0 0.0
      %2140 = vmatpush1.msra.mxu0 0.0
      %2141 = vmatprep.subr.mxu0 0.0
      %2142 = vmatpush1.msra.mxu0 0.0
      %2143 = vmatprep.subr.mxu0 0.0
      %2144 = vmatpush1.msra.mxu0 0.0
      %2145 = vmatprep.subr.mxu0 0.0
      %2146 = vmatpush1.msra.mxu0 %v368
      %2147 = vmatprep.subr.mxu0 0.0
      %2148 = vmatpush2.msra.mxu0 0.0
      %2149 = vmatprep.subr.mxu0 0.0
      %2150 = vmatpush2.msra.mxu0 0.0
      %2151 = vmatprep.subr.mxu0 0.0
      %2152 = vmatpush2.msra.mxu0 0.0
      %2153 = vmatprep.subr.mxu0 0.0
      %2154 = vmatpush2.msra.mxu0 0.0
      %2155 = vmatprep.subr.mxu0 0.0
      %2156 = vmatpush2.msra.mxu0 0.0
      %2157 = vmatprep.subr.mxu0 0.0
      %2158 = vmatpush2.msra.mxu0 0.0
      %2159 = vmatprep.subr.mxu0 0.0
      %2160 = vmatpush2.msra.mxu0 0.0
      %2161 = vmatprep.subr.mxu0 0.0
      %2162 = vmatpush2.msra.mxu0 0.0
      %2163 = vmatprep.subr.mxu0 0.0
      %2164 = vmatpush2.msra.mxu0 0.0
      %2165 = vmatprep.subr.mxu0 0.0
      %2166 = vmatpush2.msra.mxu0 0.0
      %2167 = vmatprep.subr.mxu0 0.0
      %2168 = vmatpush2.msra.mxu0 0.0
      %2169 = vmatprep.subr.mxu0 0.0
      %2170 = vmatpush2.msra.mxu0 0.0
      %2171 = vmatprep.subr.mxu0 0.0
      %2172 = vmatpush2.msra.mxu0 0.0
      %2173 = vmatprep.subr.mxu0 0.0
      %2174 = vmatpush2.msra.mxu0 0.0
      %2175 = vmatprep.subr.mxu0 0.0
      %2176 = vmatpush2.msra.mxu0 0.0
      %2177 = vmatprep.subr.mxu0 0.0
      %2178 = vmatpush2.msra.mxu0 0.0
      %2179 = vmatprep.mubr.f32.mxu0 0.0
      %2180 = vmatmul.mubr.f32.gmra.mxu0 %v2113
      %v2181 = vpop.f32.mrf.mxu0
      %v2182 = vadd.f32 0.0, %v2181
      %v2183 = vpop.f32.mrf.mxu0
      %2184 = vdwg.mxu0
      %vm2185 = vcmp.eq.s32.totalorder %v280, 11
      %v2186 = vsel %vm2185, 1, 0
      %v2187 = vcvt.s32.f32 %v2186
      %v2189 = vsel %vm273, %v2182, 0
      %2191 = vmatprep.subr.mxu0 0.0
      %2192 = vmatpush1.msra.mxu0 0.0
      %2193 = vmatprep.subr.mxu0 0.0
      %2194 = vmatpush1.msra.mxu0 0.0
      %2195 = vmatprep.subr.mxu0 0.0
      %2196 = vmatpush1.msra.mxu0 0.0
      %2197 = vmatprep.subr.mxu0 0.0
      %2198 = vmatpush1.msra.mxu0 0.0
      %2199 = vmatprep.subr.mxu0 0.0
      %2200 = vmatpush1.msra.mxu0 0.0
      %2201 = vmatprep.subr.mxu0 0.0
      %2202 = vmatpush1.msra.mxu0 0.0
      %2203 = vmatprep.subr.mxu0 0.0
      %2204 = vmatpush1.msra.mxu0 0.0
      %2205 = vmatprep.subr.mxu0 0.0
      %2206 = vmatpush1.msra.mxu0 0.0
      %2207 = vmatprep.subr.mxu0 0.0
      %2208 = vmatpush1.msra.mxu0 0.0
      %2209 = vmatprep.subr.mxu0 0.0
      %2210 = vmatpush1.msra.mxu0 0.0
      %2211 = vmatprep.subr.mxu0 0.0
      %2212 = vmatpush1.msra.mxu0 0.0
      %2213 = vmatprep.subr.mxu0 0.0
      %2214 = vmatpush1.msra.mxu0 0.0
      %2215 = vmatprep.subr.mxu0 0.0
      %2216 = vmatpush1.msra.mxu0 0.0
      %2217 = vmatprep.subr.mxu0 0.0
      %2218 = vmatpush1.msra.mxu0 0.0
      %2219 = vmatprep.subr.mxu0 0.0
      %2220 = vmatpush1.msra.mxu0 0.0
      %2221 = vmatprep.subr.mxu0 0.0
      %2222 = vmatpush1.msra.mxu0 %v2187
      %2223 = vmatprep.subr.mxu0 0.0
      %2224 = vmatpush2.msra.mxu0 0.0
      %2225 = vmatprep.subr.mxu0 0.0
      %2226 = vmatpush2.msra.mxu0 0.0
      %2227 = vmatprep.subr.mxu0 0.0
      %2228 = vmatpush2.msra.mxu0 0.0
      %2229 = vmatprep.subr.mxu0 0.0
      %2230 = vmatpush2.msra.mxu0 0.0
      %2231 = vmatprep.subr.mxu0 0.0
      %2232 = vmatpush2.msra.mxu0 0.0
      %2233 = vmatprep.subr.mxu0 0.0
      %2234 = vmatpush2.msra.mxu0 0.0
      %2235 = vmatprep.subr.mxu0 0.0
      %2236 = vmatpush2.msra.mxu0 0.0
      %2237 = vmatprep.subr.mxu0 0.0
      %2238 = vmatpush2.msra.mxu0 0.0
      %2239 = vmatprep.subr.mxu0 0.0
      %2240 = vmatpush2.msra.mxu0 0.0
      %2241 = vmatprep.subr.mxu0 0.0
      %2242 = vmatpush2.msra.mxu0 0.0
      %2243 = vmatprep.subr.mxu0 0.0
      %2244 = vmatpush2.msra.mxu0 0.0
      %2245 = vmatprep.subr.mxu0 0.0
      %2246 = vmatpush2.msra.mxu0 0.0
      %2247 = vmatprep.subr.mxu0 0.0
      %2248 = vmatpush2.msra.mxu0 0.0
      %2249 = vmatprep.subr.mxu0 0.0
      %2250 = vmatpush2.msra.mxu0 0.0
      %2251 = vmatprep.subr.mxu0 0.0
      %2252 = vmatpush2.msra.mxu0 0.0
      %2253 = vmatprep.subr.mxu0 0.0
      %2254 = vmatpush2.msra.mxu0 0.0
      %2255 = vmatprep.mubr.f32.mxu0 0.0
      %2256 = vmatmul.mubr.f32.gmra.mxu0 %v2189
      %v2257 = vpop.f32.mrf.mxu0
      %v2258 = vadd.f32 0.0, %v2257
      %v2259 = vpop.f32.mrf.mxu0
      %2260 = vdwg.mxu0
      %v2261 = vadd.f32 %v2109, %v2258
      %s2262 = scalar_lea.vmem %s2, 112
      %v2263 = vld [vmem:[%s2262] sm:$0x3f]
      %v2265 = vsel %vm285, %v2263, 0
      %2267 = vmatprep.subr.mxu0 0.0
      %2268 = vmatpush1.msra.mxu0 0.0
      %2269 = vmatprep.subr.mxu0 0.0
      %2270 = vmatpush1.msra.mxu0 0.0
      %2271 = vmatprep.subr.mxu0 0.0
      %2272 = vmatpush1.msra.mxu0 0.0
      %2273 = vmatprep.subr.mxu0 0.0
      %2274 = vmatpush1.msra.mxu0 0.0
      %2275 = vmatprep.subr.mxu0 0.0
      %2276 = vmatpush1.msra.mxu0 0.0
      %2277 = vmatprep.subr.mxu0 0.0
      %2278 = vmatpush1.msra.mxu0 0.0
      %2279 = vmatprep.subr.mxu0 0.0
      %2280 = vmatpush1.msra.mxu0 0.0
      %2281 = vmatprep.subr.mxu0 0.0
      %2282 = vmatpush1.msra.mxu0 0.0
      %2283 = vmatprep.subr.mxu0 0.0
      %2284 = vmatpush1.msra.mxu0 0.0
      %2285 = vmatprep.subr.mxu0 0.0
      %2286 = vmatpush1.msra.mxu0 0.0
      %2287 = vmatprep.subr.mxu0 0.0
      %2288 = vmatpush1.msra.mxu0 0.0
      %2289 = vmatprep.subr.mxu0 0.0
      %2290 = vmatpush1.msra.mxu0 0.0
      %2291 = vmatprep.subr.mxu0 0.0
      %2292 = vmatpush1.msra.mxu0 0.0
      %2293 = vmatprep.subr.mxu0 0.0
      %2294 = vmatpush1.msra.mxu0 0.0
      %2295 = vmatprep.subr.mxu0 0.0
      %2296 = vmatpush1.msra.mxu0 0.0
      %2297 = vmatprep.subr.mxu0 0.0
      %2298 = vmatpush1.msra.mxu0 %v368
      %2299 = vmatprep.subr.mxu0 0.0
      %2300 = vmatpush2.msra.mxu0 0.0
      %2301 = vmatprep.subr.mxu0 0.0
      %2302 = vmatpush2.msra.mxu0 0.0
      %2303 = vmatprep.subr.mxu0 0.0
      %2304 = vmatpush2.msra.mxu0 0.0
      %2305 = vmatprep.subr.mxu0 0.0
      %2306 = vmatpush2.msra.mxu0 0.0
      %2307 = vmatprep.subr.mxu0 0.0
      %2308 = vmatpush2.msra.mxu0 0.0
      %2309 = vmatprep.subr.mxu0 0.0
      %2310 = vmatpush2.msra.mxu0 0.0
      %2311 = vmatprep.subr.mxu0 0.0
      %2312 = vmatpush2.msra.mxu0 0.0
      %2313 = vmatprep.subr.mxu0 0.0
      %2314 = vmatpush2.msra.mxu0 0.0
      %2315 = vmatprep.subr.mxu0 0.0
      %2316 = vmatpush2.msra.mxu0 0.0
      %2317 = vmatprep.subr.mxu0 0.0
      %2318 = vmatpush2.msra.mxu0 0.0
      %2319 = vmatprep.subr.mxu0 0.0
      %2320 = vmatpush2.msra.mxu0 0.0
      %2321 = vmatprep.subr.mxu0 0.0
      %2322 = vmatpush2.msra.mxu0 0.0
      %2323 = vmatprep.subr.mxu0 0.0
      %2324 = vmatpush2.msra.mxu0 0.0
      %2325 = vmatprep.subr.mxu0 0.0
      %2326 = vmatpush2.msra.mxu0 0.0
      %2327 = vmatprep.subr.mxu0 0.0
      %2328 = vmatpush2.msra.mxu0 0.0
      %2329 = vmatprep.subr.mxu0 0.0
      %2330 = vmatpush2.msra.mxu0 0.0
      %2331 = vmatprep.mubr.f32.mxu0 0.0
      %2332 = vmatmul.mubr.f32.gmra.mxu0 %v2265
      %v2333 = vpop.f32.mrf.mxu0
      %v2334 = vadd.f32 0.0, %v2333
      %v2335 = vpop.f32.mrf.mxu0
      %2336 = vdwg.mxu0
      %vm2337 = vcmp.eq.s32.totalorder %v280, 12
      %v2338 = vsel %vm2337, 1, 0
      %v2339 = vcvt.s32.f32 %v2338
      %v2341 = vsel %vm273, %v2334, 0
      %2343 = vmatprep.subr.mxu0 0.0
      %2344 = vmatpush1.msra.mxu0 0.0
      %2345 = vmatprep.subr.mxu0 0.0
      %2346 = vmatpush1.msra.mxu0 0.0
      %2347 = vmatprep.subr.mxu0 0.0
      %2348 = vmatpush1.msra.mxu0 0.0
      %2349 = vmatprep.subr.mxu0 0.0
      %2350 = vmatpush1.msra.mxu0 0.0
      %2351 = vmatprep.subr.mxu0 0.0
      %2352 = vmatpush1.msra.mxu0 0.0
      %2353 = vmatprep.subr.mxu0 0.0
      %2354 = vmatpush1.msra.mxu0 0.0
      %2355 = vmatprep.subr.mxu0 0.0
      %2356 = vmatpush1.msra.mxu0 0.0
      %2357 = vmatprep.subr.mxu0 0.0
      %2358 = vmatpush1.msra.mxu0 0.0
      %2359 = vmatprep.subr.mxu0 0.0
      %2360 = vmatpush1.msra.mxu0 0.0
      %2361 = vmatprep.subr.mxu0 0.0
      %2362 = vmatpush1.msra.mxu0 0.0
      %2363 = vmatprep.subr.mxu0 0.0
      %2364 = vmatpush1.msra.mxu0 0.0
      %2365 = vmatprep.subr.mxu0 0.0
      %2366 = vmatpush1.msra.mxu0 0.0
      %2367 = vmatprep.subr.mxu0 0.0
      %2368 = vmatpush1.msra.mxu0 0.0
      %2369 = vmatprep.subr.mxu0 0.0
      %2370 = vmatpush1.msra.mxu0 0.0
      %2371 = vmatprep.subr.mxu0 0.0
      %2372 = vmatpush1.msra.mxu0 0.0
      %2373 = vmatprep.subr.mxu0 0.0
      %2374 = vmatpush1.msra.mxu0 %v2339
      %2375 = vmatprep.subr.mxu0 0.0
      %2376 = vmatpush2.msra.mxu0 0.0
      %2377 = vmatprep.subr.mxu0 0.0
      %2378 = vmatpush2.msra.mxu0 0.0
      %2379 = vmatprep.subr.mxu0 0.0
      %2380 = vmatpush2.msra.mxu0 0.0
      %2381 = vmatprep.subr.mxu0 0.0
      %2382 = vmatpush2.msra.mxu0 0.0
      %2383 = vmatprep.subr.mxu0 0.0
      %2384 = vmatpush2.msra.mxu0 0.0
      %2385 = vmatprep.subr.mxu0 0.0
      %2386 = vmatpush2.msra.mxu0 0.0
      %2387 = vmatprep.subr.mxu0 0.0
      %2388 = vmatpush2.msra.mxu0 0.0
      %2389 = vmatprep.subr.mxu0 0.0
      %2390 = vmatpush2.msra.mxu0 0.0
      %2391 = vmatprep.subr.mxu0 0.0
      %2392 = vmatpush2.msra.mxu0 0.0
      %2393 = vmatprep.subr.mxu0 0.0
      %2394 = vmatpush2.msra.mxu0 0.0
      %2395 = vmatprep.subr.mxu0 0.0
      %2396 = vmatpush2.msra.mxu0 0.0
      %2397 = vmatprep.subr.mxu0 0.0
      %2398 = vmatpush2.msra.mxu0 0.0
      %2399 = vmatprep.subr.mxu0 0.0
      %2400 = vmatpush2.msra.mxu0 0.0
      %2401 = vmatprep.subr.mxu0 0.0
      %2402 = vmatpush2.msra.mxu0 0.0
      %2403 = vmatprep.subr.mxu0 0.0
      %2404 = vmatpush2.msra.mxu0 0.0
      %2405 = vmatprep.subr.mxu0 0.0
      %2406 = vmatpush2.msra.mxu0 0.0
      %2407 = vmatprep.mubr.f32.mxu0 0.0
      %2408 = vmatmul.mubr.f32.gmra.mxu0 %v2341
      %v2409 = vpop.f32.mrf.mxu0
      %v2410 = vadd.f32 0.0, %v2409
      %v2411 = vpop.f32.mrf.mxu0
      %2412 = vdwg.mxu0
      %v2413 = vadd.f32 %v2261, %v2410
      %s2414 = scalar_lea.vmem %s2, 120
      %v2415 = vld [vmem:[%s2414] sm:$0x3f]
      %v2417 = vsel %vm285, %v2415, 0
      %2419 = vmatprep.subr.mxu0 0.0
      %2420 = vmatpush1.msra.mxu0 0.0
      %2421 = vmatprep.subr.mxu0 0.0
      %2422 = vmatpush1.msra.mxu0 0.0
      %2423 = vmatprep.subr.mxu0 0.0
      %2424 = vmatpush1.msra.mxu0 0.0
      %2425 = vmatprep.subr.mxu0 0.0
      %2426 = vmatpush1.msra.mxu0 0.0
      %2427 = vmatprep.subr.mxu0 0.0
      %2428 = vmatpush1.msra.mxu0 0.0
      %2429 = vmatprep.subr.mxu0 0.0
      %2430 = vmatpush1.msra.mxu0 0.0
      %2431 = vmatprep.subr.mxu0 0.0
      %2432 = vmatpush1.msra.mxu0 0.0
      %2433 = vmatprep.subr.mxu0 0.0
      %2434 = vmatpush1.msra.mxu0 0.0
      %2435 = vmatprep.subr.mxu0 0.0
      %2436 = vmatpush1.msra.mxu0 0.0
      %2437 = vmatprep.subr.mxu0 0.0
      %2438 = vmatpush1.msra.mxu0 0.0
      %2439 = vmatprep.subr.mxu0 0.0
      %2440 = vmatpush1.msra.mxu0 0.0
      %2441 = vmatprep.subr.mxu0 0.0
      %2442 = vmatpush1.msra.mxu0 0.0
      %2443 = vmatprep.subr.mxu0 0.0
      %2444 = vmatpush1.msra.mxu0 0.0
      %2445 = vmatprep.subr.mxu0 0.0
      %2446 = vmatpush1.msra.mxu0 0.0
      %2447 = vmatprep.subr.mxu0 0.0
      %2448 = vmatpush1.msra.mxu0 0.0
      %2449 = vmatprep.subr.mxu0 0.0
      %2450 = vmatpush1.msra.mxu0 %v368
      %2451 = vmatprep.subr.mxu0 0.0
      %2452 = vmatpush2.msra.mxu0 0.0
      %2453 = vmatprep.subr.mxu0 0.0
      %2454 = vmatpush2.msra.mxu0 0.0
      %2455 = vmatprep.subr.mxu0 0.0
      %2456 = vmatpush2.msra.mxu0 0.0
      %2457 = vmatprep.subr.mxu0 0.0
      %2458 = vmatpush2.msra.mxu0 0.0
      %2459 = vmatprep.subr.mxu0 0.0
      %2460 = vmatpush2.msra.mxu0 0.0
      %2461 = vmatprep.subr.mxu0 0.0
      %2462 = vmatpush2.msra.mxu0 0.0
      %2463 = vmatprep.subr.mxu0 0.0
      %2464 = vmatpush2.msra.mxu0 0.0
      %2465 = vmatprep.subr.mxu0 0.0
      %2466 = vmatpush2.msra.mxu0 0.0
      %2467 = vmatprep.subr.mxu0 0.0
      %2468 = vmatpush2.msra.mxu0 0.0
      %2469 = vmatprep.subr.mxu0 0.0
      %2470 = vmatpush2.msra.mxu0 0.0
      %2471 = vmatprep.subr.mxu0 0.0
      %2472 = vmatpush2.msra.mxu0 0.0
      %2473 = vmatprep.subr.mxu0 0.0
      %2474 = vmatpush2.msra.mxu0 0.0
      %2475 = vmatprep.subr.mxu0 0.0
      %2476 = vmatpush2.msra.mxu0 0.0
      %2477 = vmatprep.subr.mxu0 0.0
      %2478 = vmatpush2.msra.mxu0 0.0
      %2479 = vmatprep.subr.mxu0 0.0
      %2480 = vmatpush2.msra.mxu0 0.0
      %2481 = vmatprep.subr.mxu0 0.0
      %2482 = vmatpush2.msra.mxu0 0.0
      %2483 = vmatprep.mubr.f32.mxu0 0.0
      %2484 = vmatmul.mubr.f32.gmra.mxu0 %v2417
      %v2485 = vpop.f32.mrf.mxu0
      %v2486 = vadd.f32 0.0, %v2485
      %v2487 = vpop.f32.mrf.mxu0
      %2488 = vdwg.mxu0
      %vm2489 = vcmp.eq.s32.totalorder %v280, 13
      %v2490 = vsel %vm2489, 1, 0
      %v2491 = vcvt.s32.f32 %v2490
      %v2493 = vsel %vm273, %v2486, 0
      %2495 = vmatprep.subr.mxu0 0.0
      %2496 = vmatpush1.msra.mxu0 0.0
      %2497 = vmatprep.subr.mxu0 0.0
      %2498 = vmatpush1.msra.mxu0 0.0
      %2499 = vmatprep.subr.mxu0 0.0
      %2500 = vmatpush1.msra.mxu0 0.0
      %2501 = vmatprep.subr.mxu0 0.0
      %2502 = vmatpush1.msra.mxu0 0.0
      %2503 = vmatprep.subr.mxu0 0.0
      %2504 = vmatpush1.msra.mxu0 0.0
      %2505 = vmatprep.subr.mxu0 0.0
      %2506 = vmatpush1.msra.mxu0 0.0
      %2507 = vmatprep.subr.mxu0 0.0
      %2508 = vmatpush1.msra.mxu0 0.0
      %2509 = vmatprep.subr.mxu0 0.0
      %2510 = vmatpush1.msra.mxu0 0.0
      %2511 = vmatprep.subr.mxu0 0.0
      %2512 = vmatpush1.msra.mxu0 0.0
      %2513 = vmatprep.subr.mxu0 0.0
      %2514 = vmatpush1.msra.mxu0 0.0
      %2515 = vmatprep.subr.mxu0 0.0
      %2516 = vmatpush1.msra.mxu0 0.0
      %2517 = vmatprep.subr.mxu0 0.0
      %2518 = vmatpush1.msra.mxu0 0.0
      %2519 = vmatprep.subr.mxu0 0.0
      %2520 = vmatpush1.msra.mxu0 0.0
      %2521 = vmatprep.subr.mxu0 0.0
      %2522 = vmatpush1.msra.mxu0 0.0
      %2523 = vmatprep.subr.mxu0 0.0
      %2524 = vmatpush1.msra.mxu0 0.0
      %2525 = vmatprep.subr.mxu0 0.0
      %2526 = vmatpush1.msra.mxu0 %v2491
      %2527 = vmatprep.subr.mxu0 0.0
      %2528 = vmatpush2.msra.mxu0 0.0
      %2529 = vmatprep.subr.mxu0 0.0
      %2530 = vmatpush2.msra.mxu0 0.0
      %2531 = vmatprep.subr.mxu0 0.0
      %2532 = vmatpush2.msra.mxu0 0.0
      %2533 = vmatprep.subr.mxu0 0.0
      %2534 = vmatpush2.msra.mxu0 0.0
      %2535 = vmatprep.subr.mxu0 0.0
      %2536 = vmatpush2.msra.mxu0 0.0
      %2537 = vmatprep.subr.mxu0 0.0
      %2538 = vmatpush2.msra.mxu0 0.0
      %2539 = vmatprep.subr.mxu0 0.0
      %2540 = vmatpush2.msra.mxu0 0.0
      %2541 = vmatprep.subr.mxu0 0.0
      %2542 = vmatpush2.msra.mxu0 0.0
      %2543 = vmatprep.subr.mxu0 0.0
      %2544 = vmatpush2.msra.mxu0 0.0
      %2545 = vmatprep.subr.mxu0 0.0
      %2546 = vmatpush2.msra.mxu0 0.0
      %2547 = vmatprep.subr.mxu0 0.0
      %2548 = vmatpush2.msra.mxu0 0.0
      %2549 = vmatprep.subr.mxu0 0.0
      %2550 = vmatpush2.msra.mxu0 0.0
      %2551 = vmatprep.subr.mxu0 0.0
      %2552 = vmatpush2.msra.mxu0 0.0
      %2553 = vmatprep.subr.mxu0 0.0
      %2554 = vmatpush2.msra.mxu0 0.0
      %2555 = vmatprep.subr.mxu0 0.0
      %2556 = vmatpush2.msra.mxu0 0.0
      %2557 = vmatprep.subr.mxu0 0.0
      %2558 = vmatpush2.msra.mxu0 0.0
      %2559 = vmatprep.mubr.f32.mxu0 0.0
      %2560 = vmatmul.mubr.f32.gmra.mxu0 %v2493
      %v2561 = vpop.f32.mrf.mxu0
      %v2562 = vadd.f32 0.0, %v2561
      %v2563 = vpop.f32.mrf.mxu0
      %2564 = vdwg.mxu0
      %v2565 = vadd.f32 %v2413, %v2562
      %v2566 = vld [vmem:[%s2] sm:$0x3f]
      %s2567 = scalar_lea.vmem %s2, 128
      %v2568 = vld [vmem:[%s2567] sm:$0x3f]
      %v2570 = vsel %vm285, %v2568, 0
      %2572 = vmatprep.subr.mxu0 0.0
      %2573 = vmatpush1.msra.mxu0 0.0
      %2574 = vmatprep.subr.mxu0 0.0
      %2575 = vmatpush1.msra.mxu0 0.0
      %2576 = vmatprep.subr.mxu0 0.0
      %2577 = vmatpush1.msra.mxu0 0.0
      %2578 = vmatprep.subr.mxu0 0.0
      %2579 = vmatpush1.msra.mxu0 0.0
      %2580 = vmatprep.subr.mxu0 0.0
      %2581 = vmatpush1.msra.mxu0 0.0
      %2582 = vmatprep.subr.mxu0 0.0
      %2583 = vmatpush1.msra.mxu0 0.0
      %2584 = vmatprep.subr.mxu0 0.0
      %2585 = vmatpush1.msra.mxu0 0.0
      %2586 = vmatprep.subr.mxu0 0.0
      %2587 = vmatpush1.msra.mxu0 0.0
      %2588 = vmatprep.subr.mxu0 0.0
      %2589 = vmatpush1.msra.mxu0 0.0
      %2590 = vmatprep.subr.mxu0 0.0
      %2591 = vmatpush1.msra.mxu0 0.0
      %2592 = vmatprep.subr.mxu0 0.0
      %2593 = vmatpush1.msra.mxu0 0.0
      %2594 = vmatprep.subr.mxu0 0.0
      %2595 = vmatpush1.msra.mxu0 0.0
      %2596 = vmatprep.subr.mxu0 0.0
      %2597 = vmatpush1.msra.mxu0 0.0
      %2598 = vmatprep.subr.mxu0 0.0
      %2599 = vmatpush1.msra.mxu0 0.0
      %2600 = vmatprep.subr.mxu0 0.0
      %2601 = vmatpush1.msra.mxu0 0.0
      %2602 = vmatprep.subr.mxu0 0.0
      %2603 = vmatpush1.msra.mxu0 %v368
      %2604 = vmatprep.subr.mxu0 0.0
      %2605 = vmatpush2.msra.mxu0 0.0
      %2606 = vmatprep.subr.mxu0 0.0
      %2607 = vmatpush2.msra.mxu0 0.0
      %2608 = vmatprep.subr.mxu0 0.0
      %2609 = vmatpush2.msra.mxu0 0.0
      %2610 = vmatprep.subr.mxu0 0.0
      %2611 = vmatpush2.msra.mxu0 0.0
      %2612 = vmatprep.subr.mxu0 0.0
      %2613 = vmatpush2.msra.mxu0 0.0
      %2614 = vmatprep.subr.mxu0 0.0
      %2615 = vmatpush2.msra.mxu0 0.0
      %2616 = vmatprep.subr.mxu0 0.0
      %2617 = vmatpush2.msra.mxu0 0.0
      %2618 = vmatprep.subr.mxu0 0.0
      %2619 = vmatpush2.msra.mxu0 0.0
      %2620 = vmatprep.subr.mxu0 0.0
      %2621 = vmatpush2.msra.mxu0 0.0
      %2622 = vmatprep.subr.mxu0 0.0
      %2623 = vmatpush2.msra.mxu0 0.0
      %2624 = vmatprep.subr.mxu0 0.0
      %2625 = vmatpush2.msra.mxu0 0.0
      %2626 = vmatprep.subr.mxu0 0.0
      %2627 = vmatpush2.msra.mxu0 0.0
      %2628 = vmatprep.subr.mxu0 0.0
      %2629 = vmatpush2.msra.mxu0 0.0
      %2630 = vmatprep.subr.mxu0 0.0
      %2631 = vmatpush2.msra.mxu0 0.0
      %2632 = vmatprep.subr.mxu0 0.0
      %2633 = vmatpush2.msra.mxu0 0.0
      %2634 = vmatprep.subr.mxu0 0.0
      %2635 = vmatpush2.msra.mxu0 0.0
      %2636 = vmatprep.mubr.f32.mxu0 0.0
      %2637 = vmatmul.mubr.f32.gmra.mxu0 %v2570
      %v2638 = vpop.f32.mrf.mxu0
      %v2639 = vadd.f32 0.0, %v2638
      %v2640 = vpop.f32.mrf.mxu0
      %2641 = vdwg.mxu0
      %2642 = vrot.lane.b32.xlu0 %v274, 126
      %v2643 = vpop.permute.xlu0 %2642
      %v2645 = vsel %vm285, %v2566, 0
      %v2647 = vsel %vm289, %v2643, 0
      %2649 = vmatprep.subr.mxu0 0.0
      %2650 = vmatpush1.msra.mxu0 0.0
      %2651 = vmatprep.subr.mxu0 0.0
      %2652 = vmatpush1.msra.mxu0 0.0
      %2653 = vmatprep.subr.mxu0 0.0
      %2654 = vmatpush1.msra.mxu0 0.0
      %2655 = vmatprep.subr.mxu0 0.0
      %2656 = vmatpush1.msra.mxu0 0.0
      %2657 = vmatprep.subr.mxu0 0.0
      %2658 = vmatpush1.msra.mxu0 0.0
      %2659 = vmatprep.subr.mxu0 0.0
      %2660 = vmatpush1.msra.mxu0 0.0
      %2661 = vmatprep.subr.mxu0 0.0
      %2662 = vmatpush1.msra.mxu0 0.0
      %2663 = vmatprep.subr.mxu0 0.0
      %2664 = vmatpush1.msra.mxu0 0.0
      %2665 = vmatprep.subr.mxu0 0.0
      %2666 = vmatpush1.msra.mxu0 0.0
      %2667 = vmatprep.subr.mxu0 0.0
      %2668 = vmatpush1.msra.mxu0 0.0
      %2669 = vmatprep.subr.mxu0 0.0
      %2670 = vmatpush1.msra.mxu0 0.0
      %2671 = vmatprep.subr.mxu0 0.0
      %2672 = vmatpush1.msra.mxu0 0.0
      %2673 = vmatprep.subr.mxu0 0.0
      %2674 = vmatpush1.msra.mxu0 0.0
      %2675 = vmatprep.subr.mxu0 0.0
      %2676 = vmatpush1.msra.mxu0 0.0
      %2677 = vmatprep.subr.mxu0 0.0
      %2678 = vmatpush1.msra.mxu0 0.0
      %2679 = vmatprep.subr.mxu0 0.0
      %2680 = vmatpush1.msra.mxu0 %v2647
      %2681 = vmatprep.subr.mxu0 0.0
      %2682 = vmatpush2.msra.mxu0 0.0
      %2683 = vmatprep.subr.mxu0 0.0
      %2684 = vmatpush2.msra.mxu0 0.0
      %2685 = vmatprep.subr.mxu0 0.0
      %2686 = vmatpush2.msra.mxu0 0.0
      %2687 = vmatprep.subr.mxu0 0.0
      %2688 = vmatpush2.msra.mxu0 0.0
      %2689 = vmatprep.subr.mxu0 0.0
      %2690 = vmatpush2.msra.mxu0 0.0
      %2691 = vmatprep.subr.mxu0 0.0
      %2692 = vmatpush2.msra.mxu0 0.0
      %2693 = vmatprep.subr.mxu0 0.0
      %2694 = vmatpush2.msra.mxu0 0.0
      %2695 = vmatprep.subr.mxu0 0.0
      %2696 = vmatpush2.msra.mxu0 0.0
      %2697 = vmatprep.subr.mxu0 0.0
      %2698 = vmatpush2.msra.mxu0 0.0
      %2699 = vmatprep.subr.mxu0 0.0
      %2700 = vmatpush2.msra.mxu0 0.0
      %2701 = vmatprep.subr.mxu0 0.0
      %2702 = vmatpush2.msra.mxu0 0.0
      %2703 = vmatprep.subr.mxu0 0.0
      %2704 = vmatpush2.msra.mxu0 0.0
      %2705 = vmatprep.subr.mxu0 0.0
      %2706 = vmatpush2.msra.mxu0 0.0
      %2707 = vmatprep.subr.mxu0 0.0
      %2708 = vmatpush2.msra.mxu0 0.0
      %2709 = vmatprep.subr.mxu0 0.0
      %2710 = vmatpush2.msra.mxu0 0.0
      %2711 = vmatprep.subr.mxu0 0.0
      %2712 = vmatpush2.msra.mxu0 0.0
      %2713 = vmatprep.mubr.f32.mxu0 0.0
      %2714 = vmatmul.mubr.f32.gmra.mxu0 %v2645
      %v2715 = vpop.f32.mrf.mxu0
      %v2716 = vadd.f32 %v2639, %v2715
      %v2717 = vpop.f32.mrf.mxu0
      %2718 = vdwg.mxu0
      %vm2719 = vcmp.eq.s32.totalorder %v280, 14
      %v2720 = vsel %vm2719, 1, 0
      %v2721 = vcvt.s32.f32 %v2720
      %v2723 = vsel %vm273, %v2716, 0
      %2725 = vmatprep.subr.mxu0 0.0
      %2726 = vmatpush1.msra.mxu0 0.0
      %2727 = vmatprep.subr.mxu0 0.0
      %2728 = vmatpush1.msra.mxu0 0.0
      %2729 = vmatprep.subr.mxu0 0.0
      %2730 = vmatpush1.msra.mxu0 0.0
      %2731 = vmatprep.subr.mxu0 0.0
      %2732 = vmatpush1.msra.mxu0 0.0
      %2733 = vmatprep.subr.mxu0 0.0
      %2734 = vmatpush1.msra.mxu0 0.0
      %2735 = vmatprep.subr.mxu0 0.0
      %2736 = vmatpush1.msra.mxu0 0.0
      %2737 = vmatprep.subr.mxu0 0.0
      %2738 = vmatpush1.msra.mxu0 0.0
      %2739 = vmatprep.subr.mxu0 0.0
      %2740 = vmatpush1.msra.mxu0 0.0
      %2741 = vmatprep.subr.mxu0 0.0
      %2742 = vmatpush1.msra.mxu0 0.0
      %2743 = vmatprep.subr.mxu0 0.0
      %2744 = vmatpush1.msra.mxu0 0.0
      %2745 = vmatprep.subr.mxu0 0.0
      %2746 = vmatpush1.msra.mxu0 0.0
      %2747 = vmatprep.subr.mxu0 0.0
      %2748 = vmatpush1.msra.mxu0 0.0
      %2749 = vmatprep.subr.mxu0 0.0
      %2750 = vmatpush1.msra.mxu0 0.0
      %2751 = vmatprep.subr.mxu0 0.0
      %2752 = vmatpush1.msra.mxu0 0.0
      %2753 = vmatprep.subr.mxu0 0.0
      %2754 = vmatpush1.msra.mxu0 0.0
      %2755 = vmatprep.subr.mxu0 0.0
      %2756 = vmatpush1.msra.mxu0 %v2721
      %2757 = vmatprep.subr.mxu0 0.0
      %2758 = vmatpush2.msra.mxu0 0.0
      %2759 = vmatprep.subr.mxu0 0.0
      %2760 = vmatpush2.msra.mxu0 0.0
      %2761 = vmatprep.subr.mxu0 0.0
      %2762 = vmatpush2.msra.mxu0 0.0
      %2763 = vmatprep.subr.mxu0 0.0
      %2764 = vmatpush2.msra.mxu0 0.0
      %2765 = vmatprep.subr.mxu0 0.0
      %2766 = vmatpush2.msra.mxu0 0.0
      %2767 = vmatprep.subr.mxu0 0.0
      %2768 = vmatpush2.msra.mxu0 0.0
      %2769 = vmatprep.subr.mxu0 0.0
      %2770 = vmatpush2.msra.mxu0 0.0
      %2771 = vmatprep.subr.mxu0 0.0
      %2772 = vmatpush2.msra.mxu0 0.0
      %2773 = vmatprep.subr.mxu0 0.0
      %2774 = vmatpush2.msra.mxu0 0.0
      %2775 = vmatprep.subr.mxu0 0.0
      %2776 = vmatpush2.msra.mxu0 0.0
      %2777 = vmatprep.subr.mxu0 0.0
      %2778 = vmatpush2.msra.mxu0 0.0
      %2779 = vmatprep.subr.mxu0 0.0
      %2780 = vmatpush2.msra.mxu0 0.0
      %2781 = vmatprep.subr.mxu0 0.0
      %2782 = vmatpush2.msra.mxu0 0.0
      %2783 = vmatprep.subr.mxu0 0.0
      %2784 = vmatpush2.msra.mxu0 0.0
      %2785 = vmatprep.subr.mxu0 0.0
      %2786 = vmatpush2.msra.mxu0 0.0
      %2787 = vmatprep.subr.mxu0 0.0
      %2788 = vmatpush2.msra.mxu0 0.0
      %2789 = vmatprep.mubr.f32.mxu0 0.0
      %2790 = vmatmul.mubr.f32.gmra.mxu0 %v2723
      %v2791 = vpop.f32.mrf.mxu0
      %v2792 = vadd.f32 0.0, %v2791
      %v2793 = vpop.f32.mrf.mxu0
      %2794 = vdwg.mxu0
      %v2795 = vadd.f32 %v2565, %v2792
      %s2796 = scalar_lea.vmem %s2, 8
      %v2797 = vld [vmem:[%s2796] sm:$0x3f]
      %s2798 = scalar_lea.vmem %s2, 136
      %v2799 = vld [vmem:[%s2798] sm:$0x3f]
      %v2801 = vsel %vm285, %v2799, 0
      %2803 = vmatprep.subr.mxu0 0.0
      %2804 = vmatpush1.msra.mxu0 0.0
      %2805 = vmatprep.subr.mxu0 0.0
      %2806 = vmatpush1.msra.mxu0 0.0
      %2807 = vmatprep.subr.mxu0 0.0
      %2808 = vmatpush1.msra.mxu0 0.0
      %2809 = vmatprep.subr.mxu0 0.0
      %2810 = vmatpush1.msra.mxu0 0.0
      %2811 = vmatprep.subr.mxu0 0.0
      %2812 = vmatpush1.msra.mxu0 0.0
      %2813 = vmatprep.subr.mxu0 0.0
      %2814 = vmatpush1.msra.mxu0 0.0
      %2815 = vmatprep.subr.mxu0 0.0
      %2816 = vmatpush1.msra.mxu0 0.0
      %2817 = vmatprep.subr.mxu0 0.0
      %2818 = vmatpush1.msra.mxu0 0.0
      %2819 = vmatprep.subr.mxu0 0.0
      %2820 = vmatpush1.msra.mxu0 0.0
      %2821 = vmatprep.subr.mxu0 0.0
      %2822 = vmatpush1.msra.mxu0 0.0
      %2823 = vmatprep.subr.mxu0 0.0
      %2824 = vmatpush1.msra.mxu0 0.0
      %2825 = vmatprep.subr.mxu0 0.0
      %2826 = vmatpush1.msra.mxu0 0.0
      %2827 = vmatprep.subr.mxu0 0.0
      %2828 = vmatpush1.msra.mxu0 0.0
      %2829 = vmatprep.subr.mxu0 0.0
      %2830 = vmatpush1.msra.mxu0 0.0
      %2831 = vmatprep.subr.mxu0 0.0
      %2832 = vmatpush1.msra.mxu0 0.0
      %2833 = vmatprep.subr.mxu0 0.0
      %2834 = vmatpush1.msra.mxu0 %v368
      %2835 = vmatprep.subr.mxu0 0.0
      %2836 = vmatpush2.msra.mxu0 0.0
      %2837 = vmatprep.subr.mxu0 0.0
      %2838 = vmatpush2.msra.mxu0 0.0
      %2839 = vmatprep.subr.mxu0 0.0
      %2840 = vmatpush2.msra.mxu0 0.0
      %2841 = vmatprep.subr.mxu0 0.0
      %2842 = vmatpush2.msra.mxu0 0.0
      %2843 = vmatprep.subr.mxu0 0.0
      %2844 = vmatpush2.msra.mxu0 0.0
      %2845 = vmatprep.subr.mxu0 0.0
      %2846 = vmatpush2.msra.mxu0 0.0
      %2847 = vmatprep.subr.mxu0 0.0
      %2848 = vmatpush2.msra.mxu0 0.0
      %2849 = vmatprep.subr.mxu0 0.0
      %2850 = vmatpush2.msra.mxu0 0.0
      %2851 = vmatprep.subr.mxu0 0.0
      %2852 = vmatpush2.msra.mxu0 0.0
      %2853 = vmatprep.subr.mxu0 0.0
      %2854 = vmatpush2.msra.mxu0 0.0
      %2855 = vmatprep.subr.mxu0 0.0
      %2856 = vmatpush2.msra.mxu0 0.0
      %2857 = vmatprep.subr.mxu0 0.0
      %2858 = vmatpush2.msra.mxu0 0.0
      %2859 = vmatprep.subr.mxu0 0.0
      %2860 = vmatpush2.msra.mxu0 0.0
      %2861 = vmatprep.subr.mxu0 0.0
      %2862 = vmatpush2.msra.mxu0 0.0
      %2863 = vmatprep.subr.mxu0 0.0
      %2864 = vmatpush2.msra.mxu0 0.0
      %2865 = vmatprep.subr.mxu0 0.0
      %2866 = vmatpush2.msra.mxu0 0.0
      %2867 = vmatprep.mubr.f32.mxu0 0.0
      %2868 = vmatmul.mubr.f32.gmra.mxu0 %v2801
      %v2869 = vpop.f32.mrf.mxu0
      %v2870 = vadd.f32 0.0, %v2869
      %v2871 = vpop.f32.mrf.mxu0
      %2872 = vdwg.mxu0
      %v2874 = vsel %vm285, %v2797, 0
      %2876 = vmatprep.subr.mxu0 0.0
      %2877 = vmatpush1.msra.mxu0 0.0
      %2878 = vmatprep.subr.mxu0 0.0
      %2879 = vmatpush1.msra.mxu0 0.0
      %2880 = vmatprep.subr.mxu0 0.0
      %2881 = vmatpush1.msra.mxu0 0.0
      %2882 = vmatprep.subr.mxu0 0.0
      %2883 = vmatpush1.msra.mxu0 0.0
      %2884 = vmatprep.subr.mxu0 0.0
      %2885 = vmatpush1.msra.mxu0 0.0
      %2886 = vmatprep.subr.mxu0 0.0
      %2887 = vmatpush1.msra.mxu0 0.0
      %2888 = vmatprep.subr.mxu0 0.0
      %2889 = vmatpush1.msra.mxu0 0.0
      %2890 = vmatprep.subr.mxu0 0.0
      %2891 = vmatpush1.msra.mxu0 0.0
      %2892 = vmatprep.subr.mxu0 0.0
      %2893 = vmatpush1.msra.mxu0 0.0
      %2894 = vmatprep.subr.mxu0 0.0
      %2895 = vmatpush1.msra.mxu0 0.0
      %2896 = vmatprep.subr.mxu0 0.0
      %2897 = vmatpush1.msra.mxu0 0.0
      %2898 = vmatprep.subr.mxu0 0.0
      %2899 = vmatpush1.msra.mxu0 0.0
      %2900 = vmatprep.subr.mxu0 0.0
      %2901 = vmatpush1.msra.mxu0 0.0
      %2902 = vmatprep.subr.mxu0 0.0
      %2903 = vmatpush1.msra.mxu0 0.0
      %2904 = vmatprep.subr.mxu0 0.0
      %2905 = vmatpush1.msra.mxu0 0.0
      %2906 = vmatprep.subr.mxu0 0.0
      %2907 = vmatpush1.msra.mxu0 %v2647
      %2908 = vmatprep.subr.mxu0 0.0
      %2909 = vmatpush2.msra.mxu0 0.0
      %2910 = vmatprep.subr.mxu0 0.0
      %2911 = vmatpush2.msra.mxu0 0.0
      %2912 = vmatprep.subr.mxu0 0.0
      %2913 = vmatpush2.msra.mxu0 0.0
      %2914 = vmatprep.subr.mxu0 0.0
      %2915 = vmatpush2.msra.mxu0 0.0
      %2916 = vmatprep.subr.mxu0 0.0
      %2917 = vmatpush2.msra.mxu0 0.0
      %2918 = vmatprep.subr.mxu0 0.0
      %2919 = vmatpush2.msra.mxu0 0.0
      %2920 = vmatprep.subr.mxu0 0.0
      %2921 = vmatpush2.msra.mxu0 0.0
      %2922 = vmatprep.subr.mxu0 0.0
      %2923 = vmatpush2.msra.mxu0 0.0
      %2924 = vmatprep.subr.mxu0 0.0
      %2925 = vmatpush2.msra.mxu0 0.0
      %2926 = vmatprep.subr.mxu0 0.0
      %2927 = vmatpush2.msra.mxu0 0.0
      %2928 = vmatprep.subr.mxu0 0.0
      %2929 = vmatpush2.msra.mxu0 0.0
      %2930 = vmatprep.subr.mxu0 0.0
      %2931 = vmatpush2.msra.mxu0 0.0
      %2932 = vmatprep.subr.mxu0 0.0
      %2933 = vmatpush2.msra.mxu0 0.0
      %2934 = vmatprep.subr.mxu0 0.0
      %2935 = vmatpush2.msra.mxu0 0.0
      %2936 = vmatprep.subr.mxu0 0.0
      %2937 = vmatpush2.msra.mxu0 0.0
      %2938 = vmatprep.subr.mxu0 0.0
      %2939 = vmatpush2.msra.mxu0 0.0
      %2940 = vmatprep.mubr.f32.mxu0 0.0
      %2941 = vmatmul.mubr.f32.gmra.mxu0 %v2874
      %v2942 = vpop.f32.mrf.mxu0
      %v2943 = vadd.f32 %v2870, %v2942
      %v2944 = vpop.f32.mrf.mxu0
      %2945 = vdwg.mxu0
      %vm2946 = vcmp.eq.s32.totalorder %v280, 15
      %v2947 = vsel %vm2946, 1, 0
      %v2948 = vcvt.s32.f32 %v2947
      %v2950 = vsel %vm273, %v2943, 0
      %2952 = vmatprep.subr.mxu0 0.0
      %2953 = vmatpush1.msra.mxu0 0.0
      %2954 = vmatprep.subr.mxu0 0.0
      %2955 = vmatpush1.msra.mxu0 0.0
      %2956 = vmatprep.subr.mxu0 0.0
      %2957 = vmatpush1.msra.mxu0 0.0
      %2958 = vmatprep.subr.mxu0 0.0
      %2959 = vmatpush1.msra.mxu0 0.0
      %2960 = vmatprep.subr.mxu0 0.0
      %2961 = vmatpush1.msra.mxu0 0.0
      %2962 = vmatprep.subr.mxu0 0.0
      %2963 = vmatpush1.msra.mxu0 0.0
      %2964 = vmatprep.subr.mxu0 0.0
      %2965 = vmatpush1.msra.mxu0 0.0
      %2966 = vmatprep.subr.mxu0 0.0
      %2967 = vmatpush1.msra.mxu0 0.0
      %2968 = vmatprep.subr.mxu0 0.0
      %2969 = vmatpush1.msra.mxu0 0.0
      %2970 = vmatprep.subr.mxu0 0.0
      %2971 = vmatpush1.msra.mxu0 0.0
      %2972 = vmatprep.subr.mxu0 0.0
      %2973 = vmatpush1.msra.mxu0 0.0
      %2974 = vmatprep.subr.mxu0 0.0
      %2975 = vmatpush1.msra.mxu0 0.0
      %2976 = vmatprep.subr.mxu0 0.0
      %2977 = vmatpush1.msra.mxu0 0.0
      %2978 = vmatprep.subr.mxu0 0.0
      %2979 = vmatpush1.msra.mxu0 0.0
      %2980 = vmatprep.subr.mxu0 0.0
      %2981 = vmatpush1.msra.mxu0 0.0
      %2982 = vmatprep.subr.mxu0 0.0
      %2983 = vmatpush1.msra.mxu0 %v2948
      %2984 = vmatprep.subr.mxu0 0.0
      %2985 = vmatpush2.msra.mxu0 0.0
      %2986 = vmatprep.subr.mxu0 0.0
      %2987 = vmatpush2.msra.mxu0 0.0
      %2988 = vmatprep.subr.mxu0 0.0
      %2989 = vmatpush2.msra.mxu0 0.0
      %2990 = vmatprep.subr.mxu0 0.0
      %2991 = vmatpush2.msra.mxu0 0.0
      %2992 = vmatprep.subr.mxu0 0.0
      %2993 = vmatpush2.msra.mxu0 0.0
      %2994 = vmatprep.subr.mxu0 0.0
      %2995 = vmatpush2.msra.mxu0 0.0
      %2996 = vmatprep.subr.mxu0 0.0
      %2997 = vmatpush2.msra.mxu0 0.0
      %2998 = vmatprep.subr.mxu0 0.0
      %2999 = vmatpush2.msra.mxu0 0.0
      %3000 = vmatprep.subr.mxu0 0.0
      %3001 = vmatpush2.msra.mxu0 0.0
      %3002 = vmatprep.subr.mxu0 0.0
      %3003 = vmatpush2.msra.mxu0 0.0
      %3004 = vmatprep.subr.mxu0 0.0
      %3005 = vmatpush2.msra.mxu0 0.0
      %3006 = vmatprep.subr.mxu0 0.0
      %3007 = vmatpush2.msra.mxu0 0.0
      %3008 = vmatprep.subr.mxu0 0.0
      %3009 = vmatpush2.msra.mxu0 0.0
      %3010 = vmatprep.subr.mxu0 0.0
      %3011 = vmatpush2.msra.mxu0 0.0
      %3012 = vmatprep.subr.mxu0 0.0
      %3013 = vmatpush2.msra.mxu0 0.0
      %3014 = vmatprep.subr.mxu0 0.0
      %3015 = vmatpush2.msra.mxu0 0.0
      %3016 = vmatprep.mubr.f32.mxu0 0.0
      %3017 = vmatmul.mubr.f32.gmra.mxu0 %v2950
      %v3018 = vpop.f32.mrf.mxu0
      %v3019 = vadd.f32 0.0, %v3018
      %v3020 = vpop.f32.mrf.mxu0
      %3021 = vdwg.mxu0
      %v3022 = vadd.f32 %v2795, %v3019
      %v3023 = vld [vmem:[%s3] sm:$0x3f]
      %3025 = vset.pattern.permute.xlu0 0
      %3026 = vperm.xlu0 %3025, %v3023
      %v3027 = vpop.permute.xlu0 %3026
      %v3029 = vadd.f32 %v3022, %v3027
      %3030 = vst [vmem:[%s266] sm:$0x3f] %v3029
      %p3031 = scmp.lt.s32.totalorder %s19, 1
      %s3032 = scalar_select %p3031, %s19, 1
      %p3033 = scmp.lt.s32.totalorder %s20, 1
      %s3034 = scalar_select %p3033, %s20, 1
      %s3035 = smul.addr %s3032, 2
      %s3036 = sadd.s32 %s3034, %s3035
      %s3037 = smul.addr %s3036, 8
      %s3038 = scalar_lea.vmem %s4, %s3037
      // Predicated region
      $region37: #{upsample_forward.1} parent=35 // pred_check
        %p3039 = pneg %p147
      $region38: #{upsample_forward.1} parent=35 // pred_check_branch
        %3041 = sbr.rel (%p3039) target = $region40
      $region39: #{upsample_forward.1} parent=35 // pred_region
        _
      $region40: #{upsample_forward.1} parent=35 // pred_fallthru
        _
    $region36: #{upsample_forward.1} parent=5 // pred_fallthru
      _
    %p3042 = scmp.le.s32.totalorder 2, %s10
    // Predicated region
    $region41: #{upsample_forward.1} parent=5 // pred_check
      %p3043 = pneg %p3042
    $region42: #{upsample_forward.1} parent=5 // pred_check_branch
      %3045 = sbr.rel (%p3043) target = $region44
    $region43: #{upsample_forward.1} parent=5 // pred_region
      %s3046 = ssub.s32 %s10, 2
      // Predicated region
      $region45: #{upsample_forward.1} parent=43 // pred_check
        %p3047 = pneg %p153
      $region46: #{upsample_forward.1} parent=43 // pred_check_branch
        %3049 = sbr.rel (%p3047) target = $region48
      $region47: #{upsample_forward.1} parent=43 // pred_region
        %p3050 = scmp.lt.s32.totalorder %s21, 1
        %s3051 = scalar_select %p3050, %s21, 1
        %p3052 = scmp.lt.s32.totalorder %s22, 1
        %s3053 = scalar_select %p3052, %s22, 1
        %s3054 = smul.addr %s3051, 2
        %s3055 = sadd.s32 %s3053, %s3054
        %s3056 = smul.addr %s3055, 8
        %s3057 = scalar_lea.vmem %s4, %s3056
      $region48: #{upsample_forward.1} parent=43 // pred_fallthru
        _
    $region44: #{upsample_forward.1} parent=5 // pred_fallthru
      _
  $region6: #{upsample_forward.1} parent=0 // loop_footer
    %s14 = sadd.s32 1, %s10
  $region7: #{upsample_forward.1} parent=0 // loop_footer_branch
    %9 = sbr.rel target = $region3
  $region8: #{upsample_forward.1} parent=0 // loop_exit
    _

</llo_original>
